<compile_context>
chip_gen: v7x
topology: tpu7x:2x2x1
jax: 0.10.0
libtpu: 0.0.40
codegen_flags: <defaults>
</compile_context>

<pallas_src>
import math

import jax
import jax.numpy as jnp
from jax.experimental import pallas as pl
from jax.experimental.pallas import tpu as pltpu


# ----------------------------- constants -----------------------------

D_MODEL = 128
SEQ_LEN = 77
SEQ_PAD = 128          # context padded to a full lane tile; padded cols masked in attn
VOCAB = 1000
LATENT_C = 4
PATCH = 8
F_PIX = PATCH * PATCH * 3          # 192
N_TIMESTEPS = 1000
ATTN_SCALE = 1.0 / math.sqrt(D_MODEL)
AUX_W = 32                          # [enc_noise(4)|act_noise(4)|sqrt_ab(4)|sqrt_1mab(4)|valid(1)|pad]


def _round_up(x, m):
    return ((x + m - 1) // m) * m


# ----------------------------- Pallas kernel -----------------------------

def _sd_fused_kernel(tok_ref, patch_ref, aux_ref, tproj_ref, amask_ref,
                     w_dd_ref, wkv_ref, enc_w1_ref, w_in_ref, w_small_ref, b_ref,
                     pix_ref, loss_ref):
    """Fused CLIP-MLP/KV + VAE-encode + DDPM noising + UNet block + MSE + VAE-decode.

    One M-tile (TM rows of flattened batch*patches) per grid step.  All weights are
    resident shared VMEM blocks; the text-context KV never leaves VMEM.
    """
    f32 = jnp.float32
    bf16 = jnp.bfloat16
    d = D_MODEL

    # ---- packed biases (static slices of the resident (7, 2d) f32 block) ----
    clip_b1 = b_ref[0:1, 0:d]
    clip_b2 = b_ref[0:1, d:2 * d]
    bkv = b_ref[1:2, :]
    enc_b1 = b_ref[2:3, 0:d]
    bq = b_ref[3:4, 0:d]
    bo = b_ref[3:4, d:2 * d]
    unet_bin = b_ref[4:5, 0:d]
    dec_b1 = b_ref[4:5, d:2 * d]
    enc_bmv = b_ref[5:6, 0:2 * LATENT_C]
    unet_bout = b_ref[5:6, d:d + LATENT_C]
    dec_b2 = b_ref[6:7, 0:F_PIX]

    # ---- CLIP text MLP + fused [K|V] projection (stays entirely in VMEM/vregs) ----
    ctx_in = tok_ref[...]                                               # (CTX, d) bf16
    h = jnp.dot(ctx_in, w_dd_ref[0], preferred_element_type=f32) + clip_b1
    h = h * jax.nn.sigmoid(h)                                           # silu in f32
    ctx = jnp.dot(h.astype(bf16), w_dd_ref[1], preferred_element_type=f32) + clip_b2
    kv = jnp.dot(ctx.astype(bf16), wkv_ref[...], preferred_element_type=f32) + bkv
    kv = kv.astype(bf16)                                                # (CTX, 2d)
    k = kv[:, 0:d]
    v = kv[:, d:2 * d]

    # ---- VAE.encode: patch matmul -> [mean | logvar] -> reparameterize ----
    xp = patch_ref[...]                                                 # (TM, 192) bf16
    eh = jnp.dot(xp, enc_w1_ref[...], preferred_element_type=f32) + enc_b1
    eh = eh * jax.nn.sigmoid(eh)                                        # (TM, d) f32
    mv = jnp.dot(eh.astype(bf16), w_small_ref[0],
                 preferred_element_type=f32)[:, 0:2 * LATENT_C] + enc_bmv
    mean = mv[:, 0:LATENT_C]
    logvar = mv[:, LATENT_C:2 * LATENT_C]

    aux = aux_ref[...]                                                  # (TM, 32) f32
    enc_noise = aux[:, 0:4]
    act_noise = aux[:, 4:8]
    sab = aux[:, 8:12]                                                  # sqrt(alpha_bar)
    s1m = aux[:, 12:16]                                                 # sqrt(1-alpha_bar)
    valid = aux[:, 16:17]                                               # 1 for real rows

    latent = mean + jnp.exp(0.5 * logvar) * enc_noise                   # (TM, 4) f32

    # ---- DDPM forward (noising) process: x_t = sqrt(ab)*x0 + sqrt(1-ab)*noise ----
    x_t = sab * latent + s1m * act_noise                                # (TM, 4) f32

    # ---- UNet in-proj (+ hoisted time conditioning) and VAE-decoder in-proj ----
    h0 = jnp.dot(x_t.astype(bf16), w_in_ref[0], preferred_element_type=f32) + unet_bin
    h0 = h0 + tproj_ref[...]                                            # per-row time cond
    h1 = h0 * jax.nn.sigmoid(h0)                                        # (TM, d) f32
    dh = jnp.dot(latent.astype(bf16), w_in_ref[1], preferred_element_type=f32) + dec_b1
    dh = dh * jax.nn.sigmoid(dh)                                        # (TM, d) f32

    # ---- cross-attention over the batch-concatenated text context ----
    q = jnp.dot(h1.astype(bf16), w_dd_ref[2], preferred_element_type=f32) + bq
    s = jax.lax.dot_general(q.astype(bf16), k, (((1,), (1,)), ((), ())),
                            preferred_element_type=f32)                 # (TM, CTX)
    s = s * ATTN_SCALE + amask_ref[...]                                 # additive mask, f32
    m = jnp.max(s, axis=-1, keepdims=True)
    p = jnp.exp(s - m)
    l = jnp.sum(p, axis=-1, keepdims=True)
    att = jnp.dot(p.astype(bf16), v, preferred_element_type=f32)
    att = att * pl.reciprocal(l, approx=True)                           # EUP divide
    o = jnp.dot(att.astype(bf16), w_dd_ref[3], preferred_element_type=f32) + bo
    h2 = h1 + o
    pred_noise = jnp.dot(h2.astype(bf16), w_small_ref[1],
                         preferred_element_type=f32)[:, 0:LATENT_C] + unet_bout

    # ---- MSE partial (sum of squared error for this tile; padded rows masked) ----
    diff = (pred_noise - act_noise) * valid
    sse = jnp.sum(jnp.sum(diff * diff, axis=1, keepdims=True), axis=0, keepdims=True)
    loss_ref[...] = jnp.broadcast_to(sse, (1, 1, 128))                  # lane-dense store

    # ---- VAE.decode(latent) -> lane-dense bf16 pixel patches ----
    pix = jnp.dot(dh.astype(bf16), w_small_ref[2],
                  preferred_element_type=f32)[:, 0:F_PIX] + dec_b2
    pix_ref[...] = pix.astype(pix_ref.dtype)                            # (TM, 192) bf16


# ----------------------------- pallas_call wrapper -----------------------------

def sd_fused(tok_flat, patches, aux, tproj, attn_bias, packed, num_tiles, tm):
    m_pad = patches.shape[0]
    ctx = tok_flat.shape[0]

    def shared(arr):
        shp = arr.shape
        return pl.BlockSpec(shp, lambda i, _s=len(shp): (0,) * _s)

    def rows(arr):
        w = arr.shape[1]
        return pl.BlockSpec((tm, w), lambda i: (i, 0))

    in_specs = [shared(tok_flat), rows(patches), rows(aux), rows(tproj), rows(attn_bias),
                shared(packed["w_dd"]), shared(packed["wkv"]), shared(packed["enc_w1"]),
                shared(packed["w_in"]), shared(packed["w_small"]), shared(packed["biases"])]

    out_shape = (jax.ShapeDtypeStruct((m_pad, F_PIX), jnp.bfloat16),
                 jax.ShapeDtypeStruct((num_tiles, 1, 128), jnp.float32))
    out_specs = (pl.BlockSpec((tm, F_PIX), lambda i: (i, 0)),
                 pl.BlockSpec((1, 1, 128), lambda i: (i, 0, 0)))

    return pl.pallas_call(
        _sd_fused_kernel,
        out_shape=out_shape,
        grid=(num_tiles,),
        in_specs=in_specs,
        out_specs=out_specs,
        compiler_params=pltpu.CompilerParams(dimension_semantics=("parallel",)),
    )(tok_flat, patches, aux, tproj, attn_bias,
      packed["w_dd"], packed["wkv"], packed["enc_w1"],
      packed["w_in"], packed["w_small"], packed["biases"])


# ----------------------------- model glue -----------------------------

def init_params(key):
    d = D_MODEL

    def w(k, shape, scale=0.02):
        return (scale * jax.random.normal(k, shape, jnp.float32)).astype(jnp.bfloat16)

    def b(n):
        return jnp.zeros((1, n), jnp.float32)

    ks = jax.random.split(key, 14)
    return {
        # OpenCLIP text model (simplified): token+pos embedding + in-kernel MLP.
        "tok_emb": 0.02 * jax.random.normal(ks[0], (VOCAB, d), jnp.float32),
        "pos_emb": 0.02 * jax.random.normal(ks[1], (SEQ_LEN, d), jnp.float32),
        "clip_w1": w(ks[2], (d, d)), "clip_b1": b(d),
        "clip_w2": w(ks[3], (d, d)), "clip_b2": b(d),
        # Fused cross-attention context projection [wk | wv].
        "wkv": w(ks[4], (d, 2 * d)), "bkv": b(2 * d),
        # VAE encoder (stride-8 conv as patch matmul); [w_mu | w_logvar] fused.
        "enc_w1": w(ks[5], (F_PIX, d)), "enc_b1": b(d),
        "enc_wmv": w(ks[6], (d, 2 * LATENT_C)), "enc_bmv": b(2 * LATENT_C),
        # UNet (simplified time-conditioned cross-attention block).
        "time_w": w(ks[7], (d, d)), "time_b": b(d),
        "unet_win": w(ks[8], (LATENT_C, d)), "unet_bin": b(d),
        "wq": w(ks[9], (d, d)), "bq": b(d),
        "wo": w(ks[10], (d, d)), "bo": b(d),
        "unet_wout": w(ks[11], (d, LATENT_C)), "unet_bout": b(LATENT_C),
        # VAE decoder (patch expansion).
        "dec_w1": w(ks[12], (LATENT_C, d)), "dec_b1": b(d),
        "dec_w2": w(ks[13], (d, F_PIX)), "dec_b2": b(F_PIX),
    }


def _pack_params(params):
    """Stack small weights/biases so kernel B has ~11 refs instead of ~30."""
    d = D_MODEL
    w_dd = jnp.stack([params["clip_w1"], params["clip_w2"],
                      params["wq"], params["wo"]], axis=0)               # (4, d, d) bf16
    w_in = jnp.stack([params["unet_win"], params["dec_w1"]], axis=0)     # (2, 4, d) bf16

    def pad_cols(x, n):
        return jnp.pad(x, ((0, 0), (0, n - x.shape[1])))

    w_small = jnp.stack([pad_cols(params["enc_wmv"], 2 * d),
                         pad_cols(params["unet_wout"], 2 * d),
                         pad_cols(params["dec_w2"], 2 * d)], axis=0)     # (3, d, 2d) bf16

    b = jnp.zeros((7, 2 * d), jnp.float32)
    b = b.at[0, 0:d].set(params["clip_b1"][0]).at[0, d:2 * d].set(params["clip_b2"][0])
    b = b.at[1, :].set(params["bkv"][0])
    b = b.at[2, 0:d].set(params["enc_b1"][0])
    b = b.at[3, 0:d].set(params["bq"][0]).at[3, d:2 * d].set(params["bo"][0])
    b = b.at[4, 0:d].set(params["unet_bin"][0]).at[4, d:2 * d].set(params["dec_b1"][0])
    b = b.at[5, 0:2 * LATENT_C].set(params["enc_bmv"][0])
    b = b.at[5, d:d + LATENT_C].set(params["unet_bout"][0])
    b = b.at[6, 0:F_PIX].set(params["dec_b2"][0])

    return {"w_dd": w_dd, "wkv": params["wkv"], "enc_w1": params["enc_w1"],
            "w_in": w_in, "w_small": w_small, "biases": b}


def sinusoidal_embedding(t, dim):
    half = dim // 2
    freqs = jnp.exp(-math.log(10000.0) * jnp.arange(half, dtype=jnp.float32) / half)
    args = t.astype(jnp.float32)[:, None] * freqs[None, :]
    return jnp.concatenate([jnp.cos(args), jnp.sin(args)], axis=-1)


def stable_diffusion_forward(params, images, labels, key):
    # images: (B, 3, H, W) NCHW float32, labels: (B, 77) int32 token ids.
    # TODO(synk): full VAE / OpenCLIP / UNet architectures are not provided in the
    # source; synthetic stand-ins with matching interfaces are used (see docstring).
    B, _, H, W = images.shape
    Hl, Wl = H // PATCH, W // PATCH
    P = Hl * Wl
    M = B * P
    d = D_MODEL

    # ---- CLIP text embedding lookup (gather stays in XLA), flattened over batch ----
    tok = jnp.take(params["tok_emb"], labels, axis=0)                  # (B, 77, d)
    tokpos = tok + params["pos_emb"][None]
    tokpos = jnp.pad(tokpos, ((0, 0), (0, SEQ_PAD - SEQ_LEN), (0, 0)))
    ctx_len = B * SEQ_PAD
    tok_flat = tokpos.reshape(ctx_len, d).astype(jnp.bfloat16)

    # ---- Patchify image (stride-8 conv as a patch matmul), batch collapsed into M ----
    img_nhwc = jnp.transpose(images, (0, 2, 3, 1))                     # NCHW -> NHWC
    patches = img_nhwc.reshape(B, Hl, PATCH, Wl, PATCH, 3)
    patches = patches.transpose(0, 1, 3, 2, 4, 5).reshape(M, F_PIX)

    # ---- DDPM schedule, timesteps, noise, hoisted time-embedding projection ----
    k_enc, k_t, k_noise = jax.random.split(key, 3)
    betas = jnp.linspace(1e-4, 0.02, N_TIMESTEPS, dtype=jnp.float32)
    alpha_bar = jnp.cumprod(1.0 - betas)
    timesteps = jax.random.randint(k_t, (B,), 0, N_TIMESTEPS)
    ab = alpha_bar[timesteps]                                          # (B,)
    sqrt_ab = jnp.sqrt(ab)
    sqrt_1m = jnp.sqrt(1.0 - ab)
    enc_noise = jax.random.normal(k_enc, (M, LATENT_C), jnp.float32)
    act_noise = jax.random.normal(k_noise, (M, LATENT_C), jnp.float32)

    temb = sinusoidal_embedding(timesteps, d)                          # (B, d) f32
    tproj = temb @ params["time_w"].astype(jnp.float32) + params["time_b"]
    tproj = tproj * jax.nn.sigmoid(tproj)                              # silu, f32
    tproj_rows = jnp.repeat(tproj, P, axis=0)                          # (M, d)

    ones4 = jnp.ones((1, LATENT_C), jnp.float32)
    sab_rows = jnp.repeat(sqrt_ab, P)[:, None] * ones4                 # (M, 4)
    s1m_rows = jnp.repeat(sqrt_1m, P)[:, None] * ones4                 # (M, 4)
    valid = jnp.ones((M, 1), jnp.float32)
    aux = jnp.concatenate(
        [enc_noise, act_noise, sab_rows, s1m_rows, valid,
         jnp.zeros((M, AUX_W - 4 * LATENT_C - 1), jnp.float32)], axis=1)   # (M, 32)

    # ---- M tiling: >=2 parallel grid steps (v7x has 2 TCs), TM capped at 128 ----
    tm = min(128, _round_up(max(1, (M + 1) // 2), 16))
    num_tiles = -(-M // tm)
    m_pad = num_tiles * tm

    def pad_rows(x):
        return jnp.pad(x, ((0, m_pad - M), (0, 0)))

    patches_p = pad_rows(patches).astype(jnp.bfloat16)
    aux_p = pad_rows(aux)
    tproj_p = pad_rows(tproj_rows)

    # additive block-diagonal attention mask: each row attends only to its own batch's
    # 77 real tokens (padded context columns and other batches get -1e30, f32 scores).
    row_b = jnp.clip(jnp.arange(m_pad) // P, 0, B - 1)
    col = jnp.arange(ctx_len)
    ok = (col[None, :] // SEQ_PAD == row_b[:, None]) & ((col[None, :] % SEQ_PAD) < SEQ_LEN)
    attn_bias = jnp.where(ok, 0.0, -1e30).astype(jnp.float32)          # (m_pad, ctx_len)

    packed = _pack_params(params)

    # ---- single fused Pallas kernel ----
    pix, loss_part = sd_fused(tok_flat, patches_p, aux_p, tproj_p, attn_bias,
                              packed, num_tiles, tm)

    loss = jnp.sum(loss_part[:, 0, 0]) / float(M * LATENT_C)

    pix = pix[:M].astype(jnp.float32)
    pred_image = pix.reshape(B, Hl, Wl, PATCH, PATCH, 3)
    pred_image = pred_image.transpose(0, 5, 1, 3, 2, 4).reshape(B, 3, H, W)
    return loss, pred_image


if __name__ == "__main__":
    root = jax.random.PRNGKey(0)
    k_params, k_img, k_lbl, k_fwd = jax.random.split(root, 4)

    params = init_params(k_params)
    B = 2
    images = jax.random.normal(k_img, (B, 3, 32, 32), jnp.float32)     # NCHW like PyTorch
    labels = jax.random.randint(k_lbl, (B, SEQ_LEN), 0, VOCAB)

    fwd = jax.jit(stable_diffusion_forward)
    loss, pred_image = fwd(params, images, labels, k_fwd)
    jax.block_until_ready((loss, pred_image))

    assert pred_image.shape == (B, 3, 32, 32)
    assert pred_image.dtype == jnp.float32
    assert bool(jnp.isfinite(loss))
    print("KERNEL_OK")
</pallas_src>

<mosaic_0001>
module attributes {stable_mosaic.version = 11 : i64} {
  func.func @_sd_fused_kernel(%arg0: i32, %arg1: memref<256x128xbf16, #tpu.memory_space<vmem>>, %arg2: memref<16x192xbf16, #tpu.memory_space<vmem>>, %arg3: memref<16x32xf32, #tpu.memory_space<vmem>>, %arg4: memref<16x128xf32, #tpu.memory_space<vmem>>, %arg5: memref<16x256xf32, #tpu.memory_space<vmem>>, %arg6: memref<4x128x128xbf16, #tpu.memory_space<vmem>>, %arg7: memref<128x256xbf16, #tpu.memory_space<vmem>>, %arg8: memref<192x128xbf16, #tpu.memory_space<vmem>>, %arg9: memref<2x4x128xbf16, #tpu.memory_space<vmem>>, %arg10: memref<3x128x256xbf16, #tpu.memory_space<vmem>>, %arg11: memref<7x256xf32, #tpu.memory_space<vmem>>, %arg12: memref<16x192xbf16, #tpu.memory_space<vmem>>, %arg13: memref<1x1x128xf32, #tpu.memory_space<vmem>>) attributes {dimension_semantics = [#tpu.dimension_semantics<parallel>], iteration_bounds = array<i64: 2>, scalar_prefetch = 0 : i64, scratch_operands = 0 : i64, tpu.core_type = #tpu.core_type<tc>, window_params = [{pipeline_mode = #tpu.pipeline_mode<synchronous>, transform_indices = @transform_0, window_bounds = array<i64: 256, 128>}, {transform_indices = @transform_1, window_bounds = array<i64: 16, 192>}, {transform_indices = @transform_2, window_bounds = array<i64: 16, 32>}, {transform_indices = @transform_3, window_bounds = array<i64: 16, 128>}, {transform_indices = @transform_4, window_bounds = array<i64: 16, 256>}, {pipeline_mode = #tpu.pipeline_mode<synchronous>, transform_indices = @transform_5, window_bounds = array<i64: 4, 128, 128>}, {pipeline_mode = #tpu.pipeline_mode<synchronous>, transform_indices = @transform_6, window_bounds = array<i64: 128, 256>}, {pipeline_mode = #tpu.pipeline_mode<synchronous>, transform_indices = @transform_7, window_bounds = array<i64: 192, 128>}, {pipeline_mode = #tpu.pipeline_mode<synchronous>, transform_indices = @transform_8, window_bounds = array<i64: 2, 4, 128>}, {pipeline_mode = #tpu.pipeline_mode<synchronous>, transform_indices = @transform_9, window_bounds = array<i64: 3, 128, 256>}, {pipeline_mode = #tpu.pipeline_mode<synchronous>, transform_indices = @transform_10, window_bounds = array<i64: 7, 256>}, {transform_indices = @transform_11, window_bounds = array<i64: 16, 192>}, {transform_indices = @transform_12, window_bounds = array<i64: 1, 1, 128>}]} {
    %c0 = arith.constant 0 : index
    %c0_0 = arith.constant 0 : index
    %0 = vector.load %arg11[%c0, %c0_0] : memref<7x256xf32, #tpu.memory_space<vmem>>, vector<1x128xf32>
    %c0_1 = arith.constant 0 : index
    %c128 = arith.constant 128 : index
    %1 = vector.load %arg11[%c0_1, %c128] : memref<7x256xf32, #tpu.memory_space<vmem>>, vector<1x128xf32>
    %c1 = arith.constant 1 : index
    %c0_2 = arith.constant 0 : index
    %2 = vector.load %arg11[%c1, %c0_2] : memref<7x256xf32, #tpu.memory_space<vmem>>, vector<1x256xf32>
    %c2 = arith.constant 2 : index
    %c0_3 = arith.constant 0 : index
    %3 = vector.load %arg11[%c2, %c0_3] : memref<7x256xf32, #tpu.memory_space<vmem>>, vector<1x128xf32>
    %c3 = arith.constant 3 : index
    %c0_4 = arith.constant 0 : index
    %4 = vector.load %arg11[%c3, %c0_4] : memref<7x256xf32, #tpu.memory_space<vmem>>, vector<1x128xf32>
    %c3_5 = arith.constant 3 : index
    %c128_6 = arith.constant 128 : index
    %5 = vector.load %arg11[%c3_5, %c128_6] : memref<7x256xf32, #tpu.memory_space<vmem>>, vector<1x128xf32>
    %c4 = arith.constant 4 : index
    %c0_7 = arith.constant 0 : index
    %6 = vector.load %arg11[%c4, %c0_7] : memref<7x256xf32, #tpu.memory_space<vmem>>, vector<1x128xf32>
    %c4_8 = arith.constant 4 : index
    %c128_9 = arith.constant 128 : index
    %7 = vector.load %arg11[%c4_8, %c128_9] : memref<7x256xf32, #tpu.memory_space<vmem>>, vector<1x128xf32>
    %c5 = arith.constant 5 : index
    %c0_10 = arith.constant 0 : index
    %8 = vector.load %arg11[%c5, %c0_10] : memref<7x256xf32, #tpu.memory_space<vmem>>, vector<1x8xf32>
    %c5_11 = arith.constant 5 : index
    %c128_12 = arith.constant 128 : index
    %9 = vector.load %arg11[%c5_11, %c128_12] : memref<7x256xf32, #tpu.memory_space<vmem>>, vector<1x4xf32>
    %c6 = arith.constant 6 : index
    %c0_13 = arith.constant 0 : index
    %10 = vector.load %arg11[%c6, %c0_13] : memref<7x256xf32, #tpu.memory_space<vmem>>, vector<1x192xf32>
    %c0_14 = arith.constant 0 : index
    %c0_15 = arith.constant 0 : index
    %11 = vector.load %arg1[%c0_14, %c0_15] : memref<256x128xbf16, #tpu.memory_space<vmem>>, vector<256x128xbf16>
    %c0_16 = arith.constant 0 : index
    %c0_17 = arith.constant 0 : index
    %c0_18 = arith.constant 0 : index
    %12 = vector.load %arg6[%c0_16, %c0_17, %c0_18] : memref<4x128x128xbf16, #tpu.memory_space<vmem>>, vector<1x128x128xbf16>
    %13 = vector.shape_cast %12 : vector<1x128x128xbf16> to vector<128x128xbf16>
    %cst = arith.constant dense<0.000000e+00> : vector<256x128xf32>
    %14 = tpu.matmul %11, %13, %cst {dimension_numbers = #tpu.dot_dimension_numbers<[1], [0], [0], [1], [0, 0, 1, 1], [], []>} : vector<256x128xbf16>, vector<128x128xbf16>, vector<256x128xf32> -> vector<256x128xf32>
    %15 = vector.broadcast %0 : vector<1x128xf32> to vector<256x128xf32>
    %16 = arith.addf %14, %15 : vector<256x128xf32>
    %17 = arith.negf %16 : vector<256x128xf32>
    %18 = math.exp %17 : vector<256x128xf32>
    %cst_19 = arith.constant 1.000000e+00 : f32
    %19 = vector.broadcast %cst_19 : f32 to vector<256x128xf32>
    %20 = arith.addf %19, %18 : vector<256x128xf32>
    %21 = arith.divf %19, %20 : vector<256x128xf32>
    %22 = arith.mulf %16, %21 : vector<256x128xf32>
    %23 = arith.truncf %22 : vector<256x128xf32> to vector<256x128xbf16>
    %c1_20 = arith.constant 1 : index
    %c0_21 = arith.constant 0 : index
    %c0_22 = arith.constant 0 : index
    %24 = vector.load %arg6[%c1_20, %c0_21, %c0_22] : memref<4x128x128xbf16, #tpu.memory_space<vmem>>, vector<1x128x128xbf16>
    %25 = vector.shape_cast %24 : vector<1x128x128xbf16> to vector<128x128xbf16>
    %cst_23 = arith.constant dense<0.000000e+00> : vector<256x128xf32>
    %26 = tpu.matmul %23, %25, %cst_23 {dimension_numbers = #tpu.dot_dimension_numbers<[1], [0], [0], [1], [0, 0, 1, 1], [], []>} : vector<256x128xbf16>, vector<128x128xbf16>, vector<256x128xf32> -> vector<256x128xf32>
    %27 = vector.broadcast %1 : vector<1x128xf32> to vector<256x128xf32>
    %28 = arith.addf %26, %27 : vector<256x128xf32>
    %29 = arith.truncf %28 : vector<256x128xf32> to vector<256x128xbf16>
    %c0_24 = arith.constant 0 : index
    %c0_25 = arith.constant 0 : index
    %30 = vector.load %arg7[%c0_24, %c0_25] : memref<128x256xbf16, #tpu.memory_space<vmem>>, vector<128x256xbf16>
    %cst_26 = arith.constant dense<0.000000e+00> : vector<256x256xf32>
    %31 = tpu.matmul %29, %30, %cst_26 {dimension_numbers = #tpu.dot_dimension_numbers<[1], [0], [0], [1], [0, 0, 1, 1], [], []>} : vector<256x128xbf16>, vector<128x256xbf16>, vector<256x256xf32> -> vector<256x256xf32>
    %32 = vector.broadcast %2 : vector<1x256xf32> to vector<256x256xf32>
    %33 = arith.addf %31, %32 : vector<256x256xf32>
    %34 = arith.truncf %33 : vector<256x256xf32> to vector<256x256xbf16>
    %35 = vector.extract_strided_slice %34 {offsets = [0, 0], sizes = [256, 128], strides = [1, 1]} : vector<256x256xbf16> to vector<256x128xbf16>
    %36 = vector.extract_strided_slice %34 {offsets = [0, 128], sizes = [256, 128], strides = [1, 1]} : vector<256x256xbf16> to vector<256x128xbf16>
    %c0_27 = arith.constant 0 : index
    %c0_28 = arith.constant 0 : index
    %37 = vector.load %arg2[%c0_27, %c0_28] : memref<16x192xbf16, #tpu.memory_space<vmem>>, vector<16x192xbf16>
    %c0_29 = arith.constant 0 : index
    %c0_30 = arith.constant 0 : index
    %38 = vector.load %arg8[%c0_29, %c0_30] : memref<192x128xbf16, #tpu.memory_space<vmem>>, vector<192x128xbf16>
    %cst_31 = arith.constant dense<0.000000e+00> : vector<16x128xf32>
    %39 = tpu.matmul %37, %38, %cst_31 {dimension_numbers = #tpu.dot_dimension_numbers<[1], [0], [0], [1], [0, 0, 1, 1], [], []>} : vector<16x192xbf16>, vector<192x128xbf16>, vector<16x128xf32> -> vector<16x128xf32>
    %40 = vector.broadcast %3 : vector<1x128xf32> to vector<16x128xf32>
    %41 = arith.addf %39, %40 : vector<16x128xf32>
    %42 = arith.negf %41 : vector<16x128xf32>
    %43 = math.exp %42 : vector<16x128xf32>
    %cst_32 = arith.constant 1.000000e+00 : f32
    %44 = vector.broadcast %cst_32 : f32 to vector<16x128xf32>
    %45 = arith.addf %44, %43 : vector<16x128xf32>
    %46 = arith.divf %44, %45 : vector<16x128xf32>
    %47 = arith.mulf %41, %46 : vector<16x128xf32>
    %48 = arith.truncf %47 : vector<16x128xf32> to vector<16x128xbf16>
    %c0_33 = arith.constant 0 : index
    %c0_34 = arith.constant 0 : index
    %c0_35 = arith.constant 0 : index
    %49 = vector.load %arg10[%c0_33, %c0_34, %c0_35] : memref<3x128x256xbf16, #tpu.memory_space<vmem>>, vector<1x128x256xbf16>
    %50 = vector.shape_cast %49 : vector<1x128x256xbf16> to vector<128x256xbf16>
    %cst_36 = arith.constant dense<0.000000e+00> : vector<16x256xf32>
    %51 = tpu.matmul %48, %50, %cst_36 {dimension_numbers = #tpu.dot_dimension_numbers<[1], [0], [0], [1], [0, 0, 1, 1], [], []>} : vector<16x128xbf16>, vector<128x256xbf16>, vector<16x256xf32> -> vector<16x256xf32>
    %52 = vector.extract_strided_slice %51 {offsets = [0, 0], sizes = [16, 8], strides = [1, 1]} : vector<16x256xf32> to vector<16x8xf32>
    %53 = vector.broadcast %8 : vector<1x8xf32> to vector<16x8xf32>
    %54 = arith.addf %52, %53 : vector<16x8xf32>
    %55 = vector.extract_strided_slice %54 {offsets = [0, 0], sizes = [16, 4], strides = [1, 1]} : vector<16x8xf32> to vector<16x4xf32>
    %56 = vector.extract_strided_slice %54 {offsets = [0, 4], sizes = [16, 4], strides = [1, 1]} : vector<16x8xf32> to vector<16x4xf32>
    %c0_37 = arith.constant 0 : index
    %c0_38 = arith.constant 0 : index
    %57 = vector.load %arg3[%c0_37, %c0_38] : memref<16x32xf32, #tpu.memory_space<vmem>>, vector<16x32xf32>
    %58 = vector.extract_strided_slice %57 {offsets = [0, 0], sizes = [16, 4], strides = [1, 1]} : vector<16x32xf32> to vector<16x4xf32>
    %59 = vector.extract_strided_slice %57 {offsets = [0, 4], sizes = [16, 4], strides = [1, 1]} : vector<16x32xf32> to vector<16x4xf32>
    %60 = vector.extract_strided_slice %57 {offsets = [0, 8], sizes = [16, 4], strides = [1, 1]} : vector<16x32xf32> to vector<16x4xf32>
    %61 = vector.extract_strided_slice %57 {offsets = [0, 12], sizes = [16, 4], strides = [1, 1]} : vector<16x32xf32> to vector<16x4xf32>
    %62 = vector.extract_strided_slice %57 {offsets = [0, 16], sizes = [16, 1], strides = [1, 1]} : vector<16x32xf32> to vector<16x1xf32>
    %cst_39 = arith.constant 5.000000e-01 : f32
    %63 = vector.broadcast %cst_39 : f32 to vector<16x4xf32>
    %64 = arith.mulf %63, %56 : vector<16x4xf32>
    %65 = math.exp %64 : vector<16x4xf32>
    %66 = arith.mulf %65, %58 : vector<16x4xf32>
    %67 = arith.addf %55, %66 : vector<16x4xf32>
    %68 = arith.mulf %60, %67 : vector<16x4xf32>
    %69 = arith.mulf %61, %59 : vector<16x4xf32>
    %70 = arith.addf %68, %69 : vector<16x4xf32>
    %71 = arith.truncf %70 : vector<16x4xf32> to vector<16x4xbf16>
    %c0_40 = arith.constant 0 : index
    %c0_41 = arith.constant 0 : index
    %c0_42 = arith.constant 0 : index
    %72 = vector.load %arg9[%c0_40, %c0_41, %c0_42] : memref<2x4x128xbf16, #tpu.memory_space<vmem>>, vector<1x4x128xbf16>
    %73 = vector.shape_cast %72 : vector<1x4x128xbf16> to vector<4x128xbf16>
    %cst_43 = arith.constant dense<0.000000e+00> : vector<16x128xf32>
    %74 = tpu.matmul %71, %73, %cst_43 {dimension_numbers = #tpu.dot_dimension_numbers<[1], [0], [0], [1], [0, 0, 1, 1], [], []>} : vector<16x4xbf16>, vector<4x128xbf16>, vector<16x128xf32> -> vector<16x128xf32>
    %75 = vector.broadcast %6 : vector<1x128xf32> to vector<16x128xf32>
    %76 = arith.addf %74, %75 : vector<16x128xf32>
    %c0_44 = arith.constant 0 : index
    %c0_45 = arith.constant 0 : index
    %77 = vector.load %arg4[%c0_44, %c0_45] : memref<16x128xf32, #tpu.memory_space<vmem>>, vector<16x128xf32>
    %78 = arith.addf %76, %77 : vector<16x128xf32>
    %79 = arith.negf %78 : vector<16x128xf32>
    %80 = math.exp %79 : vector<16x128xf32>
    %cst_46 = arith.constant 1.000000e+00 : f32
    %81 = vector.broadcast %cst_46 : f32 to vector<16x128xf32>
    %82 = arith.addf %81, %80 : vector<16x128xf32>
    %83 = arith.divf %81, %82 : vector<16x128xf32>
    %84 = arith.mulf %78, %83 : vector<16x128xf32>
    %85 = arith.truncf %67 : vector<16x4xf32> to vector<16x4xbf16>
    %c1_47 = arith.constant 1 : index
    %c0_48 = arith.constant 0 : index
    %c0_49 = arith.constant 0 : index
    %86 = vector.load %arg9[%c1_47, %c0_48, %c0_49] : memref<2x4x128xbf16, #tpu.memory_space<vmem>>, vector<1x4x128xbf16>
    %87 = vector.shape_cast %86 : vector<1x4x128xbf16> to vector<4x128xbf16>
    %cst_50 = arith.constant dense<0.000000e+00> : vector<16x128xf32>
    %88 = tpu.matmul %85, %87, %cst_50 {dimension_numbers = #tpu.dot_dimension_numbers<[1], [0], [0], [1], [0, 0, 1, 1], [], []>} : vector<16x4xbf16>, vector<4x128xbf16>, vector<16x128xf32> -> vector<16x128xf32>
    %89 = vector.broadcast %7 : vector<1x128xf32> to vector<16x128xf32>
    %90 = arith.addf %88, %89 : vector<16x128xf32>
    %91 = arith.negf %90 : vector<16x128xf32>
    %92 = math.exp %91 : vector<16x128xf32>
    %cst_51 = arith.constant 1.000000e+00 : f32
    %93 = vector.broadcast %cst_51 : f32 to vector<16x128xf32>
    %94 = arith.addf %93, %92 : vector<16x128xf32>
    %95 = arith.divf %93, %94 : vector<16x128xf32>
    %96 = arith.mulf %90, %95 : vector<16x128xf32>
    %97 = arith.truncf %84 : vector<16x128xf32> to vector<16x128xbf16>
    %c2_52 = arith.constant 2 : index
    %c0_53 = arith.constant 0 : index
    %c0_54 = arith.constant 0 : index
    %98 = vector.load %arg6[%c2_52, %c0_53, %c0_54] : memref<4x128x128xbf16, #tpu.memory_space<vmem>>, vector<1x128x128xbf16>
    %99 = vector.shape_cast %98 : vector<1x128x128xbf16> to vector<128x128xbf16>
    %cst_55 = arith.constant dense<0.000000e+00> : vector<16x128xf32>
    %100 = tpu.matmul %97, %99, %cst_55 {dimension_numbers = #tpu.dot_dimension_numbers<[1], [0], [0], [1], [0, 0, 1, 1], [], []>} : vector<16x128xbf16>, vector<128x128xbf16>, vector<16x128xf32> -> vector<16x128xf32>
    %101 = vector.broadcast %4 : vector<1x128xf32> to vector<16x128xf32>
    %102 = arith.addf %100, %101 : vector<16x128xf32>
    %103 = arith.truncf %102 : vector<16x128xf32> to vector<16x128xbf16>
    %cst_56 = arith.constant dense<0.000000e+00> : vector<16x256xf32>
    %104 = tpu.matmul %103, %35, %cst_56 {dimension_numbers = #tpu.dot_dimension_numbers<[1], [1], [0], [0], [0, 0, 1, 0], [], []>} : vector<16x128xbf16>, vector<256x128xbf16>, vector<16x256xf32> -> vector<16x256xf32>
    %cst_57 = arith.constant 0.0883883461 : f32
    %105 = vector.broadcast %cst_57 : f32 to vector<16x256xf32>
    %106 = arith.mulf %104, %105 : vector<16x256xf32>
    %c0_58 = arith.constant 0 : index
    %c0_59 = arith.constant 0 : index
    %107 = vector.load %arg5[%c0_58, %c0_59] : memref<16x256xf32, #tpu.memory_space<vmem>>, vector<16x256xf32>
    %108 = arith.addf %106, %107 : vector<16x256xf32>
    %cst_60 = arith.constant dense<0xFF800000> : vector<16xf32>
    %109 = vector.multi_reduction <maximumf>, %108, %cst_60 [1] : vector<16x256xf32> to vector<16xf32>
    %110 = vector.shape_cast %109 : vector<16xf32> to vector<16x1xf32>
    %111 = vector.broadcast %110 : vector<16x1xf32> to vector<16x256xf32>
    %112 = arith.subf %108, %111 : vector<16x256xf32>
    %113 = math.exp %112 : vector<16x256xf32>
    %cst_61 = arith.constant dense<0.000000e+00> : vector<16xf32>
    %114 = vector.multi_reduction <add>, %113, %cst_61 [1] : vector<16x256xf32> to vector<16xf32>
    %115 = vector.shape_cast %114 : vector<16xf32> to vector<16x1xf32>
    %116 = arith.truncf %113 : vector<16x256xf32> to vector<16x256xbf16>
    %cst_62 = arith.constant dense<0.000000e+00> : vector<16x128xf32>
    %117 = tpu.matmul %116, %36, %cst_62 {dimension_numbers = #tpu.dot_dimension_numbers<[1], [0], [0], [1], [0, 0, 1, 1], [], []>} : vector<16x256xbf16>, vector<256x128xbf16>, vector<16x128xf32> -> vector<16x128xf32>
    %118 = tpu.reciprocal %115 {approx = true} : vector<16x1xf32> -> vector<16x1xf32>
    %119 = vector.broadcast %118 : vector<16x1xf32> to vector<16x128xf32>
    %120 = arith.mulf %117, %119 : vector<16x128xf32>
    %121 = arith.truncf %120 : vector<16x128xf32> to vector<16x128xbf16>
    %c3_63 = arith.constant 3 : index
    %c0_64 = arith.constant 0 : index
    %c0_65 = arith.constant 0 : index
    %122 = vector.load %arg6[%c3_63, %c0_64, %c0_65] : memref<4x128x128xbf16, #tpu.memory_space<vmem>>, vector<1x128x128xbf16>
    %123 = vector.shape_cast %122 : vector<1x128x128xbf16> to vector<128x128xbf16>
    %cst_66 = arith.constant dense<0.000000e+00> : vector<16x128xf32>
    %124 = tpu.matmul %121, %123, %cst_66 {dimension_numbers = #tpu.dot_dimension_numbers<[1], [0], [0], [1], [0, 0, 1, 1], [], []>} : vector<16x128xbf16>, vector<128x128xbf16>, vector<16x128xf32> -> vector<16x128xf32>
    %125 = vector.broadcast %5 : vector<1x128xf32> to vector<16x128xf32>
    %126 = arith.addf %124, %125 : vector<16x128xf32>
    %127 = arith.addf %84, %126 : vector<16x128xf32>
    %128 = arith.truncf %127 : vector<16x128xf32> to vector<16x128xbf16>
    %c1_67 = arith.constant 1 : index
    %c0_68 = arith.constant 0 : index
    %c0_69 = arith.constant 0 : index
    %129 = vector.load %arg10[%c1_67, %c0_68, %c0_69] : memref<3x128x256xbf16, #tpu.memory_space<vmem>>, vector<1x128x256xbf16>
    %130 = vector.shape_cast %129 : vector<1x128x256xbf16> to vector<128x256xbf16>
    %cst_70 = arith.constant dense<0.000000e+00> : vector<16x256xf32>
    %131 = tpu.matmul %128, %130, %cst_70 {dimension_numbers = #tpu.dot_dimension_numbers<[1], [0], [0], [1], [0, 0, 1, 1], [], []>} : vector<16x128xbf16>, vector<128x256xbf16>, vector<16x256xf32> -> vector<16x256xf32>
    %132 = vector.extract_strided_slice %131 {offsets = [0, 0], sizes = [16, 4], strides = [1, 1]} : vector<16x256xf32> to vector<16x4xf32>
    %133 = vector.broadcast %9 : vector<1x4xf32> to vector<16x4xf32>
    %134 = arith.addf %132, %133 : vector<16x4xf32>
    %135 = arith.subf %134, %59 : vector<16x4xf32>
    %136 = vector.broadcast %62 : vector<16x1xf32> to vector<16x4xf32>
    %137 = arith.mulf %135, %136 : vector<16x4xf32>
    %138 = arith.mulf %137, %137 : vector<16x4xf32>
    %cst_71 = arith.constant dense<0.000000e+00> : vector<16xf32>
    %139 = vector.multi_reduction <add>, %138, %cst_71 [1] : vector<16x4xf32> to vector<16xf32>
    %140 = vector.shape_cast %139 : vector<16xf32> to vector<16x1xf32>
    %cst_72 = arith.constant dense<0.000000e+00> : vector<1xf32>
    %141 = vector.multi_reduction <add>, %140, %cst_72 [0] : vector<16x1xf32> to vector<1xf32>
    %142 = vector.shape_cast %141 : vector<1xf32> to vector<1x1xf32>
    %143 = vector.shape_cast %142 : vector<1x1xf32> to vector<1x1x1xf32>
    %144 = vector.broadcast %143 : vector<1x1x1xf32> to vector<1x1x128xf32>
    %c0_73 = arith.constant 0 : index
    %c0_74 = arith.constant 0 : index
    %c0_75 = arith.constant 0 : index
    %145 = vector.load %arg13[%c0_73, %c0_74, %c0_75] : memref<1x1x128xf32, #tpu.memory_space<vmem>>, vector<1x1x128xf32>
    tpu.vector_store %arg13[%c0_73, %c0_74, %c0_75], %144 {strides = array<i32>} : memref<1x1x128xf32, #tpu.memory_space<vmem>>, vector<1x1x128xf32>,
    %146 = arith.truncf %96 : vector<16x128xf32> to vector<16x128xbf16>
    %c2_76 = arith.constant 2 : index
    %c0_77 = arith.constant 0 : index
    %c0_78 = arith.constant 0 : index
    %147 = vector.load %arg10[%c2_76, %c0_77, %c0_78] : memref<3x128x256xbf16, #tpu.memory_space<vmem>>, vector<1x128x256xbf16>
    %148 = vector.shape_cast %147 : vector<1x128x256xbf16> to vector<128x256xbf16>
    %cst_79 = arith.constant dense<0.000000e+00> : vector<16x256xf32>
    %149 = tpu.matmul %146, %148, %cst_79 {dimension_numbers = #tpu.dot_dimension_numbers<[1], [0], [0], [1], [0, 0, 1, 1], [], []>} : vector<16x128xbf16>, vector<128x256xbf16>, vector<16x256xf32> -> vector<16x256xf32>
    %150 = vector.extract_strided_slice %149 {offsets = [0, 0], sizes = [16, 192], strides = [1, 1]} : vector<16x256xf32> to vector<16x192xf32>
    %151 = vector.broadcast %10 : vector<1x192xf32> to vector<16x192xf32>
    %152 = arith.addf %150, %151 : vector<16x192xf32>
    %153 = arith.truncf %152 : vector<16x192xf32> to vector<16x192xbf16>
    %c0_80 = arith.constant 0 : index
    %c0_81 = arith.constant 0 : index
    %154 = vector.load %arg12[%c0_80, %c0_81] : memref<16x192xbf16, #tpu.memory_space<vmem>>, vector<16x192xbf16>
    tpu.vector_store %arg12[%c0_80, %c0_81], %153 {strides = array<i32>} : memref<16x192xbf16, #tpu.memory_space<vmem>>, vector<16x192xbf16>,
    return
  }
  func.func @transform_0(%arg0: i32) -> (i32, i32) {
    %c0_i32 = arith.constant 0 : i32
    %c0_i32_0 = arith.constant 0 : i32
    %c0_i32_1 = arith.constant 0 : i32
    return %c0_i32, %c0_i32_0 : i32, i32
  }
  func.func @transform_1(%arg0: i32) -> (i32, i32) {
    %c0_i32 = arith.constant 0 : i32
    %c0_i32_0 = arith.constant 0 : i32
    return %arg0, %c0_i32 : i32, i32
  }
  func.func @transform_2(%arg0: i32) -> (i32, i32) {
    %c0_i32 = arith.constant 0 : i32
    %c0_i32_0 = arith.constant 0 : i32
    return %arg0, %c0_i32 : i32, i32
  }
  func.func @transform_3(%arg0: i32) -> (i32, i32) {
    %c0_i32 = arith.constant 0 : i32
    %c0_i32_0 = arith.constant 0 : i32
    return %arg0, %c0_i32 : i32, i32
  }
  func.func @transform_4(%arg0: i32) -> (i32, i32) {
    %c0_i32 = arith.constant 0 : i32
    %c0_i32_0 = arith.constant 0 : i32
    return %arg0, %c0_i32 : i32, i32
  }
  func.func @transform_5(%arg0: i32) -> (i32, i32, i32) {
    %c0_i32 = arith.constant 0 : i32
    %c0_i32_0 = arith.constant 0 : i32
    %c0_i32_1 = arith.constant 0 : i32
    %c0_i32_2 = arith.constant 0 : i32
    return %c0_i32, %c0_i32_0, %c0_i32_1 : i32, i32, i32
  }
  func.func @transform_6(%arg0: i32) -> (i32, i32) {
    %c0_i32 = arith.constant 0 : i32
    %c0_i32_0 = arith.constant 0 : i32
    %c0_i32_1 = arith.constant 0 : i32
    return %c0_i32, %c0_i32_0 : i32, i32
  }
  func.func @transform_7(%arg0: i32) -> (i32, i32) {
    %c0_i32 = arith.constant 0 : i32
    %c0_i32_0 = arith.constant 0 : i32
    %c0_i32_1 = arith.constant 0 : i32
    return %c0_i32, %c0_i32_0 : i32, i32
  }
  func.func @transform_8(%arg0: i32) -> (i32, i32, i32) {
    %c0_i32 = arith.constant 0 : i32
    %c0_i32_0 = arith.constant 0 : i32
    %c0_i32_1 = arith.constant 0 : i32
    %c0_i32_2 = arith.constant 0 : i32
    return %c0_i32, %c0_i32_0, %c0_i32_1 : i32, i32, i32
  }
  func.func @transform_9(%arg0: i32) -> (i32, i32, i32) {
    %c0_i32 = arith.constant 0 : i32
    %c0_i32_0 = arith.constant 0 : i32
    %c0_i32_1 = arith.constant 0 : i32
    %c0_i32_2 = arith.constant 0 : i32
    return %c0_i32, %c0_i32_0, %c0_i32_1 : i32, i32, i32
  }
  func.func @transform_10(%arg0: i32) -> (i32, i32) {
    %c0_i32 = arith.constant 0 : i32
    %c0_i32_0 = arith.constant 0 : i32
    %c0_i32_1 = arith.constant 0 : i32
    return %c0_i32, %c0_i32_0 : i32, i32
  }
  func.func @transform_11(%arg0: i32) -> (i32, i32) {
    %c0_i32 = arith.constant 0 : i32
    %c0_i32_0 = arith.constant 0 : i32
    return %arg0, %c0_i32 : i32, i32
  }
  func.func @transform_12(%arg0: i32) -> (i32, i32, i32) {
    %c0_i32 = arith.constant 0 : i32
    %c0_i32_0 = arith.constant 0 : i32
    %c0_i32_1 = arith.constant 0 : i32
    return %arg0, %c0_i32, %c0_i32_0 : i32, i32, i32
  }
}

</mosaic_0001>

<llo_original>
// kernel: mul.70
$region0: #{mul.70}
  %s0 = inlined_call_operand.vmem [shape: f32[2,16], index: 0, kind: input, shape index: {}]
  %s1 = inlined_call_operand.vmem [shape: f32[32], index: 1, kind: output, shape index: {}]
  $region1: #{mul.70} parent=0
    #allocation0 [shape = 'u8[4096]{0}', space=vmem, size = 0x1000, scoped, tag = 'scoped mem for output reshape']
    #allocation1 [shape = 'u8[4096]{0}', space=vmem, size = 0x1000, scoped, tag = 'scoped mem for input reshape']
    %s3 = sshllo.u32 0, 2
    %v4 = vld [vmem:[%s0] sm:%s3]
    %5 = vst [vmem:[#allocation1] sm:%s3] %v4
    %v6 = vld [vmem:[#allocation1] sm:$0x1]
    %vm7 = vcmask 130048
    %8 = vst.msk [vmem:[#allocation0] sm:$0x1] %vm7, %v6
    %s9 = scalar_lea.vmem [#allocation1], 1
    %v10 = vld [vmem:[%s9] sm:$0x1]
    %11 = vrot.lane.b32.xlu0 %v10, 16
    %v12 = vpop.permute.xlu0 %11
    %vm13 = vcmask 261248
    %14 = vst.msk [vmem:[#allocation0] sm:$0x1] %vm13, %v12
    %s16 = sshllo.u32 0, 1
    %v18 = vld [vmem:[#allocation0] sm:%s16]
    %s19 = sshllo.u32 0, 1
    %20 = vst [vmem:[%s1] sm:%s19] %v18

// kernel: mul.68
$region0: #{mul.68}
  #allocation0 [shape = 's32[1]{0}', space=sflag, size = 0x4, scoped, tag = 'scoped memory for mul.68']
  %s0 = inlined_call_operand.vmem [shape: f32[32], index: 0, kind: input, shape index: {}]
  %s1 = inlined_call_operand.vmem [shape: f32[32,4], index: 1, kind: output, shape index: {}]
  // Predicated region
  $region2: #{mul.68} parent=0 // pred_check
    _
  $region3: #{mul.68} parent=0 // pred_check_branch
    %3 = sbr.rel (0) target = $region5
  $region4: #{mul.68} parent=0 // pred_region
    _
  $region5: #{mul.68} parent=0 // pred_fallthru
    _
  %v4 = vld [vmem:[%s0] ss:$0 sm:$0xff]
  %6 = vbcast.lane.b32.xlu0 %v4, 256
  %v7 = vpop.permute.xlu0 %6
  %8 = vst [vmem:[%s1] sm:$0xff] %v7
  %v9 = vld [vmem:[%s0] ss:$0 sm:$0xff]
  %s11 = sor.u32 256, 8
  %12 = vbcast.lane.b32.xlu0 %v9, %s11
  %v13 = vpop.permute.xlu0 %12
  %s14 = scalar_lea.vmem %s1, 8
  %15 = vst [vmem:[%s14] sm:$0xff] %v13
  %v16 = vld [vmem:[%s0] ss:$0 sm:$0xff]
  %s18 = sor.u32 256, 16
  %19 = vbcast.lane.b32.xlu0 %v16, %s18
  %v20 = vpop.permute.xlu0 %19
  %s21 = scalar_lea.vmem %s1, 16
  %22 = vst [vmem:[%s21] sm:$0xff] %v20
  %v23 = vld [vmem:[%s0] ss:$0 sm:$0xff]
  %s25 = sor.u32 256, 24
  %26 = vbcast.lane.b32.xlu0 %v23, %s25
  %v27 = vpop.permute.xlu0 %26
  %s28 = scalar_lea.vmem %s1, 24
  %29 = vst [vmem:[%s28] sm:$0xff] %v27

// kernel: stable_diffusion_forward.3
$region0: #{stable_diffusion_forward.3}
  #allocation0 [shape = 'u32[]', space=smem, size = 0x4, offset = 0x4, fixed_abs, tag = 'smem constant byte address 0x4 - core index']
  #allocation1 [shape = 'u32[144,128]{1,0:T(1,128)}', space=vmem, size = 0x12000, scoped, tag = 'internal scratch']
  %s0 = inlined_call_operand.vmem [shape: bf16[256,128], index: 0, kind: input, shape index: {}]
  %s1 = inlined_call_operand.vmem [shape: bf16[32,192], index: 1, kind: input, shape index: {}]
  %s2 = inlined_call_operand.vmem [shape: f32[32,32], index: 2, kind: input, shape index: {}]
  %s3 = inlined_call_operand.vmem [shape: f32[32,128], index: 3, kind: input, shape index: {}]
  %s4 = inlined_call_operand.vmem [shape: f32[32,256], index: 4, kind: input, shape index: {}]
  %s5 = inlined_call_operand.vmem [shape: bf16[4,128,128], index: 5, kind: input, shape index: {}]
  %s6 = inlined_call_operand.vmem [shape: bf16[128,256], index: 6, kind: input, shape index: {}]
  %s7 = inlined_call_operand.vmem [shape: bf16[192,128], index: 7, kind: input, shape index: {}]
  %s8 = inlined_call_operand.vmem [shape: bf16[2,4,128], index: 8, kind: input, shape index: {}]
  %s9 = inlined_call_operand.vmem [shape: bf16[3,128,256], index: 9, kind: input, shape index: {}]
  %s10 = inlined_call_operand.vmem [shape: f32[7,256], index: 10, kind: input, shape index: {}]
  %s11 = inlined_call_operand.vmem [shape: bf16[32,192], index: 11, kind: output, shape index: {0}]
  %s12 = inlined_call_operand.vmem [shape: f32[2,1,128], index: 12, kind: output, shape index: {1}]
  %13 = xla_tuple %s11, %s12
  %s14 = sld [smem:[#allocation0]]
  $region85: #{stable_diffusion_forward.3} parent=0
    _
  %s16 = ssub.s32 1, %s14
  %s17 = scalar_select 0, %s16, %s14
  loop: start=0, step=1, limit=4
  $region2: #{stable_diffusion_forward.3} parent=0 // loop_pre_header
    _
  $region3: #{stable_diffusion_forward.3} parent=0 // loop_header
    %s19 = sphi 0, %s23
    %p20 = scmp.ge.s32.totalorder %s19, 4
    %s27 = sphi 0, %s27
    %s29 = sphi 0, %s27
    %s30 = sphi 0, %s29
    %s44 = sphi 0, %s30
    %s50 = sphi 0, %s52
    %s53 = sphi 0, %s50
    %s54 = sphi 0, %s53
    %s70 = sphi 0, %s54
    %s76 = sphi 0, %s78
    %s79 = sphi 0, %s76
    %s80 = sphi 0, %s79
    %s96 = sphi 0, %s80
    %s102 = sphi 0, %s104
    %s105 = sphi 0, %s102
    %s106 = sphi 0, %s105
    %s122 = sphi 0, %s106
    %s128 = sphi 0, %s130
    %s131 = sphi 0, %s128
    %s132 = sphi 0, %s131
    %s148 = sphi 0, %s132
    %s152 = sphi 0, %s152
    %s154 = sphi 0, %s152
    %s155 = sphi 0, %s154
    %s169 = sphi 0, %s155
    %s173 = sphi 0, %s173
    %s175 = sphi 0, %s173
    %s176 = sphi 0, %s175
    %s190 = sphi 0, %s176
    %s194 = sphi 0, %s194
    %s196 = sphi 0, %s194
    %s197 = sphi 0, %s196
    %s211 = sphi 0, %s197
    %s215 = sphi 0, %s215
    %s217 = sphi 0, %s215
    %s218 = sphi 0, %s217
    %s232 = sphi 0, %s218
    %s236 = sphi 0, %s236
    %s238 = sphi 0, %s236
    %s239 = sphi 0, %s238
    %s253 = sphi 0, %s239
    %s257 = sphi 0, %s257
    %s259 = sphi 0, %s257
    %s260 = sphi 0, %s259
    %s274 = sphi 0, %s260
    %s280 = sphi 0, %s282
    %s283 = sphi 0, %s280
    %s284 = sphi 0, %s283
    %s300 = sphi 0, %s284
    %s306 = sphi 0, %s308
    %s309 = sphi 0, %s306
    %s310 = sphi 0, %s309
    %s326 = sphi 0, %s310
  $region4: #{stable_diffusion_forward.3} parent=0 // loop_header_branch
    %22 = sbr.rel (%p20) target = $region8
  $region5: #{stable_diffusion_forward.3} parent=0 // loop_body
    %s24 = ssub.s32 %s19, 1
    %s25 = ssub.s32 %s19, 2
    %s26 = sadd.s32 %s19, 1
    %s28 = sadd.s32 %s27, 1
    %p31 = scmp.eq.s32.totalorder %s19, 1
    %p32 = scmp.ne.s32.totalorder %s27, %s29
    %p33 = scmp.eq.s32.totalorder %s19, 0
    %p34 = por %p32, %p33
    %p35 = scmp.ne.s32.totalorder %s27, %s29
    %p36 = scmp.eq.s32.totalorder %s24, 1
    %p37 = por %p35, %p36
    %p38 = scmp.ne.s32.totalorder %s29, %s30
    %p39 = scmp.eq.s32.totalorder %s24, 0
    %p40 = por %p38, %p39
    %p41 = scmp.ne.s32.totalorder %s29, %s30
    %p42 = scmp.eq.s32.totalorder %s25, 1
    %p43 = por %p41, %p42
    %p45 = scmp.ne.s32.totalorder %s30, %s44
    %p46 = scmp.eq.s32.totalorder %s25, 0
    %p47 = por %p45, %p46
    %s48 = ssub.s32 %s19, %s26
    %p49 = scmp.eq.s32.totalorder %s48, 0
    %s51 = sadd.s32 %s50, 1
    %s52 = scalar_select %p49, %s50, %s51
    %p55 = pneg %p49
    %p56 = scmp.eq.s32.totalorder %s19, 1
    %p57 = por %p55, %p56
    %p58 = scmp.ne.s32.totalorder %s50, %s53
    %p59 = scmp.eq.s32.totalorder %s19, 0
    %p60 = por %p58, %p59
    %p61 = scmp.ne.s32.totalorder %s50, %s53
    %p62 = scmp.eq.s32.totalorder %s24, 1
    %p63 = por %p61, %p62
    %p64 = scmp.ne.s32.totalorder %s53, %s54
    %p65 = scmp.eq.s32.totalorder %s24, 0
    %p66 = por %p64, %p65
    %p67 = scmp.ne.s32.totalorder %s53, %s54
    %p68 = scmp.eq.s32.totalorder %s25, 1
    %p69 = por %p67, %p68
    %p71 = scmp.ne.s32.totalorder %s54, %s70
    %p72 = scmp.eq.s32.totalorder %s25, 0
    %p73 = por %p71, %p72
    %s74 = ssub.s32 %s19, %s26
    %p75 = scmp.eq.s32.totalorder %s74, 0
    %s77 = sadd.s32 %s76, 1
    %s78 = scalar_select %p75, %s76, %s77
    %p81 = pneg %p75
    %p82 = scmp.eq.s32.totalorder %s19, 1
    %p83 = por %p81, %p82
    %p84 = scmp.ne.s32.totalorder %s76, %s79
    %p85 = scmp.eq.s32.totalorder %s19, 0
    %p86 = por %p84, %p85
    %p87 = scmp.ne.s32.totalorder %s76, %s79
    %p88 = scmp.eq.s32.totalorder %s24, 1
    %p89 = por %p87, %p88
    %p90 = scmp.ne.s32.totalorder %s79, %s80
    %p91 = scmp.eq.s32.totalorder %s24, 0
    %p92 = por %p90, %p91
    %p93 = scmp.ne.s32.totalorder %s79, %s80
    %p94 = scmp.eq.s32.totalorder %s25, 1
    %p95 = por %p93, %p94
    %p97 = scmp.ne.s32.totalorder %s80, %s96
    %p98 = scmp.eq.s32.totalorder %s25, 0
    %p99 = por %p97, %p98
    %s100 = ssub.s32 %s19, %s26
    %p101 = scmp.eq.s32.totalorder %s100, 0
    %s103 = sadd.s32 %s102, 1
    %s104 = scalar_select %p101, %s102, %s103
    %p107 = pneg %p101
    %p108 = scmp.eq.s32.totalorder %s19, 1
    %p109 = por %p107, %p108
    %p110 = scmp.ne.s32.totalorder %s102, %s105
    %p111 = scmp.eq.s32.totalorder %s19, 0
    %p112 = por %p110, %p111
    %p113 = scmp.ne.s32.totalorder %s102, %s105
    %p114 = scmp.eq.s32.totalorder %s24, 1
    %p115 = por %p113, %p114
    %p116 = scmp.ne.s32.totalorder %s105, %s106
    %p117 = scmp.eq.s32.totalorder %s24, 0
    %p118 = por %p116, %p117
    %p119 = scmp.ne.s32.totalorder %s105, %s106
    %p120 = scmp.eq.s32.totalorder %s25, 1
    %p121 = por %p119, %p120
    %p123 = scmp.ne.s32.totalorder %s106, %s122
    %p124 = scmp.eq.s32.totalorder %s25, 0
    %p125 = por %p123, %p124
    %s126 = ssub.s32 %s19, %s26
    %p127 = scmp.eq.s32.totalorder %s126, 0
    %s129 = sadd.s32 %s128, 1
    %s130 = scalar_select %p127, %s128, %s129
    %p133 = pneg %p127
    %p134 = scmp.eq.s32.totalorder %s19, 1
    %p135 = por %p133, %p134
    %p136 = scmp.ne.s32.totalorder %s128, %s131
    %p137 = scmp.eq.s32.totalorder %s19, 0
    %p138 = por %p136, %p137
    %p139 = scmp.ne.s32.totalorder %s128, %s131
    %p140 = scmp.eq.s32.totalorder %s24, 1
    %p141 = por %p139, %p140
    %p142 = scmp.ne.s32.totalorder %s131, %s132
    %p143 = scmp.eq.s32.totalorder %s24, 0
    %p144 = por %p142, %p143
    %p145 = scmp.ne.s32.totalorder %s131, %s132
    %p146 = scmp.eq.s32.totalorder %s25, 1
    %p147 = por %p145, %p146
    %p149 = scmp.ne.s32.totalorder %s132, %s148
    %p150 = scmp.eq.s32.totalorder %s25, 0
    %p151 = por %p149, %p150
    %s153 = sadd.s32 %s152, 1
    %p156 = scmp.eq.s32.totalorder %s19, 1
    %p157 = scmp.ne.s32.totalorder %s152, %s154
    %p158 = scmp.eq.s32.totalorder %s19, 0
    %p159 = por %p157, %p158
    %p160 = scmp.ne.s32.totalorder %s152, %s154
    %p161 = scmp.eq.s32.totalorder %s24, 1
    %p162 = por %p160, %p161
    %p163 = scmp.ne.s32.totalorder %s154, %s155
    %p164 = scmp.eq.s32.totalorder %s24, 0
    %p165 = por %p163, %p164
    %p166 = scmp.ne.s32.totalorder %s154, %s155
    %p167 = scmp.eq.s32.totalorder %s25, 1
    %p168 = por %p166, %p167
    %p170 = scmp.ne.s32.totalorder %s155, %s169
    %p171 = scmp.eq.s32.totalorder %s25, 0
    %p172 = por %p170, %p171
    %s174 = sadd.s32 %s173, 1
    %p177 = scmp.eq.s32.totalorder %s19, 1
    %p178 = scmp.ne.s32.totalorder %s173, %s175
    %p179 = scmp.eq.s32.totalorder %s19, 0
    %p180 = por %p178, %p179
    %p181 = scmp.ne.s32.totalorder %s173, %s175
    %p182 = scmp.eq.s32.totalorder %s24, 1
    %p183 = por %p181, %p182
    %p184 = scmp.ne.s32.totalorder %s175, %s176
    %p185 = scmp.eq.s32.totalorder %s24, 0
    %p186 = por %p184, %p185
    %p187 = scmp.ne.s32.totalorder %s175, %s176
    %p188 = scmp.eq.s32.totalorder %s25, 1
    %p189 = por %p187, %p188
    %p191 = scmp.ne.s32.totalorder %s176, %s190
    %p192 = scmp.eq.s32.totalorder %s25, 0
    %p193 = por %p191, %p192
    %s195 = sadd.s32 %s194, 1
    %p198 = scmp.eq.s32.totalorder %s19, 1
    %p199 = scmp.ne.s32.totalorder %s194, %s196
    %p200 = scmp.eq.s32.totalorder %s19, 0
    %p201 = por %p199, %p200
    %p202 = scmp.ne.s32.totalorder %s194, %s196
    %p203 = scmp.eq.s32.totalorder %s24, 1
    %p204 = por %p202, %p203
    %p205 = scmp.ne.s32.totalorder %s196, %s197
    %p206 = scmp.eq.s32.totalorder %s24, 0
    %p207 = por %p205, %p206
    %p208 = scmp.ne.s32.totalorder %s196, %s197
    %p209 = scmp.eq.s32.totalorder %s25, 1
    %p210 = por %p208, %p209
    %p212 = scmp.ne.s32.totalorder %s197, %s211
    %p213 = scmp.eq.s32.totalorder %s25, 0
    %p214 = por %p212, %p213
    %s216 = sadd.s32 %s215, 1
    %p219 = scmp.eq.s32.totalorder %s19, 1
    %p220 = scmp.ne.s32.totalorder %s215, %s217
    %p221 = scmp.eq.s32.totalorder %s19, 0
    %p222 = por %p220, %p221
    %p223 = scmp.ne.s32.totalorder %s215, %s217
    %p224 = scmp.eq.s32.totalorder %s24, 1
    %p225 = por %p223, %p224
    %p226 = scmp.ne.s32.totalorder %s217, %s218
    %p227 = scmp.eq.s32.totalorder %s24, 0
    %p228 = por %p226, %p227
    %p229 = scmp.ne.s32.totalorder %s217, %s218
    %p230 = scmp.eq.s32.totalorder %s25, 1
    %p231 = por %p229, %p230
    %p233 = scmp.ne.s32.totalorder %s218, %s232
    %p234 = scmp.eq.s32.totalorder %s25, 0
    %p235 = por %p233, %p234
    %s237 = sadd.s32 %s236, 1
    %p240 = scmp.eq.s32.totalorder %s19, 1
    %p241 = scmp.ne.s32.totalorder %s236, %s238
    %p242 = scmp.eq.s32.totalorder %s19, 0
    %p243 = por %p241, %p242
    %p244 = scmp.ne.s32.totalorder %s236, %s238
    %p245 = scmp.eq.s32.totalorder %s24, 1
    %p246 = por %p244, %p245
    %p247 = scmp.ne.s32.totalorder %s238, %s239
    %p248 = scmp.eq.s32.totalorder %s24, 0
    %p249 = por %p247, %p248
    %p250 = scmp.ne.s32.totalorder %s238, %s239
    %p251 = scmp.eq.s32.totalorder %s25, 1
    %p252 = por %p250, %p251
    %p254 = scmp.ne.s32.totalorder %s239, %s253
    %p255 = scmp.eq.s32.totalorder %s25, 0
    %p256 = por %p254, %p255
    %s258 = sadd.s32 %s257, 1
    %p261 = scmp.eq.s32.totalorder %s19, 1
    %p262 = scmp.ne.s32.totalorder %s257, %s259
    %p263 = scmp.eq.s32.totalorder %s19, 0
    %p264 = por %p262, %p263
    %p265 = scmp.ne.s32.totalorder %s257, %s259
    %p266 = scmp.eq.s32.totalorder %s24, 1
    %p267 = por %p265, %p266
    %p268 = scmp.ne.s32.totalorder %s259, %s260
    %p269 = scmp.eq.s32.totalorder %s24, 0
    %p270 = por %p268, %p269
    %p271 = scmp.ne.s32.totalorder %s259, %s260
    %p272 = scmp.eq.s32.totalorder %s25, 1
    %p273 = por %p271, %p272
    %p275 = scmp.ne.s32.totalorder %s260, %s274
    %p276 = scmp.eq.s32.totalorder %s25, 0
    %p277 = por %p275, %p276
    %s278 = ssub.s32 %s19, %s26
    %p279 = scmp.eq.s32.totalorder %s278, 0
    %s281 = sadd.s32 %s280, 1
    %s282 = scalar_select %p279, %s280, %s281
    %p285 = pneg %p279
    %p286 = scmp.eq.s32.totalorder %s19, 1
    %p287 = por %p285, %p286
    %p288 = scmp.ne.s32.totalorder %s280, %s283
    %p289 = scmp.eq.s32.totalorder %s19, 0
    %p290 = por %p288, %p289
    %p291 = scmp.ne.s32.totalorder %s280, %s283
    %p292 = scmp.eq.s32.totalorder %s24, 1
    %p293 = por %p291, %p292
    %p294 = scmp.ne.s32.totalorder %s283, %s284
    %p295 = scmp.eq.s32.totalorder %s24, 0
    %p296 = por %p294, %p295
    %p297 = scmp.ne.s32.totalorder %s283, %s284
    %p298 = scmp.eq.s32.totalorder %s25, 1
    %p299 = por %p297, %p298
    %p301 = scmp.ne.s32.totalorder %s284, %s300
    %p302 = scmp.eq.s32.totalorder %s25, 0
    %p303 = por %p301, %p302
    %s304 = ssub.s32 %s19, %s26
    %p305 = scmp.eq.s32.totalorder %s304, 0
    %s307 = sadd.s32 %s306, 1
    %s308 = scalar_select %p305, %s306, %s307
    %p311 = pneg %p305
    %p312 = scmp.eq.s32.totalorder %s19, 1
    %p313 = por %p311, %p312
    %p314 = scmp.ne.s32.totalorder %s306, %s309
    %p315 = scmp.eq.s32.totalorder %s19, 0
    %p316 = por %p314, %p315
    %p317 = scmp.ne.s32.totalorder %s306, %s309
    %p318 = scmp.eq.s32.totalorder %s24, 1
    %p319 = por %p317, %p318
    %p320 = scmp.ne.s32.totalorder %s309, %s310
    %p321 = scmp.eq.s32.totalorder %s24, 0
    %p322 = por %p320, %p321
    %p323 = scmp.ne.s32.totalorder %s309, %s310
    %p324 = scmp.eq.s32.totalorder %s25, 1
    %p325 = por %p323, %p324
    %p327 = scmp.ne.s32.totalorder %s310, %s326
    %p328 = scmp.eq.s32.totalorder %s25, 0
    %p329 = por %p327, %p328
    %p330 = scmp.le.s32.totalorder 1, %s19
    %p331 = scmp.lt.s32.totalorder %s19, 3
    %p332 = pnand %p330, %p331
    %p333 = pneg %p332
    // Predicated region
    $region9: #{stable_diffusion_forward.3} parent=5 // pred_check
      _
    $region10: #{stable_diffusion_forward.3} parent=5 // pred_check_branch
      %335 = sbr.rel (%p332) target = $region12
    $region11: #{stable_diffusion_forward.3} parent=5 // pred_region
      %s336 = ssub.s32 %s19, 1
      // Predicated region
      $region13: #{stable_diffusion_forward.3} parent=11 // pred_check
        %p337 = pneg %p40
      $region14: #{stable_diffusion_forward.3} parent=11 // pred_check_branch
        %339 = sbr.rel (%p337) target = $region16
      $region15: #{stable_diffusion_forward.3} parent=11 // pred_region
        _
      $region16: #{stable_diffusion_forward.3} parent=11 // pred_fallthru
        _
      // Predicated region
      $region17: #{stable_diffusion_forward.3} parent=11 // pred_check
        %p340 = pneg %p165
      $region18: #{stable_diffusion_forward.3} parent=11 // pred_check_branch
        %342 = sbr.rel (%p340) target = $region20
      $region19: #{stable_diffusion_forward.3} parent=11 // pred_region
        _
      $region20: #{stable_diffusion_forward.3} parent=11 // pred_fallthru
        _
      // Predicated region
      $region21: #{stable_diffusion_forward.3} parent=11 // pred_check
        %p343 = pneg %p186
      $region22: #{stable_diffusion_forward.3} parent=11 // pred_check_branch
        %345 = sbr.rel (%p343) target = $region24
      $region23: #{stable_diffusion_forward.3} parent=11 // pred_region
        _
      $region24: #{stable_diffusion_forward.3} parent=11 // pred_fallthru
        _
      // Predicated region
      $region25: #{stable_diffusion_forward.3} parent=11 // pred_check
        %p346 = pneg %p207
      $region26: #{stable_diffusion_forward.3} parent=11 // pred_check_branch
        %348 = sbr.rel (%p346) target = $region28
      $region27: #{stable_diffusion_forward.3} parent=11 // pred_region
        _
      $region28: #{stable_diffusion_forward.3} parent=11 // pred_fallthru
        _
      // Predicated region
      $region29: #{stable_diffusion_forward.3} parent=11 // pred_check
        %p349 = pneg %p228
      $region30: #{stable_diffusion_forward.3} parent=11 // pred_check_branch
        %351 = sbr.rel (%p349) target = $region32
      $region31: #{stable_diffusion_forward.3} parent=11 // pred_region
        _
      $region32: #{stable_diffusion_forward.3} parent=11 // pred_fallthru
        _
      // Predicated region
      $region33: #{stable_diffusion_forward.3} parent=11 // pred_check
        %p352 = pneg %p249
      $region34: #{stable_diffusion_forward.3} parent=11 // pred_check_branch
        %354 = sbr.rel (%p352) target = $region36
      $region35: #{stable_diffusion_forward.3} parent=11 // pred_region
        _
      $region36: #{stable_diffusion_forward.3} parent=11 // pred_fallthru
        _
      // Predicated region
      $region37: #{stable_diffusion_forward.3} parent=11 // pred_check
        %p355 = pneg %p270
      $region38: #{stable_diffusion_forward.3} parent=11 // pred_check_branch
        %357 = sbr.rel (%p355) target = $region40
      $region39: #{stable_diffusion_forward.3} parent=11 // pred_region
        _
      $region40: #{stable_diffusion_forward.3} parent=11 // pred_fallthru
        _
    $region12: #{stable_diffusion_forward.3} parent=5 // pred_fallthru
      _
    %p358 = scmp.lt.s32.totalorder %s19, 2
    // Predicated region
    $region41: #{stable_diffusion_forward.3} parent=5 // pred_check
      %p359 = pneg %p358
    $region42: #{stable_diffusion_forward.3} parent=5 // pred_check_branch
      %361 = sbr.rel (%p359) target = $region44
    $region43: #{stable_diffusion_forward.3} parent=5 // pred_region
      // Predicated region
      $region45: #{stable_diffusion_forward.3} parent=43 // pred_check
        %p362 = pneg %p60
      $region46: #{stable_diffusion_forward.3} parent=43 // pred_check_branch
        %364 = sbr.rel (%p362) target = $region48
      $region47: #{stable_diffusion_forward.3} parent=43 // pred_region
        %s365 = smul.u32 2, %s19
        %p366 = scmp.lt.s32.totalorder %s365, 3
        %s367 = scalar_select %p366, %s365, 3
        %s368 = smul.addr %s367, 2
        %s369 = smul.addr %s368, 4
        %s370 = scalar_lea.vmem %s1, %s369
        %s371 = smul.u32 2, %s19
      $region48: #{stable_diffusion_forward.3} parent=43 // pred_fallthru
        _
      // Predicated region
      $region49: #{stable_diffusion_forward.3} parent=43 // pred_check
        %p372 = pneg %p86
      $region50: #{stable_diffusion_forward.3} parent=43 // pred_check_branch
        %374 = sbr.rel (%p372) target = $region52
      $region51: #{stable_diffusion_forward.3} parent=43 // pred_region
        %s375 = smul.u32 2, %s19
        %p376 = scmp.lt.s32.totalorder %s375, 3
        %s377 = scalar_select %p376, %s375, 3
        %s378 = smul.addr %s377, 8
        %s379 = scalar_lea.vmem %s2, %s378
        %s380 = smul.u32 2, %s19
      $region52: #{stable_diffusion_forward.3} parent=43 // pred_fallthru
        _
      // Predicated region
      $region53: #{stable_diffusion_forward.3} parent=43 // pred_check
        %p381 = pneg %p112
      $region54: #{stable_diffusion_forward.3} parent=43 // pred_check_branch
        %383 = sbr.rel (%p381) target = $region56
      $region55: #{stable_diffusion_forward.3} parent=43 // pred_region
        %s384 = smul.u32 2, %s19
        %p385 = scmp.lt.s32.totalorder %s384, 3
        %s386 = scalar_select %p385, %s384, 3
        %s387 = smul.addr %s386, 8
        %s388 = scalar_lea.vmem %s3, %s387
        %s389 = smul.u32 2, %s19
      $region56: #{stable_diffusion_forward.3} parent=43 // pred_fallthru
        _
      // Predicated region
      $region57: #{stable_diffusion_forward.3} parent=43 // pred_check
        %p390 = pneg %p138
      $region58: #{stable_diffusion_forward.3} parent=43 // pred_check_branch
        %392 = sbr.rel (%p390) target = $region60
      $region59: #{stable_diffusion_forward.3} parent=43 // pred_region
        %s393 = smul.u32 2, %s19
        %p394 = scmp.lt.s32.totalorder %s393, 3
        %s395 = scalar_select %p394, %s393, 3
        %s396 = smul.addr %s395, 2
        %s397 = smul.addr %s396, 8
        %s398 = scalar_lea.vmem %s4, %s397
        %s399 = smul.u32 2, %s19
      $region60: #{stable_diffusion_forward.3} parent=43 // pred_fallthru
        _
    $region44: #{stable_diffusion_forward.3} parent=5 // pred_fallthru
      _
    %p400 = scmp.le.s32.totalorder 1, %s19
    %p401 = scmp.lt.s32.totalorder %s19, 3
    %p402 = pnand %p400, %p401
    %p403 = pneg %p402
    // Predicated region
    $region61: #{stable_diffusion_forward.3} parent=5 // pred_check
      _
    $region62: #{stable_diffusion_forward.3} parent=5 // pred_check_branch
      %405 = sbr.rel (%p402) target = $region64
    $region63: #{stable_diffusion_forward.3} parent=5 // pred_region
      %s406 = ssub.s32 %s19, 1
      %p407 = pneg %p40
      %p408 = pneg %p37
      %s409 = smul.u32 2, %s24
      %p410 = scmp.lt.s32.totalorder %s409, 3
      %s411 = scalar_select %p410, %s409, 3
      %s412 = smul.addr %s411, 2
      %s413 = smul.addr %s412, 4
      %s414 = scalar_lea.vmem %s1, %s413
      %p415 = pneg %p66
      %p416 = pneg %p63
      %s417 = smul.u32 2, %s24
      %p418 = scmp.lt.s32.totalorder %s417, 3
      %s419 = scalar_select %p418, %s417, 3
      %s420 = smul.addr %s419, 8
      %s421 = scalar_lea.vmem %s2, %s420
      %p422 = pneg %p92
      %p423 = pneg %p89
      %s424 = smul.u32 2, %s24
      %p425 = scmp.lt.s32.totalorder %s424, 3
      %s426 = scalar_select %p425, %s424, 3
      %s427 = smul.addr %s426, 8
      %s428 = scalar_lea.vmem %s3, %s427
      %p429 = pneg %p118
      %p430 = pneg %p115
      %s431 = smul.u32 2, %s24
      %p432 = scmp.lt.s32.totalorder %s431, 3
      %s433 = scalar_select %p432, %s431, 3
      %s434 = smul.addr %s433, 2
      %s435 = smul.addr %s434, 8
      %s436 = scalar_lea.vmem %s4, %s435
      %p437 = pneg %p144
      %p438 = pneg %p141
      %p439 = pneg %p165
      %p440 = pneg %p162
      %p441 = pneg %p186
      %p442 = pneg %p183
      %p443 = pneg %p207
      %p444 = pneg %p204
      %p445 = pneg %p228
      %p446 = pneg %p225
      %p447 = pneg %p249
      %p448 = pneg %p246
      %p449 = pneg %p270
      %p450 = pneg %p267
      %p451 = pneg %p296
      %p452 = pneg %p293
      %s453 = smul.u32 2, %s24
      %p454 = scmp.lt.s32.totalorder %s453, 3
      %s455 = scalar_select %p454, %s453, 3
      %s456 = smul.addr %s455, 2
      %s457 = smul.addr %s456, 4
      %s458 = scalar_lea.vmem %s11, %s457
      %p459 = pneg %p322
      %p460 = pneg %p319
      %p461 = scmp.lt.s32.totalorder %s24, 1
      %s462 = scalar_select %p461, %s24, 1
      %s463 = scalar_lea.vmem %s12, %s462
      %s464 = smul.u32 2, %s24
      %p465 = scmp.lt.s32.totalorder %s464, 3
      %s466 = scalar_select %p465, %s464, 3
      %s467 = smul.addr %s466, 2
      %s468 = smul.addr %s467, 4
      %s469 = scalar_lea.vmem %s1, %s468
      %s470 = smul.u32 2, %s24
      %s471 = smul.u32 2, %s24
      %p472 = scmp.lt.s32.totalorder %s471, 3
      %s473 = scalar_select %p472, %s471, 3
      %s474 = smul.addr %s473, 8
      %s475 = scalar_lea.vmem %s2, %s474
      %s476 = smul.u32 2, %s24
      %s477 = smul.u32 2, %s24
      %p478 = scmp.lt.s32.totalorder %s477, 3
      %s479 = scalar_select %p478, %s477, 3
      %s480 = smul.addr %s479, 8
      %s481 = scalar_lea.vmem %s3, %s480
      %s482 = smul.u32 2, %s24
      %s483 = smul.u32 2, %s24
      %p484 = scmp.lt.s32.totalorder %s483, 3
      %s485 = scalar_select %p484, %s483, 3
      %s486 = smul.addr %s485, 2
      %s487 = smul.addr %s486, 8
      %s488 = scalar_lea.vmem %s4, %s487
      %s489 = smul.u32 2, %s24
      %s490 = smul.u32 2, %s24
      %p491 = scmp.lt.s32.totalorder %s490, 3
      %s492 = scalar_select %p491, %s490, 3
      %s493 = smul.addr %s492, 2
      %s494 = smul.addr %s493, 4
      %s495 = scalar_lea.vmem %s11, %s494
      %s496 = smul.u32 2, %s24
      %p497 = scmp.lt.s32.totalorder %s24, 1
      %s498 = scalar_select %p497, %s24, 1
      %s499 = scalar_lea.vmem %s12, %s498
      %v501 = vld [vmem:[%s10] ss:$0 sm:$0xff]
      %v502 = vld [vmem:[%s10 + $0x8] ss:$0 sm:$0xff]
      %s503 = scalar_lea.vmem %s10, 1
      %v504 = vld [vmem:[%s503] ss:$8 sm:$0x3]
      %v505 = vld [vmem:[%s10 + $0x2] ss:$0 sm:$0xff]
      %v506 = vld [vmem:[%s10 + $0x3] ss:$0 sm:$0xff]
      %v507 = vld [vmem:[%s10 + $0xb] ss:$0 sm:$0xff]
      %v508 = vld [vmem:[%s10 + $0x4] ss:$0 sm:$0xff]
      %v509 = vld [vmem:[%s10 + $0xc] ss:$0 sm:$0xff]
      %v510 = vld [vmem:[%s10 + $0x5] ss:$0 sm:$0xff]
      %v511 = vld [vmem:[%s10 + $0xd] ss:$0 sm:$0xff]
      %s512 = scalar_lea.vmem %s10, 6
      %v513 = vld [vmem:[%s512] ss:$8 sm:$0x3]
      %v514 = vld [vmem:[%s0] sm:$0xf]
      %v515 = vld [vmem:[%s0 + $0x4] sm:$0xf]
      %v516 = vld [vmem:[%s0 + $0x8] sm:$0xf]
      %v517 = vld [vmem:[%s0 + $0xc] sm:$0xf]
      %v518 = vld [vmem:[%s0 + $0x10] sm:$0xf]
      %v519 = vld [vmem:[%s0 + $0x14] sm:$0xf]
      %v520 = vld [vmem:[%s0 + $0x18] sm:$0xf]
      %v521 = vld [vmem:[%s0 + $0x1c] sm:$0xf]
      %v522 = vld [vmem:[%s0 + $0x20] sm:$0xf]
      %v523 = vld [vmem:[%s0 + $0x24] sm:$0xf]
      %v524 = vld [vmem:[%s0 + $0x28] sm:$0xf]
      %v525 = vld [vmem:[%s0 + $0x2c] sm:$0xf]
      %v526 = vld [vmem:[%s0 + $0x30] sm:$0xf]
      %v527 = vld [vmem:[%s0 + $0x34] sm:$0xf]
      %v528 = vld [vmem:[%s0 + $0x38] sm:$0xf]
      %v529 = vld [vmem:[%s0 + $0x3c] sm:$0xf]
      %v530 = vld [vmem:[%s0 + $0x40] sm:$0xf]
      %v531 = vld [vmem:[%s0 + $0x44] sm:$0xf]
      %v532 = vld [vmem:[%s0 + $0x48] sm:$0xf]
      %v533 = vld [vmem:[%s0 + $0x4c] sm:$0xf]
      %v534 = vld [vmem:[%s0 + $0x50] sm:$0xf]
      %v535 = vld [vmem:[%s0 + $0x54] sm:$0xf]
      %v536 = vld [vmem:[%s0 + $0x58] sm:$0xf]
      %v537 = vld [vmem:[%s0 + $0x5c] sm:$0xf]
      %v538 = vld [vmem:[%s0 + $0x60] sm:$0xf]
      %v539 = vld [vmem:[%s0 + $0x64] sm:$0xf]
      %v540 = vld [vmem:[%s0 + $0x68] sm:$0xf]
      %v541 = vld [vmem:[%s0 + $0x6c] sm:$0xf]
      %v542 = vld [vmem:[%s0 + $0x70] sm:$0xf]
      %v543 = vld [vmem:[%s0 + $0x74] sm:$0xf]
      %v544 = vld [vmem:[%s0 + $0x78] sm:$0xf]
      %v545 = vld [vmem:[%s0 + $0x7c] sm:$0xf]
      %v546 = vld [vmem:[%s5] sm:$0xf]
      %v547 = vld [vmem:[%s5 + $0x4] sm:$0xf]
      %v548 = vld [vmem:[%s5 + $0x8] sm:$0xf]
      %v549 = vld [vmem:[%s5 + $0xc] sm:$0xf]
      %v550 = vld [vmem:[%s5 + $0x10] sm:$0xf]
      %v551 = vld [vmem:[%s5 + $0x14] sm:$0xf]
      %v552 = vld [vmem:[%s5 + $0x18] sm:$0xf]
      %v553 = vld [vmem:[%s5 + $0x1c] sm:$0xf]
      %v554 = vld [vmem:[%s5 + $0x20] sm:$0xf]
      %v555 = vld [vmem:[%s5 + $0x24] sm:$0xf]
      %v556 = vld [vmem:[%s5 + $0x28] sm:$0xf]
      %v557 = vld [vmem:[%s5 + $0x2c] sm:$0xf]
      %v558 = vld [vmem:[%s5 + $0x30] sm:$0xf]
      %v559 = vld [vmem:[%s5 + $0x34] sm:$0xf]
      %v560 = vld [vmem:[%s5 + $0x38] sm:$0xf]
      %v561 = vld [vmem:[%s5 + $0x3c] sm:$0xf]
      %v594 = vunpack.c.l.b16 %v514
      %v595 = vunpack.c.l.b16 %v515
      %v596 = vunpack.c.l.b16 %v516
      %v597 = vunpack.c.l.b16 %v517
      %v598 = vunpack.c.l.b16 %v518
      %v599 = vunpack.c.l.b16 %v519
      %v600 = vunpack.c.l.b16 %v520
      %v601 = vunpack.c.l.b16 %v521
      %v602 = vunpack.c.l.b16 %v522
      %v603 = vunpack.c.l.b16 %v523
      %v604 = vunpack.c.l.b16 %v524
      %v605 = vunpack.c.l.b16 %v525
      %v606 = vunpack.c.l.b16 %v526
      %v607 = vunpack.c.l.b16 %v527
      %v608 = vunpack.c.l.b16 %v528
      %v609 = vunpack.c.l.b16 %v529
      %v610 = vunpack.c.l.b16 %v530
      %v611 = vunpack.c.l.b16 %v531
      %v612 = vunpack.c.l.b16 %v532
      %v613 = vunpack.c.l.b16 %v533
      %v614 = vunpack.c.l.b16 %v534
      %v615 = vunpack.c.l.b16 %v535
      %v616 = vunpack.c.l.b16 %v536
      %v617 = vunpack.c.l.b16 %v537
      %v618 = vunpack.c.l.b16 %v538
      %v619 = vunpack.c.l.b16 %v539
      %v620 = vunpack.c.l.b16 %v540
      %v621 = vunpack.c.l.b16 %v541
      %v622 = vunpack.c.l.b16 %v542
      %v623 = vunpack.c.l.b16 %v543
      %v624 = vunpack.c.l.b16 %v544
      %v625 = vunpack.c.l.b16 %v545
      %v626 = vpack.c.b16 %v595, %v594
      %v627 = vpack.c.b16 %v597, %v596
      %v628 = vpack.c.b16 %v599, %v598
      %v629 = vpack.c.b16 %v601, %v600
      %v630 = vpack.c.b16 %v603, %v602
      %v631 = vpack.c.b16 %v605, %v604
      %v632 = vpack.c.b16 %v607, %v606
      %v633 = vpack.c.b16 %v609, %v608
      %v634 = vpack.c.b16 %v611, %v610
      %v635 = vpack.c.b16 %v613, %v612
      %v636 = vpack.c.b16 %v615, %v614
      %v637 = vpack.c.b16 %v617, %v616
      %v638 = vpack.c.b16 %v619, %v618
      %v639 = vpack.c.b16 %v621, %v620
      %v640 = vpack.c.b16 %v623, %v622
      %v641 = vpack.c.b16 %v625, %v624
      %v674 = vunpack.c.l.b16 %v546
      %v675 = vunpack.c.l.b16 %v547
      %v676 = vunpack.c.l.b16 %v548
      %v677 = vunpack.c.l.b16 %v549
      %v678 = vunpack.c.l.b16 %v550
      %v679 = vunpack.c.l.b16 %v551
      %v680 = vunpack.c.l.b16 %v552
      %v681 = vunpack.c.l.b16 %v553
      %v682 = vunpack.c.l.b16 %v554
      %v683 = vunpack.c.l.b16 %v555
      %v684 = vunpack.c.l.b16 %v556
      %v685 = vunpack.c.l.b16 %v557
      %v686 = vunpack.c.l.b16 %v558
      %v687 = vunpack.c.l.b16 %v559
      %v688 = vunpack.c.l.b16 %v560
      %v689 = vunpack.c.l.b16 %v561
      %v690 = vpack.c.b16 %v675, %v674
      %v691 = vpack.c.b16 %v677, %v676
      %v692 = vpack.c.b16 %v679, %v678
      %v693 = vpack.c.b16 %v681, %v680
      %v694 = vpack.c.b16 %v683, %v682
      %v695 = vpack.c.b16 %v685, %v684
      %v696 = vpack.c.b16 %v687, %v686
      %v697 = vpack.c.b16 %v689, %v688
      %706 = vmatprep.subr.bf16.mxu0 0
      %707 = vmatpush1.bf16.msra.mxu0 %v690
      %708 = vmatprep.subr.bf16.mxu0 0
      %709 = vmatpush1.bf16.msra.mxu0 %v691
      %710 = vmatprep.subr.bf16.mxu0 0
      %711 = vmatpush1.bf16.msra.mxu0 %v692
      %712 = vmatprep.subr.bf16.mxu0 0
      %713 = vmatpush1.bf16.msra.mxu0 %v693
      %714 = vmatprep.subr.bf16.mxu0 0
      %715 = vmatpush1.bf16.msra.mxu0 %v694
      %716 = vmatprep.subr.bf16.mxu0 0
      %717 = vmatpush1.bf16.msra.mxu0 %v695
      %718 = vmatprep.subr.bf16.mxu0 0
      %719 = vmatpush1.bf16.msra.mxu0 %v696
      %720 = vmatprep.subr.bf16.mxu0 0
      %721 = vmatpush1.bf16.msra.mxu0 %v697
      %722 = vmatprep.subr.bf16.mxu0 0
      %723 = vmatpush1.bf16.msra.mxu0 0
      %724 = vmatprep.subr.bf16.mxu0 0
      %725 = vmatpush1.bf16.msra.mxu0 0
      %726 = vmatprep.subr.bf16.mxu0 0
      %727 = vmatpush1.bf16.msra.mxu0 0
      %728 = vmatprep.subr.bf16.mxu0 0
      %729 = vmatpush1.bf16.msra.mxu0 0
      %730 = vmatprep.subr.bf16.mxu0 0
      %731 = vmatpush1.bf16.msra.mxu0 0
      %732 = vmatprep.subr.bf16.mxu0 0
      %733 = vmatpush1.bf16.msra.mxu0 0
      %734 = vmatprep.subr.bf16.mxu0 0
      %735 = vmatpush1.bf16.msra.mxu0 0
      %736 = vmatprep.subr.bf16.mxu0 0
      %737 = vmatpush1.bf16.msra.mxu0 0
      %738 = vmatprep.mubr.bf16.mxu0 0
      %739 = vmatmul.mubr.bf16.gmra.mrb[0].mxu0 %v626
      %v740 = vpop.f32.mrb[0].mxu0
      %v741 = vadd.f32 %v501, %v740
      %v742 = vpop.f32.mrb[0].mxu0
      %v743 = vpop.f32.mrb[0].mxu0
      %v744 = vadd.f32 %v501, %v743
      %v745 = vpop.f32.mrb[0].mxu0
      %746 = vmatprep.mubr.bf16.mxu0 0
      %747 = vmatmul.mubr.bf16.gmra.mrb[0].mxu0 %v627
      %v748 = vpop.f32.mrb[0].mxu0
      %v749 = vadd.f32 %v501, %v748
      %v750 = vpop.f32.mrb[0].mxu0
      %v751 = vpop.f32.mrb[0].mxu0
      %v752 = vadd.f32 %v501, %v751
      %v753 = vpop.f32.mrb[0].mxu0
      %754 = vmatprep.mubr.bf16.mxu0 0
      %755 = vmatmul.mubr.bf16.gmra.mrb[0].mxu0 %v628
      %v756 = vpop.f32.mrb[0].mxu0
      %v757 = vadd.f32 %v501, %v756
      %v758 = vpop.f32.mrb[0].mxu0
      %v759 = vpop.f32.mrb[0].mxu0
      %v760 = vadd.f32 %v501, %v759
      %v761 = vpop.f32.mrb[0].mxu0
      %762 = vmatprep.mubr.bf16.mxu0 0
      %763 = vmatmul.mubr.bf16.gmra.mrb[0].mxu0 %v629
      %v764 = vpop.f32.mrb[0].mxu0
      %v765 = vadd.f32 %v501, %v764
      %v766 = vpop.f32.mrb[0].mxu0
      %v767 = vpop.f32.mrb[0].mxu0
      %v768 = vadd.f32 %v501, %v767
      %v769 = vpop.f32.mrb[0].mxu0
      %770 = vmatprep.mubr.bf16.mxu0 0
      %771 = vmatmul.mubr.bf16.gmra.mrb[0].mxu0 %v630
      %v772 = vpop.f32.mrb[0].mxu0
      %v773 = vadd.f32 %v501, %v772
      %v774 = vpop.f32.mrb[0].mxu0
      %v775 = vpop.f32.mrb[0].mxu0
      %v776 = vadd.f32 %v501, %v775
      %v777 = vpop.f32.mrb[0].mxu0
      %778 = vmatprep.mubr.bf16.mxu0 0
      %779 = vmatmul.mubr.bf16.gmra.mrb[0].mxu0 %v631
      %v780 = vpop.f32.mrb[0].mxu0
      %v781 = vadd.f32 %v501, %v780
      %v782 = vpop.f32.mrb[0].mxu0
      %v783 = vpop.f32.mrb[0].mxu0
      %v784 = vadd.f32 %v501, %v783
      %v785 = vpop.f32.mrb[0].mxu0
      %786 = vmatprep.mubr.bf16.mxu0 0
      %787 = vmatmul.mubr.bf16.gmra.mrb[0].mxu0 %v632
      %v788 = vpop.f32.mrb[0].mxu0
      %v789 = vadd.f32 %v501, %v788
      %v790 = vpop.f32.mrb[0].mxu0
      %v791 = vpop.f32.mrb[0].mxu0
      %v792 = vadd.f32 %v501, %v791
      %v793 = vpop.f32.mrb[0].mxu0
      %794 = vmatprep.mubr.bf16.mxu0 0
      %795 = vmatmul.mubr.bf16.gmra.mrb[0].mxu0 %v633
      %v796 = vpop.f32.mrb[0].mxu0
      %v797 = vadd.f32 %v501, %v796
      %v798 = vpop.f32.mrb[0].mxu0
      %v799 = vpop.f32.mrb[0].mxu0
      %v800 = vadd.f32 %v501, %v799
      %v801 = vpop.f32.mrb[0].mxu0
      %802 = vmatprep.mubr.bf16.mxu0 0
      %803 = vmatmul.mubr.bf16.gmra.mrb[0].mxu0 %v634
      %v804 = vpop.f32.mrb[0].mxu0
      %v805 = vadd.f32 %v501, %v804
      %v806 = vpop.f32.mrb[0].mxu0
      %v807 = vpop.f32.mrb[0].mxu0
      %v808 = vadd.f32 %v501, %v807
      %v809 = vpop.f32.mrb[0].mxu0
      %810 = vmatprep.mubr.bf16.mxu0 0
      %811 = vmatmul.mubr.bf16.gmra.mrb[0].mxu0 %v635
      %v812 = vpop.f32.mrb[0].mxu0
      %v813 = vadd.f32 %v501, %v812
      %v814 = vpop.f32.mrb[0].mxu0
      %v815 = vpop.f32.mrb[0].mxu0
      %v816 = vadd.f32 %v501, %v815
      %v817 = vpop.f32.mrb[0].mxu0
      %818 = vmatprep.mubr.bf16.mxu0 0
      %819 = vmatmul.mubr.bf16.gmra.mrb[0].mxu0 %v636
      %v820 = vpop.f32.mrb[0].mxu0
      %v821 = vadd.f32 %v501, %v820
      %v822 = vpop.f32.mrb[0].mxu0
      %v823 = vpop.f32.mrb[0].mxu0
      %v824 = vadd.f32 %v501, %v823
      %v825 = vpop.f32.mrb[0].mxu0
      %826 = vmatprep.mubr.bf16.mxu0 0
      %827 = vmatmul.mubr.bf16.gmra.mrb[0].mxu0 %v637
      %v828 = vpop.f32.mrb[0].mxu0
      %v829 = vadd.f32 %v501, %v828
      %v830 = vpop.f32.mrb[0].mxu0
      %v831 = vpop.f32.mrb[0].mxu0
      %v832 = vadd.f32 %v501, %v831
      %v833 = vpop.f32.mrb[0].mxu0
      %834 = vmatprep.mubr.bf16.mxu0 0
      %835 = vmatmul.mubr.bf16.gmra.mrb[0].mxu0 %v638
      %v836 = vpop.f32.mrb[0].mxu0
      %v837 = vadd.f32 %v501, %v836
      %v838 = vpop.f32.mrb[0].mxu0
      %v839 = vpop.f32.mrb[0].mxu0
      %v840 = vadd.f32 %v501, %v839
      %v841 = vpop.f32.mrb[0].mxu0
      %842 = vmatprep.mubr.bf16.mxu0 0
      %843 = vmatmul.mubr.bf16.gmra.mrb[0].mxu0 %v639
      %v844 = vpop.f32.mrb[0].mxu0
      %v845 = vadd.f32 %v501, %v844
      %v846 = vpop.f32.mrb[0].mxu0
      %v847 = vpop.f32.mrb[0].mxu0
      %v848 = vadd.f32 %v501, %v847
      %v849 = vpop.f32.mrb[0].mxu0
      %850 = vmatprep.mubr.bf16.mxu0 0
      %851 = vmatmul.mubr.bf16.gmra.mrb[0].mxu0 %v640
      %v852 = vpop.f32.mrb[0].mxu0
      %v853 = vadd.f32 %v501, %v852
      %v854 = vpop.f32.mrb[0].mxu0
      %v855 = vpop.f32.mrb[0].mxu0
      %v856 = vadd.f32 %v501, %v855
      %v857 = vpop.f32.mrb[0].mxu0
      %858 = vmatprep.mubr.bf16.mxu0 0
      %859 = vmatmul.mubr.bf16.gmra.mrb[0].mxu0 %v641
      %v860 = vpop.f32.mrb[0].mxu0
      %v861 = vadd.f32 %v501, %v860
      %v862 = vpop.f32.mrb[0].mxu0
      %v863 = vpop.f32.mrb[0].mxu0
      %v864 = vadd.f32 %v501, %v863
      %v865 = vpop.f32.mrb[0].mxu0
      %866 = vdwg.mxu0
      %v867 = vxor.u32 %v741, 2147483648
      %v868 = vxor.u32 %v744, 2147483648
      %v869 = vxor.u32 %v749, 2147483648
      %v870 = vxor.u32 %v752, 2147483648
      %v871 = vxor.u32 %v757, 2147483648
      %v872 = vxor.u32 %v760, 2147483648
      %v873 = vxor.u32 %v765, 2147483648
      %v874 = vxor.u32 %v768, 2147483648
      %v875 = vxor.u32 %v773, 2147483648
      %v876 = vxor.u32 %v776, 2147483648
      %v877 = vxor.u32 %v781, 2147483648
      %v878 = vxor.u32 %v784, 2147483648
      %v879 = vxor.u32 %v789, 2147483648
      %v880 = vxor.u32 %v792, 2147483648
      %v881 = vxor.u32 %v797, 2147483648
      %v882 = vxor.u32 %v800, 2147483648
      %v883 = vxor.u32 %v805, 2147483648
      %v884 = vxor.u32 %v808, 2147483648
      %v885 = vxor.u32 %v813, 2147483648
      %v886 = vxor.u32 %v816, 2147483648
      %v887 = vxor.u32 %v821, 2147483648
      %v888 = vxor.u32 %v824, 2147483648
      %v889 = vxor.u32 %v829, 2147483648
      %v890 = vxor.u32 %v832, 2147483648
      %v891 = vxor.u32 %v837, 2147483648
      %v892 = vxor.u32 %v840, 2147483648
      %v893 = vxor.u32 %v845, 2147483648
      %v894 = vxor.u32 %v848, 2147483648
      %v895 = vxor.u32 %v853, 2147483648
      %v896 = vxor.u32 %v856, 2147483648
      %v897 = vxor.u32 %v861, 2147483648
      %v898 = vxor.u32 %v864, 2147483648
      %v899 = vmul.f32 %v867, 1.442695
      %v900 = vpow.pop %v899
      %v901 = vmul.f32 %v868, 1.442695
      %v902 = vpow.pop %v901
      %v903 = vmul.f32 %v869, 1.442695
      %v904 = vpow.pop %v903
      %v905 = vmul.f32 %v870, 1.442695
      %v906 = vpow.pop %v905
      %v907 = vmul.f32 %v871, 1.442695
      %v908 = vpow.pop %v907
      %v909 = vmul.f32 %v872, 1.442695
      %v910 = vpow.pop %v909
      %v911 = vmul.f32 %v873, 1.442695
      %v912 = vpow.pop %v911
      %v913 = vmul.f32 %v874, 1.442695
      %v914 = vpow.pop %v913
      %v915 = vmul.f32 %v875, 1.442695
      %v916 = vpow.pop %v915
      %v917 = vmul.f32 %v876, 1.442695
      %v918 = vpow.pop %v917
      %v919 = vmul.f32 %v877, 1.442695
      %v920 = vpow.pop %v919
      %v921 = vmul.f32 %v878, 1.442695
      %v922 = vpow.pop %v921
      %v923 = vmul.f32 %v879, 1.442695
      %v924 = vpow.pop %v923
      %v925 = vmul.f32 %v880, 1.442695
      %v926 = vpow.pop %v925
      %v927 = vmul.f32 %v881, 1.442695
      %v928 = vpow.pop %v927
      %v929 = vmul.f32 %v882, 1.442695
      %v930 = vpow.pop %v929
      %v931 = vmul.f32 %v883, 1.442695
      %v932 = vpow.pop %v931
      %v933 = vmul.f32 %v884, 1.442695
      %v934 = vpow.pop %v933
      %v935 = vmul.f32 %v885, 1.442695
      %v936 = vpow.pop %v935
      %v937 = vmul.f32 %v886, 1.442695
      %v938 = vpow.pop %v937
      %v939 = vmul.f32 %v887, 1.442695
      %v940 = vpow.pop %v939
      %v941 = vmul.f32 %v888, 1.442695
      %v942 = vpow.pop %v941
      %v943 = vmul.f32 %v889, 1.442695
      %v944 = vpow.pop %v943
      %v945 = vmul.f32 %v890, 1.442695
      %v946 = vpow.pop %v945
      %v947 = vmul.f32 %v891, 1.442695
      %v948 = vpow.pop %v947
      %v949 = vmul.f32 %v892, 1.442695
      %v950 = vpow.pop %v949
      %v951 = vmul.f32 %v893, 1.442695
      %v952 = vpow.pop %v951
      %v953 = vmul.f32 %v894, 1.442695
      %v954 = vpow.pop %v953
      %v955 = vmul.f32 %v895, 1.442695
      %v956 = vpow.pop %v955
      %v957 = vmul.f32 %v896, 1.442695
      %v958 = vpow.pop %v957
      %v959 = vmul.f32 %v897, 1.442695
      %v960 = vpow.pop %v959
      %v961 = vmul.f32 %v898, 1.442695
      %v962 = vpow.pop %v961
      %v963 = vadd.f32 %v900, 1.0
      %v964 = vadd.f32 %v902, 1.0
      %v965 = vadd.f32 %v904, 1.0
      %v966 = vadd.f32 %v906, 1.0
      %v967 = vadd.f32 %v908, 1.0
      %v968 = vadd.f32 %v910, 1.0
      %v969 = vadd.f32 %v912, 1.0
      %v970 = vadd.f32 %v914, 1.0
      %v971 = vadd.f32 %v916, 1.0
      %v972 = vadd.f32 %v918, 1.0
      %v973 = vadd.f32 %v920, 1.0
      %v974 = vadd.f32 %v922, 1.0
      %v975 = vadd.f32 %v924, 1.0
      %v976 = vadd.f32 %v926, 1.0
      %v977 = vadd.f32 %v928, 1.0
      %v978 = vadd.f32 %v930, 1.0
      %v979 = vadd.f32 %v932, 1.0
      %v980 = vadd.f32 %v934, 1.0
      %v981 = vadd.f32 %v936, 1.0
      %v982 = vadd.f32 %v938, 1.0
      %v983 = vadd.f32 %v940, 1.0
      %v984 = vadd.f32 %v942, 1.0
      %v985 = vadd.f32 %v944, 1.0
      %v986 = vadd.f32 %v946, 1.0
      %v987 = vadd.f32 %v948, 1.0
      %v988 = vadd.f32 %v950, 1.0
      %v989 = vadd.f32 %v952, 1.0
      %v990 = vadd.f32 %v954, 1.0
      %v991 = vadd.f32 %v956, 1.0
      %v992 = vadd.f32 %v958, 1.0
      %v993 = vadd.f32 %v960, 1.0
      %v994 = vadd.f32 %v962, 1.0
      %v995 = vrcp.pop %v963
      %v996 = vmul.f32 1.0, %v995
      %v997 = vrcp.pop %v964
      %v998 = vmul.f32 1.0, %v997
      %v999 = vrcp.pop %v965
      %v1000 = vmul.f32 1.0, %v999
      %v1001 = vrcp.pop %v966
      %v1002 = vmul.f32 1.0, %v1001
      %v1003 = vrcp.pop %v967
      %v1004 = vmul.f32 1.0, %v1003
      %v1005 = vrcp.pop %v968
      %v1006 = vmul.f32 1.0, %v1005
      %v1007 = vrcp.pop %v969
      %v1008 = vmul.f32 1.0, %v1007
      %v1009 = vrcp.pop %v970
      %v1010 = vmul.f32 1.0, %v1009
      %v1011 = vrcp.pop %v971
      %v1012 = vmul.f32 1.0, %v1011
      %v1013 = vrcp.pop %v972
      %v1014 = vmul.f32 1.0, %v1013
      %v1015 = vrcp.pop %v973
      %v1016 = vmul.f32 1.0, %v1015
      %v1017 = vrcp.pop %v974
      %v1018 = vmul.f32 1.0, %v1017
      %v1019 = vrcp.pop %v975
      %v1020 = vmul.f32 1.0, %v1019
      %v1021 = vrcp.pop %v976
      %v1022 = vmul.f32 1.0, %v1021
      %v1023 = vrcp.pop %v977
      %v1024 = vmul.f32 1.0, %v1023
      %v1025 = vrcp.pop %v978
      %v1026 = vmul.f32 1.0, %v1025
      %v1027 = vrcp.pop %v979
      %v1028 = vmul.f32 1.0, %v1027
      %v1029 = vrcp.pop %v980
      %v1030 = vmul.f32 1.0, %v1029
      %v1031 = vrcp.pop %v981
      %v1032 = vmul.f32 1.0, %v1031
      %v1033 = vrcp.pop %v982
      %v1034 = vmul.f32 1.0, %v1033
      %v1035 = vrcp.pop %v983
      %v1036 = vmul.f32 1.0, %v1035
      %v1037 = vrcp.pop %v984
      %v1038 = vmul.f32 1.0, %v1037
      %v1039 = vrcp.pop %v985
      %v1040 = vmul.f32 1.0, %v1039
      %v1041 = vrcp.pop %v986
      %v1042 = vmul.f32 1.0, %v1041
      %v1043 = vrcp.pop %v987
      %v1044 = vmul.f32 1.0, %v1043
      %v1045 = vrcp.pop %v988
      %v1046 = vmul.f32 1.0, %v1045
      %v1047 = vrcp.pop %v989
      %v1048 = vmul.f32 1.0, %v1047
      %v1049 = vrcp.pop %v990
      %v1050 = vmul.f32 1.0, %v1049
      %v1051 = vrcp.pop %v991
      %v1052 = vmul.f32 1.0, %v1051
      %v1053 = vrcp.pop %v992
      %v1054 = vmul.f32 1.0, %v1053
      %v1055 = vrcp.pop %v993
      %v1056 = vmul.f32 1.0, %v1055
      %v1057 = vrcp.pop %v994
      %v1058 = vmul.f32 1.0, %v1057
      %v1059 = vmul.f32 %v741, %v996
      %v1060 = vmul.f32 %v744, %v998
      %v1061 = vmul.f32 %v749, %v1000
      %v1062 = vmul.f32 %v752, %v1002
      %v1063 = vmul.f32 %v757, %v1004
      %v1064 = vmul.f32 %v760, %v1006
      %v1065 = vmul.f32 %v765, %v1008
      %v1066 = vmul.f32 %v768, %v1010
      %v1067 = vmul.f32 %v773, %v1012
      %v1068 = vmul.f32 %v776, %v1014
      %v1069 = vmul.f32 %v781, %v1016
      %v1070 = vmul.f32 %v784, %v1018
      %v1071 = vmul.f32 %v789, %v1020
      %v1072 = vmul.f32 %v792, %v1022
      %v1073 = vmul.f32 %v797, %v1024
      %v1074 = vmul.f32 %v800, %v1026
      %v1075 = vmul.f32 %v805, %v1028
      %v1076 = vmul.f32 %v808, %v1030
      %v1077 = vmul.f32 %v813, %v1032
      %v1078 = vmul.f32 %v816, %v1034
      %v1079 = vmul.f32 %v821, %v1036
      %v1080 = vmul.f32 %v824, %v1038
      %v1081 = vmul.f32 %v829, %v1040
      %v1082 = vmul.f32 %v832, %v1042
      %v1083 = vmul.f32 %v837, %v1044
      %v1084 = vmul.f32 %v840, %v1046
      %v1085 = vmul.f32 %v845, %v1048
      %v1086 = vmul.f32 %v848, %v1050
      %v1087 = vmul.f32 %v853, %v1052
      %v1088 = vmul.f32 %v856, %v1054
      %v1089 = vmul.f32 %v861, %v1056
      %v1090 = vmul.f32 %v864, %v1058
      %v1091 = vpack.c.bf16 %v1060, %v1059
      %v1092 = vpack.c.bf16 %v1062, %v1061
      %v1093 = vpack.c.bf16 %v1064, %v1063
      %v1094 = vpack.c.bf16 %v1066, %v1065
      %v1095 = vpack.c.bf16 %v1068, %v1067
      %v1096 = vpack.c.bf16 %v1070, %v1069
      %v1097 = vpack.c.bf16 %v1072, %v1071
      %v1098 = vpack.c.bf16 %v1074, %v1073
      %v1099 = vpack.c.bf16 %v1076, %v1075
      %v1100 = vpack.c.bf16 %v1078, %v1077
      %v1101 = vpack.c.bf16 %v1080, %v1079
      %v1102 = vpack.c.bf16 %v1082, %v1081
      %v1103 = vpack.c.bf16 %v1084, %v1083
      %v1104 = vpack.c.bf16 %v1086, %v1085
      %v1105 = vpack.c.bf16 %v1088, %v1087
      %v1106 = vpack.c.bf16 %v1090, %v1089
      %s1107 = scalar_lea.vmem %s5, 64
      %v1108 = vld [vmem:[%s1107] sm:$0xf]
      %v1109 = vld [vmem:[%s1107 + $0x4] sm:$0xf]
      %v1110 = vld [vmem:[%s1107 + $0x8] sm:$0xf]
      %v1111 = vld [vmem:[%s1107 + $0xc] sm:$0xf]
      %v1112 = vld [vmem:[%s1107 + $0x10] sm:$0xf]
      %v1113 = vld [vmem:[%s1107 + $0x14] sm:$0xf]
      %v1114 = vld [vmem:[%s1107 + $0x18] sm:$0xf]
      %v1115 = vld [vmem:[%s1107 + $0x1c] sm:$0xf]
      %v1116 = vld [vmem:[%s1107 + $0x20] sm:$0xf]
      %v1117 = vld [vmem:[%s1107 + $0x24] sm:$0xf]
      %v1118 = vld [vmem:[%s1107 + $0x28] sm:$0xf]
      %v1119 = vld [vmem:[%s1107 + $0x2c] sm:$0xf]
      %v1120 = vld [vmem:[%s1107 + $0x30] sm:$0xf]
      %v1121 = vld [vmem:[%s1107 + $0x34] sm:$0xf]
      %v1122 = vld [vmem:[%s1107 + $0x38] sm:$0xf]
      %v1123 = vld [vmem:[%s1107 + $0x3c] sm:$0xf]
      %v1140 = vunpack.c.l.b16 %v1108
      %v1141 = vunpack.c.l.b16 %v1109
      %v1142 = vunpack.c.l.b16 %v1110
      %v1143 = vunpack.c.l.b16 %v1111
      %v1144 = vunpack.c.l.b16 %v1112
      %v1145 = vunpack.c.l.b16 %v1113
      %v1146 = vunpack.c.l.b16 %v1114
      %v1147 = vunpack.c.l.b16 %v1115
      %v1148 = vunpack.c.l.b16 %v1116
      %v1149 = vunpack.c.l.b16 %v1117
      %v1150 = vunpack.c.l.b16 %v1118
      %v1151 = vunpack.c.l.b16 %v1119
      %v1152 = vunpack.c.l.b16 %v1120
      %v1153 = vunpack.c.l.b16 %v1121
      %v1154 = vunpack.c.l.b16 %v1122
      %v1155 = vunpack.c.l.b16 %v1123
      %v1156 = vpack.c.b16 %v1141, %v1140
      %v1157 = vpack.c.b16 %v1143, %v1142
      %v1158 = vpack.c.b16 %v1145, %v1144
      %v1159 = vpack.c.b16 %v1147, %v1146
      %v1160 = vpack.c.b16 %v1149, %v1148
      %v1161 = vpack.c.b16 %v1151, %v1150
      %v1162 = vpack.c.b16 %v1153, %v1152
      %v1163 = vpack.c.b16 %v1155, %v1154
      %1172 = vmatprep.subr.bf16.mxu0 0
      %1173 = vmatpush1.bf16.msra.mxu0 %v1156
      %1174 = vmatprep.subr.bf16.mxu0 0
      %1175 = vmatpush1.bf16.msra.mxu0 %v1157
      %1176 = vmatprep.subr.bf16.mxu0 0
      %1177 = vmatpush1.bf16.msra.mxu0 %v1158
      %1178 = vmatprep.subr.bf16.mxu0 0
      %1179 = vmatpush1.bf16.msra.mxu0 %v1159
      %1180 = vmatprep.subr.bf16.mxu0 0
      %1181 = vmatpush1.bf16.msra.mxu0 %v1160
      %1182 = vmatprep.subr.bf16.mxu0 0
      %1183 = vmatpush1.bf16.msra.mxu0 %v1161
      %1184 = vmatprep.subr.bf16.mxu0 0
      %1185 = vmatpush1.bf16.msra.mxu0 %v1162
      %1186 = vmatprep.subr.bf16.mxu0 0
      %1187 = vmatpush1.bf16.msra.mxu0 %v1163
      %1188 = vmatprep.subr.bf16.mxu0 0
      %1189 = vmatpush1.bf16.msra.mxu0 0
      %1190 = vmatprep.subr.bf16.mxu0 0
      %1191 = vmatpush1.bf16.msra.mxu0 0
      %1192 = vmatprep.subr.bf16.mxu0 0
      %1193 = vmatpush1.bf16.msra.mxu0 0
      %1194 = vmatprep.subr.bf16.mxu0 0
      %1195 = vmatpush1.bf16.msra.mxu0 0
      %1196 = vmatprep.subr.bf16.mxu0 0
      %1197 = vmatpush1.bf16.msra.mxu0 0
      %1198 = vmatprep.subr.bf16.mxu0 0
      %1199 = vmatpush1.bf16.msra.mxu0 0
      %1200 = vmatprep.subr.bf16.mxu0 0
      %1201 = vmatpush1.bf16.msra.mxu0 0
      %1202 = vmatprep.subr.bf16.mxu0 0
      %1203 = vmatpush1.bf16.msra.mxu0 0
      %1204 = vmatprep.mubr.bf16.mxu0 0
      %1205 = vmatmul.mubr.bf16.gmra.mrb[0].mxu0 %v1091
      %v1206 = vpop.f32.mrb[0].mxu0
      %v1207 = vadd.f32 %v502, %v1206
      %v1208 = vpop.f32.mrb[0].mxu0
      %v1209 = vpop.f32.mrb[0].mxu0
      %v1210 = vadd.f32 %v502, %v1209
      %v1211 = vpop.f32.mrb[0].mxu0
      %1212 = vmatprep.mubr.bf16.mxu0 0
      %1213 = vmatmul.mubr.bf16.gmra.mrb[0].mxu0 %v1092
      %v1214 = vpop.f32.mrb[0].mxu0
      %v1215 = vadd.f32 %v502, %v1214
      %v1216 = vpop.f32.mrb[0].mxu0
      %v1217 = vpop.f32.mrb[0].mxu0
      %v1218 = vadd.f32 %v502, %v1217
      %v1219 = vpop.f32.mrb[0].mxu0
      %1220 = vmatprep.mubr.bf16.mxu0 0
      %1221 = vmatmul.mubr.bf16.gmra.mrb[0].mxu0 %v1093
      %v1222 = vpop.f32.mrb[0].mxu0
      %v1223 = vadd.f32 %v502, %v1222
      %v1224 = vpop.f32.mrb[0].mxu0
      %v1225 = vpop.f32.mrb[0].mxu0
      %v1226 = vadd.f32 %v502, %v1225
      %v1227 = vpop.f32.mrb[0].mxu0
      %1228 = vmatprep.mubr.bf16.mxu0 0
      %1229 = vmatmul.mubr.bf16.gmra.mrb[0].mxu0 %v1094
      %v1230 = vpop.f32.mrb[0].mxu0
      %v1231 = vadd.f32 %v502, %v1230
      %v1232 = vpop.f32.mrb[0].mxu0
      %v1233 = vpop.f32.mrb[0].mxu0
      %v1234 = vadd.f32 %v502, %v1233
      %v1235 = vpop.f32.mrb[0].mxu0
      %1236 = vmatprep.mubr.bf16.mxu0 0
      %1237 = vmatmul.mubr.bf16.gmra.mrb[0].mxu0 %v1095
      %v1238 = vpop.f32.mrb[0].mxu0
      %v1239 = vadd.f32 %v502, %v1238
      %v1240 = vpop.f32.mrb[0].mxu0
      %v1241 = vpop.f32.mrb[0].mxu0
      %v1242 = vadd.f32 %v502, %v1241
      %v1243 = vpop.f32.mrb[0].mxu0
      %1244 = vmatprep.mubr.bf16.mxu0 0
      %1245 = vmatmul.mubr.bf16.gmra.mrb[0].mxu0 %v1096
      %v1246 = vpop.f32.mrb[0].mxu0
      %v1247 = vadd.f32 %v502, %v1246
      %v1248 = vpop.f32.mrb[0].mxu0
      %v1249 = vpop.f32.mrb[0].mxu0
      %v1250 = vadd.f32 %v502, %v1249
      %v1251 = vpop.f32.mrb[0].mxu0
      %1252 = vmatprep.mubr.bf16.mxu0 0
      %1253 = vmatmul.mubr.bf16.gmra.mrb[0].mxu0 %v1097
      %v1254 = vpop.f32.mrb[0].mxu0
      %v1255 = vadd.f32 %v502, %v1254
      %v1256 = vpop.f32.mrb[0].mxu0
      %v1257 = vpop.f32.mrb[0].mxu0
      %v1258 = vadd.f32 %v502, %v1257
      %v1259 = vpop.f32.mrb[0].mxu0
      %1260 = vmatprep.mubr.bf16.mxu0 0
      %1261 = vmatmul.mubr.bf16.gmra.mrb[0].mxu0 %v1098
      %v1262 = vpop.f32.mrb[0].mxu0
      %v1263 = vadd.f32 %v502, %v1262
      %v1264 = vpop.f32.mrb[0].mxu0
      %v1265 = vpop.f32.mrb[0].mxu0
      %v1266 = vadd.f32 %v502, %v1265
      %v1267 = vpop.f32.mrb[0].mxu0
      %1268 = vmatprep.mubr.bf16.mxu0 0
      %1269 = vmatmul.mubr.bf16.gmra.mrb[0].mxu0 %v1099
      %v1270 = vpop.f32.mrb[0].mxu0
      %v1271 = vadd.f32 %v502, %v1270
      %v1272 = vpop.f32.mrb[0].mxu0
      %v1273 = vpop.f32.mrb[0].mxu0
      %v1274 = vadd.f32 %v502, %v1273
      %v1275 = vpop.f32.mrb[0].mxu0
      %1276 = vmatprep.mubr.bf16.mxu0 0
      %1277 = vmatmul.mubr.bf16.gmra.mrb[0].mxu0 %v1100
      %v1278 = vpop.f32.mrb[0].mxu0
      %v1279 = vadd.f32 %v502, %v1278
      %v1280 = vpop.f32.mrb[0].mxu0
      %v1281 = vpop.f32.mrb[0].mxu0
      %v1282 = vadd.f32 %v502, %v1281
      %v1283 = vpop.f32.mrb[0].mxu0
      %1284 = vmatprep.mubr.bf16.mxu0 0
      %1285 = vmatmul.mubr.bf16.gmra.mrb[0].mxu0 %v1101
      %v1286 = vpop.f32.mrb[0].mxu0
      %v1287 = vadd.f32 %v502, %v1286
      %v1288 = vpop.f32.mrb[0].mxu0
      %v1289 = vpop.f32.mrb[0].mxu0
      %v1290 = vadd.f32 %v502, %v1289
      %v1291 = vpop.f32.mrb[0].mxu0
      %1292 = vmatprep.mubr.bf16.mxu0 0
      %1293 = vmatmul.mubr.bf16.gmra.mrb[0].mxu0 %v1102
      %v1294 = vpop.f32.mrb[0].mxu0
      %v1295 = vadd.f32 %v502, %v1294
      %v1296 = vpop.f32.mrb[0].mxu0
      %v1297 = vpop.f32.mrb[0].mxu0
      %v1298 = vadd.f32 %v502, %v1297
      %v1299 = vpop.f32.mrb[0].mxu0
      %1300 = vmatprep.mubr.bf16.mxu0 0
      %1301 = vmatmul.mubr.bf16.gmra.mrb[0].mxu0 %v1103
      %v1302 = vpop.f32.mrb[0].mxu0
      %v1303 = vadd.f32 %v502, %v1302
      %v1304 = vpop.f32.mrb[0].mxu0
      %v1305 = vpop.f32.mrb[0].mxu0
      %v1306 = vadd.f32 %v502, %v1305
      %v1307 = vpop.f32.mrb[0].mxu0
      %1308 = vmatprep.mubr.bf16.mxu0 0
      %1309 = vmatmul.mubr.bf16.gmra.mrb[0].mxu0 %v1104
      %v1310 = vpop.f32.mrb[0].mxu0
      %v1311 = vadd.f32 %v502, %v1310
      %v1312 = vpop.f32.mrb[0].mxu0
      %v1313 = vpop.f32.mrb[0].mxu0
      %v1314 = vadd.f32 %v502, %v1313
      %v1315 = vpop.f32.mrb[0].mxu0
      %1316 = vmatprep.mubr.bf16.mxu0 0
      %1317 = vmatmul.mubr.bf16.gmra.mrb[0].mxu0 %v1105
      %v1318 = vpop.f32.mrb[0].mxu0
      %v1319 = vadd.f32 %v502, %v1318
      %v1320 = vpop.f32.mrb[0].mxu0
      %v1321 = vpop.f32.mrb[0].mxu0
      %v1322 = vadd.f32 %v502, %v1321
      %v1323 = vpop.f32.mrb[0].mxu0
      %1324 = vmatprep.mubr.bf16.mxu0 0
      %1325 = vmatmul.mubr.bf16.gmra.mrb[0].mxu0 %v1106
      %v1326 = vpop.f32.mrb[0].mxu0
      %v1327 = vadd.f32 %v502, %v1326
      %v1328 = vpop.f32.mrb[0].mxu0
      %v1329 = vpop.f32.mrb[0].mxu0
      %v1330 = vadd.f32 %v502, %v1329
      %v1331 = vpop.f32.mrb[0].mxu0
      %1332 = vdwg.mxu0
      %v1333 = vpack.c.bf16 %v1210, %v1207
      %v1334 = vpack.c.bf16 %v1218, %v1215
      %v1335 = vpack.c.bf16 %v1226, %v1223
      %v1336 = vpack.c.bf16 %v1234, %v1231
      %v1337 = vpack.c.bf16 %v1242, %v1239
      %v1338 = vpack.c.bf16 %v1250, %v1247
      %v1339 = vpack.c.bf16 %v1258, %v1255
      %v1340 = vpack.c.bf16 %v1266, %v1263
      %v1341 = vpack.c.bf16 %v1274, %v1271
      %v1342 = vpack.c.bf16 %v1282, %v1279
      %v1343 = vpack.c.bf16 %v1290, %v1287
      %v1344 = vpack.c.bf16 %v1298, %v1295
      %v1345 = vpack.c.bf16 %v1306, %v1303
      %v1346 = vpack.c.bf16 %v1314, %v1311
      %v1347 = vpack.c.bf16 %v1322, %v1319
      %v1348 = vpack.c.bf16 %v1330, %v1327
      %v1349 = vld [vmem:[%s6] sm:$0xff]
      %v1350 = vld [vmem:[%s6 + $0x8] sm:$0xff]
      %v1351 = vld [vmem:[%s6 + $0x10] sm:$0xff]
      %v1352 = vld [vmem:[%s6 + $0x18] sm:$0xff]
      %v1353 = vld [vmem:[%s6 + $0x20] sm:$0xff]
      %v1354 = vld [vmem:[%s6 + $0x28] sm:$0xff]
      %v1355 = vld [vmem:[%s6 + $0x30] sm:$0xff]
      %v1356 = vld [vmem:[%s6 + $0x38] sm:$0xff]
      %v1357 = vld [vmem:[%s6 + $0x40] sm:$0xff]
      %v1358 = vld [vmem:[%s6 + $0x48] sm:$0xff]
      %v1359 = vld [vmem:[%s6 + $0x50] sm:$0xff]
      %v1360 = vld [vmem:[%s6 + $0x58] sm:$0xff]
      %v1361 = vld [vmem:[%s6 + $0x60] sm:$0xff]
      %v1362 = vld [vmem:[%s6 + $0x68] sm:$0xff]
      %v1363 = vld [vmem:[%s6 + $0x70] sm:$0xff]
      %v1364 = vld [vmem:[%s6 + $0x78] sm:$0xff]
      %v1366 = vlaneseq
      %v1367 = vshrl.u32 %v1366, 7
      %v1368 = vsub.s32 0, %v1367
      %v1369 = vrot.slane %v504, %v1368
      %v1370 = vlaneseq
      %v1371 = vshrl.u32 %v1370, 7
      %v1372 = vsub.s32 1, %v1371
      %v1373 = vrot.slane %v504, %v1372
      %v1392 = vunpack.c.l.b16 %v1349
      %v1393 = vunpack.c.h.b16 %v1349
      %v1394 = vunpack.c.l.b16 %v1350
      %v1395 = vunpack.c.h.b16 %v1350
      %v1396 = vunpack.c.l.b16 %v1351
      %v1397 = vunpack.c.h.b16 %v1351
      %v1398 = vunpack.c.l.b16 %v1352
      %v1399 = vunpack.c.h.b16 %v1352
      %v1400 = vunpack.c.l.b16 %v1353
      %v1401 = vunpack.c.h.b16 %v1353
      %v1402 = vunpack.c.l.b16 %v1354
      %v1403 = vunpack.c.h.b16 %v1354
      %v1404 = vunpack.c.l.b16 %v1355
      %v1405 = vunpack.c.h.b16 %v1355
      %v1406 = vunpack.c.l.b16 %v1356
      %v1407 = vunpack.c.h.b16 %v1356
      %v1408 = vunpack.c.l.b16 %v1357
      %v1409 = vunpack.c.h.b16 %v1357
      %v1410 = vunpack.c.l.b16 %v1358
      %v1411 = vunpack.c.h.b16 %v1358
      %v1412 = vunpack.c.l.b16 %v1359
      %v1413 = vunpack.c.h.b16 %v1359
      %v1414 = vunpack.c.l.b16 %v1360
      %v1415 = vunpack.c.h.b16 %v1360
      %v1416 = vunpack.c.l.b16 %v1361
      %v1417 = vunpack.c.h.b16 %v1361
      %v1418 = vunpack.c.l.b16 %v1362
      %v1419 = vunpack.c.h.b16 %v1362
      %v1420 = vunpack.c.l.b16 %v1363
      %v1421 = vunpack.c.h.b16 %v1363
      %v1422 = vunpack.c.l.b16 %v1364
      %v1423 = vunpack.c.h.b16 %v1364
      %v1424 = vpack.c.b16 %v1394, %v1392
      %v1425 = vpack.c.b16 %v1395, %v1393
      %v1426 = vpack.c.b16 %v1398, %v1396
      %v1427 = vpack.c.b16 %v1399, %v1397
      %v1428 = vpack.c.b16 %v1402, %v1400
      %v1429 = vpack.c.b16 %v1403, %v1401
      %v1430 = vpack.c.b16 %v1406, %v1404
      %v1431 = vpack.c.b16 %v1407, %v1405
      %v1432 = vpack.c.b16 %v1410, %v1408
      %v1433 = vpack.c.b16 %v1411, %v1409
      %v1434 = vpack.c.b16 %v1414, %v1412
      %v1435 = vpack.c.b16 %v1415, %v1413
      %v1436 = vpack.c.b16 %v1418, %v1416
      %v1437 = vpack.c.b16 %v1419, %v1417
      %v1438 = vpack.c.b16 %v1422, %v1420
      %v1439 = vpack.c.b16 %v1423, %v1421
      %1456 = vmatprep.subr.bf16.mxu0 %v1425
      %1457 = vmatpush1.bf16.msra.mxu0 %v1424
      %1458 = vmatprep.subr.bf16.mxu0 %v1427
      %1459 = vmatpush1.bf16.msra.mxu0 %v1426
      %1460 = vmatprep.subr.bf16.mxu0 %v1429
      %1461 = vmatpush1.bf16.msra.mxu0 %v1428
      %1462 = vmatprep.subr.bf16.mxu0 %v1431
      %1463 = vmatpush1.bf16.msra.mxu0 %v1430
      %1464 = vmatprep.subr.bf16.mxu0 %v1433
      %1465 = vmatpush1.bf16.msra.mxu0 %v1432
      %1466 = vmatprep.subr.bf16.mxu0 %v1435
      %1467 = vmatpush1.bf16.msra.mxu0 %v1434
      %1468 = vmatprep.subr.bf16.mxu0 %v1437
      %1469 = vmatpush1.bf16.msra.mxu0 %v1436
      %1470 = vmatprep.subr.bf16.mxu0 %v1439
      %1471 = vmatpush1.bf16.msra.mxu0 %v1438
      %1472 = vmatprep.subr.bf16.mxu0 0
      %1473 = vmatpush1.bf16.msra.mxu0 0
      %1474 = vmatprep.subr.bf16.mxu0 0
      %1475 = vmatpush1.bf16.msra.mxu0 0
      %1476 = vmatprep.subr.bf16.mxu0 0
      %1477 = vmatpush1.bf16.msra.mxu0 0
      %1478 = vmatprep.subr.bf16.mxu0 0
      %1479 = vmatpush1.bf16.msra.mxu0 0
      %1480 = vmatprep.subr.bf16.mxu0 0
      %1481 = vmatpush1.bf16.msra.mxu0 0
      %1482 = vmatprep.subr.bf16.mxu0 0
      %1483 = vmatpush1.bf16.msra.mxu0 0
      %1484 = vmatprep.subr.bf16.mxu0 0
      %1485 = vmatpush1.bf16.msra.mxu0 0
      %1486 = vmatprep.subr.bf16.mxu0 0
      %1487 = vmatpush1.bf16.msra.mxu0 0
      %1488 = vmatprep.mubr.bf16.mxu0 0
      %1489 = vmatmul.mubr.bf16.gmra.mrb[0].mxu0 %v1333
      %v1490 = vpop.f32.mrb[0].mxu0
      %v1491 = vadd.f32 %v1369, %v1490
      %v1492 = vpop.f32.mrb[0].mxu0
      %v1493 = vadd.f32 %v1373, %v1492
      %v1494 = vpop.f32.mrb[0].mxu0
      %v1495 = vadd.f32 %v1369, %v1494
      %v1496 = vpop.f32.mrb[0].mxu0
      %v1497 = vadd.f32 %v1373, %v1496
      %1498 = vmatprep.mubr.bf16.mxu0 0
      %1499 = vmatmul.mubr.bf16.gmra.mrb[0].mxu0 %v1334
      %v1500 = vpop.f32.mrb[0].mxu0
      %v1501 = vadd.f32 %v1369, %v1500
      %v1502 = vpop.f32.mrb[0].mxu0
      %v1503 = vadd.f32 %v1373, %v1502
      %v1504 = vpop.f32.mrb[0].mxu0
      %v1505 = vadd.f32 %v1369, %v1504
      %v1506 = vpop.f32.mrb[0].mxu0
      %v1507 = vadd.f32 %v1373, %v1506
      %1508 = vmatprep.mubr.bf16.mxu0 0
      %1509 = vmatmul.mubr.bf16.gmra.mrb[0].mxu0 %v1335
      %v1510 = vpop.f32.mrb[0].mxu0
      %v1511 = vadd.f32 %v1369, %v1510
      %v1512 = vpop.f32.mrb[0].mxu0
      %v1513 = vadd.f32 %v1373, %v1512
      %v1514 = vpop.f32.mrb[0].mxu0
      %v1515 = vadd.f32 %v1369, %v1514
      %v1516 = vpop.f32.mrb[0].mxu0
      %v1517 = vadd.f32 %v1373, %v1516
      %1518 = vmatprep.mubr.bf16.mxu0 0
      %1519 = vmatmul.mubr.bf16.gmra.mrb[0].mxu0 %v1336
      %v1520 = vpop.f32.mrb[0].mxu0
      %v1521 = vadd.f32 %v1369, %v1520
      %v1522 = vpop.f32.mrb[0].mxu0
      %v1523 = vadd.f32 %v1373, %v1522
      %v1524 = vpop.f32.mrb[0].mxu0
      %v1525 = vadd.f32 %v1369, %v1524
      %v1526 = vpop.f32.mrb[0].mxu0
      %v1527 = vadd.f32 %v1373, %v1526
      %1528 = vmatprep.mubr.bf16.mxu0 0
      %1529 = vmatmul.mubr.bf16.gmra.mrb[0].mxu0 %v1337
      %v1530 = vpop.f32.mrb[0].mxu0
      %v1531 = vadd.f32 %v1369, %v1530
      %v1532 = vpop.f32.mrb[0].mxu0
      %v1533 = vadd.f32 %v1373, %v1532
      %v1534 = vpop.f32.mrb[0].mxu0
      %v1535 = vadd.f32 %v1369, %v1534
      %v1536 = vpop.f32.mrb[0].mxu0
      %v1537 = vadd.f32 %v1373, %v1536
      %1538 = vmatprep.mubr.bf16.mxu0 0
      %1539 = vmatmul.mubr.bf16.gmra.mrb[0].mxu0 %v1338
      %v1540 = vpop.f32.mrb[0].mxu0
      %v1541 = vadd.f32 %v1369, %v1540
      %v1542 = vpop.f32.mrb[0].mxu0
      %v1543 = vadd.f32 %v1373, %v1542
      %v1544 = vpop.f32.mrb[0].mxu0
      %v1545 = vadd.f32 %v1369, %v1544
      %v1546 = vpop.f32.mrb[0].mxu0
      %v1547 = vadd.f32 %v1373, %v1546
      %1548 = vmatprep.mubr.bf16.mxu0 0
      %1549 = vmatmul.mubr.bf16.gmra.mrb[0].mxu0 %v1339
      %v1550 = vpop.f32.mrb[0].mxu0
      %v1551 = vadd.f32 %v1369, %v1550
      %v1552 = vpop.f32.mrb[0].mxu0
      %v1553 = vadd.f32 %v1373, %v1552
      %v1554 = vpop.f32.mrb[0].mxu0
      %v1555 = vadd.f32 %v1369, %v1554
      %v1556 = vpop.f32.mrb[0].mxu0
      %v1557 = vadd.f32 %v1373, %v1556
      %1558 = vmatprep.mubr.bf16.mxu0 0
      %1559 = vmatmul.mubr.bf16.gmra.mrb[0].mxu0 %v1340
      %v1560 = vpop.f32.mrb[0].mxu0
      %v1561 = vadd.f32 %v1369, %v1560
      %v1562 = vpop.f32.mrb[0].mxu0
      %v1563 = vadd.f32 %v1373, %v1562
      %v1564 = vpop.f32.mrb[0].mxu0
      %v1565 = vadd.f32 %v1369, %v1564
      %v1566 = vpop.f32.mrb[0].mxu0
      %v1567 = vadd.f32 %v1373, %v1566
      %1568 = vmatprep.mubr.bf16.mxu0 0
      %1569 = vmatmul.mubr.bf16.gmra.mrb[0].mxu0 %v1341
      %v1570 = vpop.f32.mrb[0].mxu0
      %v1571 = vadd.f32 %v1369, %v1570
      %v1572 = vpop.f32.mrb[0].mxu0
      %v1573 = vadd.f32 %v1373, %v1572
      %v1574 = vpop.f32.mrb[0].mxu0
      %v1575 = vadd.f32 %v1369, %v1574
      %v1576 = vpop.f32.mrb[0].mxu0
      %v1577 = vadd.f32 %v1373, %v1576
      %1578 = vmatprep.mubr.bf16.mxu0 0
      %1579 = vmatmul.mubr.bf16.gmra.mrb[0].mxu0 %v1342
      %v1580 = vpop.f32.mrb[0].mxu0
      %v1581 = vadd.f32 %v1369, %v1580
      %v1582 = vpop.f32.mrb[0].mxu0
      %v1583 = vadd.f32 %v1373, %v1582
      %v1584 = vpop.f32.mrb[0].mxu0
      %v1585 = vadd.f32 %v1369, %v1584
      %v1586 = vpop.f32.mrb[0].mxu0
      %v1587 = vadd.f32 %v1373, %v1586
      %1588 = vmatprep.mubr.bf16.mxu0 0
      %1589 = vmatmul.mubr.bf16.gmra.mrb[0].mxu0 %v1343
      %v1590 = vpop.f32.mrb[0].mxu0
      %v1591 = vadd.f32 %v1369, %v1590
      %v1592 = vpop.f32.mrb[0].mxu0
      %v1593 = vadd.f32 %v1373, %v1592
      %v1594 = vpop.f32.mrb[0].mxu0
      %v1595 = vadd.f32 %v1369, %v1594
      %v1596 = vpop.f32.mrb[0].mxu0
      %v1597 = vadd.f32 %v1373, %v1596
      %1598 = vmatprep.mubr.bf16.mxu0 0
      %1599 = vmatmul.mubr.bf16.gmra.mrb[0].mxu0 %v1344
      %v1600 = vpop.f32.mrb[0].mxu0
      %v1601 = vadd.f32 %v1369, %v1600
      %v1602 = vpop.f32.mrb[0].mxu0
      %v1603 = vadd.f32 %v1373, %v1602
      %v1604 = vpop.f32.mrb[0].mxu0
      %v1605 = vadd.f32 %v1369, %v1604
      %v1606 = vpop.f32.mrb[0].mxu0
      %v1607 = vadd.f32 %v1373, %v1606
      %1608 = vmatprep.mubr.bf16.mxu0 0
      %1609 = vmatmul.mubr.bf16.gmra.mrb[0].mxu0 %v1345
      %v1610 = vpop.f32.mrb[0].mxu0
      %v1611 = vadd.f32 %v1369, %v1610
      %v1612 = vpop.f32.mrb[0].mxu0
      %v1613 = vadd.f32 %v1373, %v1612
      %v1614 = vpop.f32.mrb[0].mxu0
      %v1615 = vadd.f32 %v1369, %v1614
      %v1616 = vpop.f32.mrb[0].mxu0
      %v1617 = vadd.f32 %v1373, %v1616
      %1618 = vmatprep.mubr.bf16.mxu0 0
      %1619 = vmatmul.mubr.bf16.gmra.mrb[0].mxu0 %v1346
      %v1620 = vpop.f32.mrb[0].mxu0
      %v1621 = vadd.f32 %v1369, %v1620
      %v1622 = vpop.f32.mrb[0].mxu0
      %v1623 = vadd.f32 %v1373, %v1622
      %v1624 = vpop.f32.mrb[0].mxu0
      %v1625 = vadd.f32 %v1369, %v1624
      %v1626 = vpop.f32.mrb[0].mxu0
      %v1627 = vadd.f32 %v1373, %v1626
      %1628 = vmatprep.mubr.bf16.mxu0 0
      %1629 = vmatmul.mubr.bf16.gmra.mrb[0].mxu0 %v1347
      %v1630 = vpop.f32.mrb[0].mxu0
      %v1631 = vadd.f32 %v1369, %v1630
      %v1632 = vpop.f32.mrb[0].mxu0
      %v1633 = vadd.f32 %v1373, %v1632
      %v1634 = vpop.f32.mrb[0].mxu0
      %v1635 = vadd.f32 %v1369, %v1634
      %v1636 = vpop.f32.mrb[0].mxu0
      %v1637 = vadd.f32 %v1373, %v1636
      %1638 = vmatprep.mubr.bf16.mxu0 0
      %1639 = vmatmul.mubr.bf16.gmra.mrb[0].mxu0 %v1348
      %v1640 = vpop.f32.mrb[0].mxu0
      %v1641 = vadd.f32 %v1369, %v1640
      %v1642 = vpop.f32.mrb[0].mxu0
      %v1643 = vadd.f32 %v1373, %v1642
      %v1644 = vpop.f32.mrb[0].mxu0
      %v1645 = vadd.f32 %v1369, %v1644
      %v1646 = vpop.f32.mrb[0].mxu0
      %v1647 = vadd.f32 %v1373, %v1646
      %1648 = vdwg.mxu0
      %v1649 = vpack.c.bf16 %v1495, %v1491
      %v1650 = vpack.c.bf16 %v1497, %v1493
      %v1651 = vpack.c.bf16 %v1505, %v1501
      %v1652 = vpack.c.bf16 %v1507, %v1503
      %v1653 = vpack.c.bf16 %v1515, %v1511
      %v1654 = vpack.c.bf16 %v1517, %v1513
      %v1655 = vpack.c.bf16 %v1525, %v1521
      %v1656 = vpack.c.bf16 %v1527, %v1523
      %v1657 = vpack.c.bf16 %v1535, %v1531
      %v1658 = vpack.c.bf16 %v1537, %v1533
      %v1659 = vpack.c.bf16 %v1545, %v1541
      %v1660 = vpack.c.bf16 %v1547, %v1543
      %v1661 = vpack.c.bf16 %v1555, %v1551
      %v1662 = vpack.c.bf16 %v1557, %v1553
      %v1663 = vpack.c.bf16 %v1565, %v1561
      %v1664 = vpack.c.bf16 %v1567, %v1563
      %v1665 = vpack.c.bf16 %v1575, %v1571
      %v1666 = vpack.c.bf16 %v1577, %v1573
      %v1667 = vpack.c.bf16 %v1585, %v1581
      %v1668 = vpack.c.bf16 %v1587, %v1583
      %v1669 = vpack.c.bf16 %v1595, %v1591
      %v1670 = vpack.c.bf16 %v1597, %v1593
      %v1671 = vpack.c.bf16 %v1605, %v1601
      %v1672 = vpack.c.bf16 %v1607, %v1603
      %v1673 = vpack.c.bf16 %v1615, %v1611
      %v1674 = vpack.c.bf16 %v1617, %v1613
      %v1675 = vpack.c.bf16 %v1625, %v1621
      %v1676 = vpack.c.bf16 %v1627, %v1623
      %v1677 = vpack.c.bf16 %v1635, %v1631
      %v1678 = vpack.c.bf16 %v1637, %v1633
      %v1679 = vpack.c.bf16 %v1645, %v1641
      %v1680 = vpack.c.bf16 %v1647, %v1643
      %v1681 = vld [vmem:[%s469] sm:$0xff]
      %v1682 = vld [vmem:[%s469 + $0x8] sm:$0xff]
      %v1683 = vld [vmem:[%s7] sm:$0xf]
      %v1684 = vld [vmem:[%s7 + $0x4] sm:$0xf]
      %v1685 = vld [vmem:[%s7 + $0x8] sm:$0xf]
      %v1686 = vld [vmem:[%s7 + $0xc] sm:$0xf]
      %v1687 = vld [vmem:[%s7 + $0x10] sm:$0xf]
      %v1688 = vld [vmem:[%s7 + $0x14] sm:$0xf]
      %v1689 = vld [vmem:[%s7 + $0x18] sm:$0xf]
      %v1690 = vld [vmem:[%s7 + $0x1c] sm:$0xf]
      %v1691 = vld [vmem:[%s7 + $0x20] sm:$0xf]
      %v1692 = vld [vmem:[%s7 + $0x24] sm:$0xf]
      %v1693 = vld [vmem:[%s7 + $0x28] sm:$0xf]
      %v1694 = vld [vmem:[%s7 + $0x2c] sm:$0xf]
      %v1695 = vld [vmem:[%s7 + $0x30] sm:$0xf]
      %v1696 = vld [vmem:[%s7 + $0x34] sm:$0xf]
      %v1697 = vld [vmem:[%s7 + $0x38] sm:$0xf]
      %v1698 = vld [vmem:[%s7 + $0x3c] sm:$0xf]
      %v1699 = vld [vmem:[%s7 + $0x40] sm:$0xf]
      %v1700 = vld [vmem:[%s7 + $0x44] sm:$0xf]
      %v1701 = vld [vmem:[%s7 + $0x48] sm:$0xf]
      %v1702 = vld [vmem:[%s7 + $0x4c] sm:$0xf]
      %v1703 = vld [vmem:[%s7 + $0x50] sm:$0xf]
      %v1704 = vld [vmem:[%s7 + $0x54] sm:$0xf]
      %v1705 = vld [vmem:[%s7 + $0x58] sm:$0xf]
      %v1706 = vld [vmem:[%s7 + $0x5c] sm:$0xf]
      %v1709 = vunpack.c.l.b16 %v1681
      %v1710 = vunpack.c.h.b16 %v1681
      %v1711 = vunpack.c.l.b16 %v1682
      %v1712 = vunpack.c.h.b16 %v1682
      %v1713 = vpack.c.b16 %v1711, %v1709
      %v1714 = vpack.c.b16 %v1712, %v1710
      %v1740 = vunpack.c.l.b16 %v1683
      %v1741 = vunpack.c.l.b16 %v1684
      %v1742 = vunpack.c.l.b16 %v1685
      %v1743 = vunpack.c.l.b16 %v1686
      %v1744 = vunpack.c.l.b16 %v1687
      %v1745 = vunpack.c.l.b16 %v1688
      %v1746 = vunpack.c.l.b16 %v1689
      %v1747 = vunpack.c.l.b16 %v1690
      %v1748 = vunpack.c.l.b16 %v1691
      %v1749 = vunpack.c.l.b16 %v1692
      %v1750 = vunpack.c.l.b16 %v1693
      %v1751 = vunpack.c.l.b16 %v1694
      %v1752 = vunpack.c.l.b16 %v1695
      %v1753 = vunpack.c.l.b16 %v1696
      %v1754 = vunpack.c.l.b16 %v1697
      %v1755 = vunpack.c.l.b16 %v1698
      %v1756 = vunpack.c.l.b16 %v1699
      %v1757 = vunpack.c.l.b16 %v1700
      %v1758 = vunpack.c.l.b16 %v1701
      %v1759 = vunpack.c.l.b16 %v1702
      %v1760 = vunpack.c.l.b16 %v1703
      %v1761 = vunpack.c.l.b16 %v1704
      %v1762 = vunpack.c.l.b16 %v1705
      %v1763 = vunpack.c.l.b16 %v1706
      %v1764 = vpack.c.b16 %v1741, %v1740
      %v1765 = vpack.c.b16 %v1743, %v1742
      %v1766 = vpack.c.b16 %v1745, %v1744
      %v1767 = vpack.c.b16 %v1747, %v1746
      %v1768 = vpack.c.b16 %v1749, %v1748
      %v1769 = vpack.c.b16 %v1751, %v1750
      %v1770 = vpack.c.b16 %v1753, %v1752
      %v1771 = vpack.c.b16 %v1755, %v1754
      %v1772 = vpack.c.b16 %v1757, %v1756
      %v1773 = vpack.c.b16 %v1759, %v1758
      %v1774 = vpack.c.b16 %v1761, %v1760
      %v1775 = vpack.c.b16 %v1763, %v1762
      %vm1788 = vcmask 523264
      %v1790 = vsel %vm1788, %v1714, 0
      %1792 = vmatprep.subr.bf16.mxu0 0
      %1793 = vmatpush1.bf16.msra.mxu0 %v1764
      %1794 = vmatprep.subr.bf16.mxu0 0
      %1795 = vmatpush1.bf16.msra.mxu0 %v1765
      %1796 = vmatprep.subr.bf16.mxu0 0
      %1797 = vmatpush1.bf16.msra.mxu0 %v1766
      %1798 = vmatprep.subr.bf16.mxu0 0
      %1799 = vmatpush1.bf16.msra.mxu0 %v1767
      %1800 = vmatprep.subr.bf16.mxu0 0
      %1801 = vmatpush1.bf16.msra.mxu0 %v1768
      %1802 = vmatprep.subr.bf16.mxu0 0
      %1803 = vmatpush1.bf16.msra.mxu0 %v1769
      %1804 = vmatprep.subr.bf16.mxu0 0
      %1805 = vmatpush1.bf16.msra.mxu0 %v1770
      %1806 = vmatprep.subr.bf16.mxu0 0
      %1807 = vmatpush1.bf16.msra.mxu0 %v1771
      %1808 = vmatprep.subr.bf16.mxu0 0
      %1809 = vmatpush1.bf16.msra.mxu0 %v1772
      %1810 = vmatprep.subr.bf16.mxu0 0
      %1811 = vmatpush1.bf16.msra.mxu0 %v1773
      %1812 = vmatprep.subr.bf16.mxu0 0
      %1813 = vmatpush1.bf16.msra.mxu0 %v1774
      %1814 = vmatprep.subr.bf16.mxu0 0
      %1815 = vmatpush1.bf16.msra.mxu0 %v1775
      %1816 = vmatprep.subr.bf16.mxu0 0
      %1817 = vmatpush1.bf16.msra.mxu0 0
      %1818 = vmatprep.subr.bf16.mxu0 0
      %1819 = vmatpush1.bf16.msra.mxu0 0
      %1820 = vmatprep.subr.bf16.mxu0 0
      %1821 = vmatpush1.bf16.msra.mxu0 0
      %1822 = vmatprep.subr.bf16.mxu0 0
      %1823 = vmatpush1.bf16.msra.mxu0 0
      %1824 = vmatprep.mubr.bf16.mxu0 %v1790
      %1825 = vmatmul.mubr.bf16.gmra.mrb[0].mxu0 %v1713
      %v1826 = vpop.f32.mrb[0].mxu0
      %v1827 = vadd.f32 %v505, %v1826
      %v1828 = vpop.f32.mrb[0].mxu0
      %v1829 = vpop.f32.mrb[0].mxu0
      %v1830 = vadd.f32 %v505, %v1829
      %v1831 = vpop.f32.mrb[0].mxu0
      %1832 = vdwg.mxu0
      %v1833 = vxor.u32 %v1827, 2147483648
      %v1834 = vxor.u32 %v1830, 2147483648
      %v1835 = vmul.f32 %v1833, 1.442695
      %v1836 = vpow.pop %v1835
      %v1837 = vmul.f32 %v1834, 1.442695
      %v1838 = vpow.pop %v1837
      %v1839 = vadd.f32 %v1836, 1.0
      %v1840 = vadd.f32 %v1838, 1.0
      %v1841 = vrcp.pop %v1839
      %v1842 = vmul.f32 1.0, %v1841
      %v1843 = vrcp.pop %v1840
      %v1844 = vmul.f32 1.0, %v1843
      %v1845 = vmul.f32 %v1827, %v1842
      %v1846 = vmul.f32 %v1830, %v1844
      %v1847 = vpack.c.bf16 %v1846, %v1845
      %v1848 = vld [vmem:[%s9] sm:$0xff]
      %v1849 = vld [vmem:[%s9 + $0x8] sm:$0xff]
      %v1850 = vld [vmem:[%s9 + $0x10] sm:$0xff]
      %v1851 = vld [vmem:[%s9 + $0x18] sm:$0xff]
      %v1852 = vld [vmem:[%s9 + $0x20] sm:$0xff]
      %v1853 = vld [vmem:[%s9 + $0x28] sm:$0xff]
      %v1854 = vld [vmem:[%s9 + $0x30] sm:$0xff]
      %v1855 = vld [vmem:[%s9 + $0x38] sm:$0xff]
      %v1856 = vld [vmem:[%s9 + $0x40] sm:$0xff]
      %v1857 = vld [vmem:[%s9 + $0x48] sm:$0xff]
      %v1858 = vld [vmem:[%s9 + $0x50] sm:$0xff]
      %v1859 = vld [vmem:[%s9 + $0x58] sm:$0xff]
      %v1860 = vld [vmem:[%s9 + $0x60] sm:$0xff]
      %v1861 = vld [vmem:[%s9 + $0x68] sm:$0xff]
      %v1862 = vld [vmem:[%s9 + $0x70] sm:$0xff]
      %v1863 = vld [vmem:[%s9 + $0x78] sm:$0xff]
      %v1880 = vunpack.c.l.b16 %v1848
      %v1881 = vunpack.c.h.b16 %v1848
      %v1882 = vunpack.c.l.b16 %v1849
      %v1883 = vunpack.c.h.b16 %v1849
      %v1884 = vunpack.c.l.b16 %v1850
      %v1885 = vunpack.c.h.b16 %v1850
      %v1886 = vunpack.c.l.b16 %v1851
      %v1887 = vunpack.c.h.b16 %v1851
      %v1888 = vunpack.c.l.b16 %v1852
      %v1889 = vunpack.c.h.b16 %v1852
      %v1890 = vunpack.c.l.b16 %v1853
      %v1891 = vunpack.c.h.b16 %v1853
      %v1892 = vunpack.c.l.b16 %v1854
      %v1893 = vunpack.c.h.b16 %v1854
      %v1894 = vunpack.c.l.b16 %v1855
      %v1895 = vunpack.c.h.b16 %v1855
      %v1896 = vunpack.c.l.b16 %v1856
      %v1897 = vunpack.c.h.b16 %v1856
      %v1898 = vunpack.c.l.b16 %v1857
      %v1899 = vunpack.c.h.b16 %v1857
      %v1900 = vunpack.c.l.b16 %v1858
      %v1901 = vunpack.c.h.b16 %v1858
      %v1902 = vunpack.c.l.b16 %v1859
      %v1903 = vunpack.c.h.b16 %v1859
      %v1904 = vunpack.c.l.b16 %v1860
      %v1905 = vunpack.c.h.b16 %v1860
      %v1906 = vunpack.c.l.b16 %v1861
      %v1907 = vunpack.c.h.b16 %v1861
      %v1908 = vunpack.c.l.b16 %v1862
      %v1909 = vunpack.c.h.b16 %v1862
      %v1910 = vunpack.c.l.b16 %v1863
      %v1911 = vunpack.c.h.b16 %v1863
      %v1912 = vpack.c.b16 %v1882, %v1880
      %v1913 = vpack.c.b16 %v1883, %v1881
      %v1914 = vpack.c.b16 %v1886, %v1884
      %v1915 = vpack.c.b16 %v1887, %v1885
      %v1916 = vpack.c.b16 %v1890, %v1888
      %v1917 = vpack.c.b16 %v1891, %v1889
      %v1918 = vpack.c.b16 %v1894, %v1892
      %v1919 = vpack.c.b16 %v1895, %v1893
      %v1920 = vpack.c.b16 %v1898, %v1896
      %v1921 = vpack.c.b16 %v1899, %v1897
      %v1922 = vpack.c.b16 %v1902, %v1900
      %v1923 = vpack.c.b16 %v1903, %v1901
      %v1924 = vpack.c.b16 %v1906, %v1904
      %v1925 = vpack.c.b16 %v1907, %v1905
      %v1926 = vpack.c.b16 %v1910, %v1908
      %v1927 = vpack.c.b16 %v1911, %v1909
      %1944 = vmatprep.subr.bf16.mxu0 %v1913
      %1945 = vmatpush1.bf16.msra.mxu0 %v1912
      %1946 = vmatprep.subr.bf16.mxu0 %v1915
      %1947 = vmatpush1.bf16.msra.mxu0 %v1914
      %1948 = vmatprep.subr.bf16.mxu0 %v1917
      %1949 = vmatpush1.bf16.msra.mxu0 %v1916
      %1950 = vmatprep.subr.bf16.mxu0 %v1919
      %1951 = vmatpush1.bf16.msra.mxu0 %v1918
      %1952 = vmatprep.subr.bf16.mxu0 %v1921
      %1953 = vmatpush1.bf16.msra.mxu0 %v1920
      %1954 = vmatprep.subr.bf16.mxu0 %v1923
      %1955 = vmatpush1.bf16.msra.mxu0 %v1922
      %1956 = vmatprep.subr.bf16.mxu0 %v1925
      %1957 = vmatpush1.bf16.msra.mxu0 %v1924
      %1958 = vmatprep.subr.bf16.mxu0 %v1927
      %1959 = vmatpush1.bf16.msra.mxu0 %v1926
      %1960 = vmatprep.subr.bf16.mxu0 0
      %1961 = vmatpush1.bf16.msra.mxu0 0
      %1962 = vmatprep.subr.bf16.mxu0 0
      %1963 = vmatpush1.bf16.msra.mxu0 0
      %1964 = vmatprep.subr.bf16.mxu0 0
      %1965 = vmatpush1.bf16.msra.mxu0 0
      %1966 = vmatprep.subr.bf16.mxu0 0
      %1967 = vmatpush1.bf16.msra.mxu0 0
      %1968 = vmatprep.subr.bf16.mxu0 0
      %1969 = vmatpush1.bf16.msra.mxu0 0
      %1970 = vmatprep.subr.bf16.mxu0 0
      %1971 = vmatpush1.bf16.msra.mxu0 0
      %1972 = vmatprep.subr.bf16.mxu0 0
      %1973 = vmatpush1.bf16.msra.mxu0 0
      %1974 = vmatprep.subr.bf16.mxu0 0
      %1975 = vmatpush1.bf16.msra.mxu0 0
      %1976 = vmatprep.mubr.bf16.mxu0 0
      %1977 = vmatmul.mubr.bf16.gmra.mrb[0].mxu0 %v1847
      %v1978 = vpop.f32.mrb[0].mxu0
      %v1979 = vadd.f32 0.0, %v1978
      %v1980 = vpop.f32.mrb[0].mxu0
      %v1981 = vpop.f32.mrb[0].mxu0
      %v1982 = vadd.f32 0.0, %v1981
      %v1983 = vpop.f32.mrb[0].mxu0
      %1984 = vdwg.mxu0
      %v1985 = vadd.f32 %v1979, %v510
      %v1986 = vadd.f32 %v1982, %v510
      %v1987 = vld [vmem:[%s475] sm:$0xff]
      %v1988 = vld [vmem:[%s475 + $0x8] sm:$0xff]
      %v1989 = vmul.f32 %v1985, 0.5
      %v1990 = vmul.f32 %v1986, 0.5
      %v1991 = vmul.f32 %v1989, 1.442695
      %v1992 = vpow.pop %v1991
      %v1993 = vmul.f32 %v1990, 1.442695
      %v1994 = vpow.pop %v1993
      %1997 = vrot.lane.b32.xlu0 %v1987, 4
      %v1998 = vpop.permute.xlu0 %1997
      %1999 = vrot.lane.b32.xlu0 %v1988, 4
      %v2000 = vpop.permute.xlu0 %1999
      %v2003 = vmul.f32 %v1992, %v1998
      %v2004 = vmul.f32 %v1994, %v2000
      %2007 = vrot.lane.b32.xlu0 %v2003, 124
      %v2008 = vpop.permute.xlu0 %2007
      %2009 = vrot.lane.b32.xlu0 %v2004, 124
      %v2010 = vpop.permute.xlu0 %2009
      %v2013 = vadd.f32 %v1985, %v2008
      %v2014 = vadd.f32 %v1986, %v2010
      %2017 = vrot.lane.b32.xlu0 %v2013, 8
      %v2018 = vpop.permute.xlu0 %2017
      %2019 = vrot.lane.b32.xlu0 %v2014, 8
      %v2020 = vpop.permute.xlu0 %2019
      %v2023 = vmul.f32 %v1987, %v2018
      %v2024 = vmul.f32 %v1988, %v2020
      %2025 = vrot.lane.b32.xlu0 %v1987, 8
      %v2026 = vpop.permute.xlu0 %2025
      %2027 = vrot.lane.b32.xlu0 %v1988, 8
      %v2028 = vpop.permute.xlu0 %2027
      %v2031 = vmul.f32 %v1987, %v2026
      %v2032 = vmul.f32 %v1988, %v2028
      %2035 = vrot.lane.b32.xlu0 %v2031, 124
      %v2036 = vpop.permute.xlu0 %2035
      %2037 = vrot.lane.b32.xlu0 %v2032, 124
      %v2038 = vpop.permute.xlu0 %2037
      %v2041 = vadd.f32 %v2023, %v2036
      %v2042 = vadd.f32 %v2024, %v2038
      %v2043 = vpack.c.bf16 %v2042, %v2041
      %v2044 = vld [vmem:[%s8] sm:$0x3]
      %2046 = vrot.lane.b32.xlu0 %v2043, 120
      %v2047 = vpop.permute.xlu0 %2046
      %vm2048 = vcmask 31744
      %v2050 = vsel %vm2048, %v2047, 0
      %vm2052 = vcmask 1041408
      %v2054 = vsel %vm2052, %v2044, 0
      %2056 = vmatprep.subr.bf16.mxu0 0
      %2057 = vmatpush1.bf16.msra.mxu0 %v2054
      %2058 = vmatprep.subr.bf16.mxu0 0
      %2059 = vmatpush1.bf16.msra.mxu0 0
      %2060 = vmatprep.subr.bf16.mxu0 0
      %2061 = vmatpush1.bf16.msra.mxu0 0
      %2062 = vmatprep.subr.bf16.mxu0 0
      %2063 = vmatpush1.bf16.msra.mxu0 0
      %2064 = vmatprep.subr.bf16.mxu0 0
      %2065 = vmatpush1.bf16.msra.mxu0 0
      %2066 = vmatprep.subr.bf16.mxu0 0
      %2067 = vmatpush1.bf16.msra.mxu0 0
      %2068 = vmatprep.subr.bf16.mxu0 0
      %2069 = vmatpush1.bf16.msra.mxu0 0
      %2070 = vmatprep.subr.bf16.mxu0 0
      %2071 = vmatpush1.bf16.msra.mxu0 0
      %2072 = vmatprep.subr.bf16.mxu0 0
      %2073 = vmatpush1.bf16.msra.mxu0 0
      %2074 = vmatprep.subr.bf16.mxu0 0
      %2075 = vmatpush1.bf16.msra.mxu0 0
      %2076 = vmatprep.subr.bf16.mxu0 0
      %2077 = vmatpush1.bf16.msra.mxu0 0
      %2078 = vmatprep.subr.bf16.mxu0 0
      %2079 = vmatpush1.bf16.msra.mxu0 0
      %2080 = vmatprep.subr.bf16.mxu0 0
      %2081 = vmatpush1.bf16.msra.mxu0 0
      %2082 = vmatprep.subr.bf16.mxu0 0
      %2083 = vmatpush1.bf16.msra.mxu0 0
      %2084 = vmatprep.subr.bf16.mxu0 0
      %2085 = vmatpush1.bf16.msra.mxu0 0
      %2086 = vmatprep.subr.bf16.mxu0 0
      %2087 = vmatpush1.bf16.msra.mxu0 0
      %2088 = vmatprep.mubr.bf16.mxu0 0
      %2089 = vmatmul.mubr.bf16.gmra.mrb[0].mxu0 %v2050
      %v2090 = vpop.f32.mrb[0].mxu0
      %v2091 = vadd.f32 %v508, %v2090
      %v2092 = vpop.f32.mrb[0].mxu0
      %v2093 = vpop.f32.mrb[0].mxu0
      %v2094 = vadd.f32 %v508, %v2093
      %v2095 = vpop.f32.mrb[0].mxu0
      %2096 = vdwg.mxu0
      %v2097 = vld [vmem:[%s481] sm:$0xff]
      %v2098 = vld [vmem:[%s481 + $0x8] sm:$0xff]
      %v2099 = vadd.f32 %v2091, %v2097
      %v2100 = vadd.f32 %v2094, %v2098
      %v2101 = vxor.u32 %v2099, 2147483648
      %v2102 = vxor.u32 %v2100, 2147483648
      %v2103 = vmul.f32 %v2101, 1.442695
      %v2104 = vpow.pop %v2103
      %v2105 = vmul.f32 %v2102, 1.442695
      %v2106 = vpow.pop %v2105
      %v2107 = vadd.f32 %v2104, 1.0
      %v2108 = vadd.f32 %v2106, 1.0
      %v2109 = vrcp.pop %v2107
      %v2110 = vmul.f32 1.0, %v2109
      %v2111 = vrcp.pop %v2108
      %v2112 = vmul.f32 1.0, %v2111
      %v2113 = vmul.f32 %v2099, %v2110
      %v2114 = vmul.f32 %v2100, %v2112
      %v2115 = vpack.c.bf16 %v2014, %v2013
      %s2116 = scalar_lea.vmem %s8, 2
      %v2117 = vld [vmem:[%s2116] sm:$0x3]
      %v2119 = vsel %vm2048, %v2115, 0
      %v2122 = vsel %vm2052, %v2117, 0
      %2124 = vmatprep.subr.bf16.mxu0 0
      %2125 = vmatpush1.bf16.msra.mxu0 %v2122
      %2126 = vmatprep.subr.bf16.mxu0 0
      %2127 = vmatpush1.bf16.msra.mxu0 0
      %2128 = vmatprep.subr.bf16.mxu0 0
      %2129 = vmatpush1.bf16.msra.mxu0 0
      %2130 = vmatprep.subr.bf16.mxu0 0
      %2131 = vmatpush1.bf16.msra.mxu0 0
      %2132 = vmatprep.subr.bf16.mxu0 0
      %2133 = vmatpush1.bf16.msra.mxu0 0
      %2134 = vmatprep.subr.bf16.mxu0 0
      %2135 = vmatpush1.bf16.msra.mxu0 0
      %2136 = vmatprep.subr.bf16.mxu0 0
      %2137 = vmatpush1.bf16.msra.mxu0 0
      %2138 = vmatprep.subr.bf16.mxu0 0
      %2139 = vmatpush1.bf16.msra.mxu0 0
      %2140 = vmatprep.subr.bf16.mxu0 0
      %2141 = vmatpush1.bf16.msra.mxu0 0
      %2142 = vmatprep.subr.bf16.mxu0 0
      %2143 = vmatpush1.bf16.msra.mxu0 0
      %2144 = vmatprep.subr.bf16.mxu0 0
      %2145 = vmatpush1.bf16.msra.mxu0 0
      %2146 = vmatprep.subr.bf16.mxu0 0
      %2147 = vmatpush1.bf16.msra.mxu0 0
      %2148 = vmatprep.subr.bf16.mxu0 0
      %2149 = vmatpush1.bf16.msra.mxu0 0
      %2150 = vmatprep.subr.bf16.mxu0 0
      %2151 = vmatpush1.bf16.msra.mxu0 0
      %2152 = vmatprep.subr.bf16.mxu0 0
      %2153 = vmatpush1.bf16.msra.mxu0 0
      %2154 = vmatprep.subr.bf16.mxu0 0
      %2155 = vmatpush1.bf16.msra.mxu0 0
      %2156 = vmatprep.mubr.bf16.mxu0 0
      %2157 = vmatmul.mubr.bf16.gmra.mrb[0].mxu0 %v2119
      %v2158 = vpop.f32.mrb[0].mxu0
      %v2159 = vadd.f32 %v509, %v2158
      %v2160 = vpop.f32.mrb[0].mxu0
      %v2161 = vpop.f32.mrb[0].mxu0
      %v2162 = vadd.f32 %v509, %v2161
      %v2163 = vpop.f32.mrb[0].mxu0
      %2164 = vdwg.mxu0
      %v2165 = vxor.u32 %v2159, 2147483648
      %v2166 = vxor.u32 %v2162, 2147483648
      %v2167 = vmul.f32 %v2165, 1.442695
      %v2168 = vpow.pop %v2167
      %v2169 = vmul.f32 %v2166, 1.442695
      %v2170 = vpow.pop %v2169
      %v2171 = vadd.f32 %v2168, 1.0
      %v2172 = vadd.f32 %v2170, 1.0
      %v2173 = vrcp.pop %v2171
      %v2174 = vmul.f32 1.0, %v2173
      %v2175 = vrcp.pop %v2172
      %v2176 = vmul.f32 1.0, %v2175
      %v2177 = vmul.f32 %v2159, %v2174
      %v2178 = vmul.f32 %v2162, %v2176
      %v2179 = vpack.c.bf16 %v2114, %v2113
      %s2180 = scalar_lea.vmem %s5, 128
      %v2181 = vld [vmem:[%s2180] sm:$0xf]
      %v2182 = vld [vmem:[%s2180 + $0x4] sm:$0xf]
      %v2183 = vld [vmem:[%s2180 + $0x8] sm:$0xf]
      %v2184 = vld [vmem:[%s2180 + $0xc] sm:$0xf]
      %v2185 = vld [vmem:[%s2180 + $0x10] sm:$0xf]
      %v2186 = vld [vmem:[%s2180 + $0x14] sm:$0xf]
      %v2187 = vld [vmem:[%s2180 + $0x18] sm:$0xf]
      %v2188 = vld [vmem:[%s2180 + $0x1c] sm:$0xf]
      %v2189 = vld [vmem:[%s2180 + $0x20] sm:$0xf]
      %v2190 = vld [vmem:[%s2180 + $0x24] sm:$0xf]
      %v2191 = vld [vmem:[%s2180 + $0x28] sm:$0xf]
      %v2192 = vld [vmem:[%s2180 + $0x2c] sm:$0xf]
      %v2193 = vld [vmem:[%s2180 + $0x30] sm:$0xf]
      %v2194 = vld [vmem:[%s2180 + $0x34] sm:$0xf]
      %v2195 = vld [vmem:[%s2180 + $0x38] sm:$0xf]
      %v2196 = vld [vmem:[%s2180 + $0x3c] sm:$0xf]
      %v2213 = vunpack.c.l.b16 %v2181
      %v2214 = vunpack.c.l.b16 %v2182
      %v2215 = vunpack.c.l.b16 %v2183
      %v2216 = vunpack.c.l.b16 %v2184
      %v2217 = vunpack.c.l.b16 %v2185
      %v2218 = vunpack.c.l.b16 %v2186
      %v2219 = vunpack.c.l.b16 %v2187
      %v2220 = vunpack.c.l.b16 %v2188
      %v2221 = vunpack.c.l.b16 %v2189
      %v2222 = vunpack.c.l.b16 %v2190
      %v2223 = vunpack.c.l.b16 %v2191
      %v2224 = vunpack.c.l.b16 %v2192
      %v2225 = vunpack.c.l.b16 %v2193
      %v2226 = vunpack.c.l.b16 %v2194
      %v2227 = vunpack.c.l.b16 %v2195
      %v2228 = vunpack.c.l.b16 %v2196
      %v2229 = vpack.c.b16 %v2214, %v2213
      %v2230 = vpack.c.b16 %v2216, %v2215
      %v2231 = vpack.c.b16 %v2218, %v2217
      %v2232 = vpack.c.b16 %v2220, %v2219
      %v2233 = vpack.c.b16 %v2222, %v2221
      %v2234 = vpack.c.b16 %v2224, %v2223
      %v2235 = vpack.c.b16 %v2226, %v2225
      %v2236 = vpack.c.b16 %v2228, %v2227
      %2245 = vmatprep.subr.bf16.mxu0 0
      %2246 = vmatpush1.bf16.msra.mxu0 %v2229
      %2247 = vmatprep.subr.bf16.mxu0 0
      %2248 = vmatpush1.bf16.msra.mxu0 %v2230
      %2249 = vmatprep.subr.bf16.mxu0 0
      %2250 = vmatpush1.bf16.msra.mxu0 %v2231
      %2251 = vmatprep.subr.bf16.mxu0 0
      %2252 = vmatpush1.bf16.msra.mxu0 %v2232
      %2253 = vmatprep.subr.bf16.mxu0 0
      %2254 = vmatpush1.bf16.msra.mxu0 %v2233
      %2255 = vmatprep.subr.bf16.mxu0 0
      %2256 = vmatpush1.bf16.msra.mxu0 %v2234
      %2257 = vmatprep.subr.bf16.mxu0 0
      %2258 = vmatpush1.bf16.msra.mxu0 %v2235
      %2259 = vmatprep.subr.bf16.mxu0 0
      %2260 = vmatpush1.bf16.msra.mxu0 %v2236
      %2261 = vmatprep.subr.bf16.mxu0 0
      %2262 = vmatpush1.bf16.msra.mxu0 0
      %2263 = vmatprep.subr.bf16.mxu0 0
      %2264 = vmatpush1.bf16.msra.mxu0 0
      %2265 = vmatprep.subr.bf16.mxu0 0
      %2266 = vmatpush1.bf16.msra.mxu0 0
      %2267 = vmatprep.subr.bf16.mxu0 0
      %2268 = vmatpush1.bf16.msra.mxu0 0
      %2269 = vmatprep.subr.bf16.mxu0 0
      %2270 = vmatpush1.bf16.msra.mxu0 0
      %2271 = vmatprep.subr.bf16.mxu0 0
      %2272 = vmatpush1.bf16.msra.mxu0 0
      %2273 = vmatprep.subr.bf16.mxu0 0
      %2274 = vmatpush1.bf16.msra.mxu0 0
      %2275 = vmatprep.subr.bf16.mxu0 0
      %2276 = vmatpush1.bf16.msra.mxu0 0
      %2277 = vmatprep.mubr.bf16.mxu0 0
      %2278 = vmatmul.mubr.bf16.gmra.mrb[0].mxu0 %v2179
      %v2279 = vpop.f32.mrb[0].mxu0
      %v2280 = vadd.f32 %v506, %v2279
      %v2281 = vpop.f32.mrb[0].mxu0
      %v2282 = vpop.f32.mrb[0].mxu0
      %v2283 = vadd.f32 %v506, %v2282
      %v2284 = vpop.f32.mrb[0].mxu0
      %2285 = vdwg.mxu0
      %v2286 = vpack.c.bf16 %v2283, %v2280
      %2287 = vmatprep.subr.bf16.mxu0 0
      %2288 = vmatpush1.bf16.xpose.msra.mxu0 %v1649
      %2289 = vmatprep.subr.bf16.mxu0 0
      %2290 = vmatpush1.bf16.xpose.msra.mxu0 %v1651
      %2291 = vmatprep.subr.bf16.mxu0 0
      %2292 = vmatpush1.bf16.xpose.msra.mxu0 %v1653
      %2293 = vmatprep.subr.bf16.mxu0 0
      %2294 = vmatpush1.bf16.xpose.msra.mxu0 %v1655
      %2295 = vmatprep.subr.bf16.mxu0 0
      %2296 = vmatpush1.bf16.xpose.msra.mxu0 %v1657
      %2297 = vmatprep.subr.bf16.mxu0 0
      %2298 = vmatpush1.bf16.xpose.msra.mxu0 %v1659
      %2299 = vmatprep.subr.bf16.mxu0 0
      %2300 = vmatpush1.bf16.xpose.msra.mxu0 %v1661
      %2301 = vmatprep.subr.bf16.mxu0 0
      %2302 = vmatpush1.bf16.xpose.msra.mxu0 %v1663
      %2303 = vmatprep.subr.bf16.mxu0 0
      %2304 = vmatpush1.bf16.xpose.msra.mxu0 %v1665
      %2305 = vmatprep.subr.bf16.mxu0 0
      %2306 = vmatpush1.bf16.xpose.msra.mxu0 %v1667
      %2307 = vmatprep.subr.bf16.mxu0 0
      %2308 = vmatpush1.bf16.xpose.msra.mxu0 %v1669
      %2309 = vmatprep.subr.bf16.mxu0 0
      %2310 = vmatpush1.bf16.xpose.msra.mxu0 %v1671
      %2311 = vmatprep.subr.bf16.mxu0 0
      %2312 = vmatpush1.bf16.xpose.msra.mxu0 %v1673
      %2313 = vmatprep.subr.bf16.mxu0 0
      %2314 = vmatpush1.bf16.xpose.msra.mxu0 %v1675
      %2315 = vmatprep.subr.bf16.mxu0 0
      %2316 = vmatpush1.bf16.xpose.msra.mxu0 %v1677
      %2317 = vmatprep.subr.bf16.mxu0 0
      %2318 = vmatpush1.bf16.xpose.msra.mxu0 %v1679
      %2319 = vmatprep.mubr.bf16.mxu0 0
      %2320 = vmatmul.mubr.bf16.gmra.mrb[0].mxu0 %v2286
      %v2321 = vpop.f32.mrb[0].mxu0
      %v2322 = vadd.f32 0.0, %v2321
      %v2323 = vpop.f32.mrb[0].mxu0
      %v2324 = vadd.f32 0.0, %v2323
      %v2325 = vpop.f32.mrb[0].mxu0
      %v2326 = vadd.f32 0.0, %v2325
      %v2327 = vpop.f32.mrb[0].mxu0
      %v2328 = vadd.f32 0.0, %v2327
      %2329 = vdwg.mxu0
      %v2330 = vmul.f32 %v2322, 0.088388346
      %v2331 = vmul.f32 %v2324, 0.088388346
      %v2332 = vmul.f32 %v2326, 0.088388346
      %v2333 = vmul.f32 %v2328, 0.088388346
      %v2334 = vld [vmem:[%s488] sm:$0xff]
      %v2335 = vld [vmem:[%s488 + $0x8] sm:$0xff]
      %v2336 = vld [vmem:[%s488 + $0x10] sm:$0xff]
      %v2337 = vld [vmem:[%s488 + $0x18] sm:$0xff]
      %v2338 = vadd.f32 %v2330, %v2334
      %v2339 = vadd.f32 %v2331, %v2335
      %v2340 = vadd.f32 %v2332, %v2336
      %v2341 = vadd.f32 %v2333, %v2337
      %v2342 = vmax.f32 %v2338, %v2339
      %2343 = vmax.xlane.f32.xlu0 %v2342
      %v2344 = vpop.xlane.xlu0 %2343
      %v2345 = vmax.f32 %v2340, %v2341
      %2346 = vmax.xlane.f32.xlu0 %v2345
      %v2347 = vpop.xlane.xlu0 %2346
      %v2348 = vsub.f32 %v2338, %v2344
      %v2349 = vsub.f32 %v2339, %v2344
      %v2350 = vsub.f32 %v2340, %v2347
      %v2351 = vsub.f32 %v2341, %v2347
      %v2352 = vmul.f32 %v2348, 1.442695
      %v2353 = vpow.pop %v2352
      %v2354 = vmul.f32 %v2349, 1.442695
      %v2355 = vpow.pop %v2354
      %v2356 = vmul.f32 %v2350, 1.442695
      %v2357 = vpow.pop %v2356
      %v2358 = vmul.f32 %v2351, 1.442695
      %v2359 = vpow.pop %v2358
      %v2360 = vadd.f32 %v2353, %v2355
      %2361 = vadd.xlane.f32.xlu0 %v2360
      %v2362 = vpop.xlane.xlu0 %2361
      %v2363 = vadd.f32 %v2357, %v2359
      %2364 = vadd.xlane.f32.xlu0 %v2363
      %v2365 = vpop.xlane.xlu0 %2364
      %v2366 = vpack.c.bf16 %v2357, %v2353
      %v2367 = vpack.c.bf16 %v2359, %v2355
      %2368 = vmatprep.subr.bf16.mxu0 0
      %2369 = vmatpush1.bf16.msra.mxu0 %v1650
      %2370 = vmatprep.subr.bf16.mxu0 0
      %2371 = vmatpush1.bf16.msra.mxu0 %v1652
      %2372 = vmatprep.subr.bf16.mxu0 0
      %2373 = vmatpush1.bf16.msra.mxu0 %v1654
      %2374 = vmatprep.subr.bf16.mxu0 0
      %2375 = vmatpush1.bf16.msra.mxu0 %v1656
      %2376 = vmatprep.subr.bf16.mxu0 0
      %2377 = vmatpush1.bf16.msra.mxu0 %v1658
      %2378 = vmatprep.subr.bf16.mxu0 0
      %2379 = vmatpush1.bf16.msra.mxu0 %v1660
      %2380 = vmatprep.subr.bf16.mxu0 0
      %2381 = vmatpush1.bf16.msra.mxu0 %v1662
      %2382 = vmatprep.subr.bf16.mxu0 0
      %2383 = vmatpush1.bf16.msra.mxu0 %v1664
      %2384 = vmatprep.subr.bf16.mxu0 0
      %2385 = vmatpush1.bf16.msra.mxu0 %v1666
      %2386 = vmatprep.subr.bf16.mxu0 0
      %2387 = vmatpush1.bf16.msra.mxu0 %v1668
      %2388 = vmatprep.subr.bf16.mxu0 0
      %2389 = vmatpush1.bf16.msra.mxu0 %v1670
      %2390 = vmatprep.subr.bf16.mxu0 0
      %2391 = vmatpush1.bf16.msra.mxu0 %v1672
      %2392 = vmatprep.subr.bf16.mxu0 0
      %2393 = vmatpush1.bf16.msra.mxu0 %v1674
      %2394 = vmatprep.subr.bf16.mxu0 0
      %2395 = vmatpush1.bf16.msra.mxu0 %v1676
      %2396 = vmatprep.subr.bf16.mxu0 0
      %2397 = vmatpush1.bf16.msra.mxu0 %v1678
      %2398 = vmatprep.subr.bf16.mxu0 0
      %2399 = vmatpush1.bf16.msra.mxu0 %v1680
      %2400 = vmatprep.mubr.bf16.mxu0 %v2367
      %2401 = vmatmul.mubr.bf16.gmra.mrb[0].mxu0 %v2366
      %v2402 = vpop.f32.mrb[0].mxu0
      %v2403 = vadd.f32 0.0, %v2402
      %v2404 = vpop.f32.mrb[0].mxu0
      %v2405 = vpop.f32.mrb[0].mxu0
      %v2406 = vadd.f32 0.0, %v2405
      %v2407 = vpop.f32.mrb[0].mxu0
      %2408 = vdwg.mxu0
      %v2409 = vrcp.pop %v2362
      %v2410 = vrcp.pop %v2365
      %v2411 = vmul.f32 %v2403, %v2409
      %v2412 = vmul.f32 %v2406, %v2410
      %v2413 = vpack.c.bf16 %v2412, %v2411
      %s2414 = scalar_lea.vmem %s5, 192
      %v2415 = vld [vmem:[%s2414] sm:$0xf]
      %v2416 = vld [vmem:[%s2414 + $0x4] sm:$0xf]
      %v2417 = vld [vmem:[%s2414 + $0x8] sm:$0xf]
      %v2418 = vld [vmem:[%s2414 + $0xc] sm:$0xf]
      %v2419 = vld [vmem:[%s2414 + $0x10] sm:$0xf]
      %v2420 = vld [vmem:[%s2414 + $0x14] sm:$0xf]
      %v2421 = vld [vmem:[%s2414 + $0x18] sm:$0xf]
      %v2422 = vld [vmem:[%s2414 + $0x1c] sm:$0xf]
      %v2423 = vld [vmem:[%s2414 + $0x20] sm:$0xf]
      %v2424 = vld [vmem:[%s2414 + $0x24] sm:$0xf]
      %v2425 = vld [vmem:[%s2414 + $0x28] sm:$0xf]
      %v2426 = vld [vmem:[%s2414 + $0x2c] sm:$0xf]
      %v2427 = vld [vmem:[%s2414 + $0x30] sm:$0xf]
      %v2428 = vld [vmem:[%s2414 + $0x34] sm:$0xf]
      %v2429 = vld [vmem:[%s2414 + $0x38] sm:$0xf]
      %v2430 = vld [vmem:[%s2414 + $0x3c] sm:$0xf]
      %v2447 = vunpack.c.l.b16 %v2415
      %v2448 = vunpack.c.l.b16 %v2416
      %v2449 = vunpack.c.l.b16 %v2417
      %v2450 = vunpack.c.l.b16 %v2418
      %v2451 = vunpack.c.l.b16 %v2419
      %v2452 = vunpack.c.l.b16 %v2420
      %v2453 = vunpack.c.l.b16 %v2421
      %v2454 = vunpack.c.l.b16 %v2422
      %v2455 = vunpack.c.l.b16 %v2423
      %v2456 = vunpack.c.l.b16 %v2424
      %v2457 = vunpack.c.l.b16 %v2425
      %v2458 = vunpack.c.l.b16 %v2426
      %v2459 = vunpack.c.l.b16 %v2427
      %v2460 = vunpack.c.l.b16 %v2428
      %v2461 = vunpack.c.l.b16 %v2429
      %v2462 = vunpack.c.l.b16 %v2430
      %v2463 = vpack.c.b16 %v2448, %v2447
      %v2464 = vpack.c.b16 %v2450, %v2449
      %v2465 = vpack.c.b16 %v2452, %v2451
      %v2466 = vpack.c.b16 %v2454, %v2453
      %v2467 = vpack.c.b16 %v2456, %v2455
      %v2468 = vpack.c.b16 %v2458, %v2457
      %v2469 = vpack.c.b16 %v2460, %v2459
      %v2470 = vpack.c.b16 %v2462, %v2461
      %2479 = vmatprep.subr.bf16.mxu0 0
      %2480 = vmatpush1.bf16.msra.mxu0 %v2463
      %2481 = vmatprep.subr.bf16.mxu0 0
      %2482 = vmatpush1.bf16.msra.mxu0 %v2464
      %2483 = vmatprep.subr.bf16.mxu0 0
      %2484 = vmatpush1.bf16.msra.mxu0 %v2465
      %2485 = vmatprep.subr.bf16.mxu0 0
      %2486 = vmatpush1.bf16.msra.mxu0 %v2466
      %2487 = vmatprep.subr.bf16.mxu0 0
      %2488 = vmatpush1.bf16.msra.mxu0 %v2467
      %2489 = vmatprep.subr.bf16.mxu0 0
      %2490 = vmatpush1.bf16.msra.mxu0 %v2468
      %2491 = vmatprep.subr.bf16.mxu0 0
      %2492 = vmatpush1.bf16.msra.mxu0 %v2469
      %2493 = vmatprep.subr.bf16.mxu0 0
      %2494 = vmatpush1.bf16.msra.mxu0 %v2470
      %2495 = vmatprep.subr.bf16.mxu0 0
      %2496 = vmatpush1.bf16.msra.mxu0 0
      %2497 = vmatprep.subr.bf16.mxu0 0
      %2498 = vmatpush1.bf16.msra.mxu0 0
      %2499 = vmatprep.subr.bf16.mxu0 0
      %2500 = vmatpush1.bf16.msra.mxu0 0
      %2501 = vmatprep.subr.bf16.mxu0 0
      %2502 = vmatpush1.bf16.msra.mxu0 0
      %2503 = vmatprep.subr.bf16.mxu0 0
      %2504 = vmatpush1.bf16.msra.mxu0 0
      %2505 = vmatprep.subr.bf16.mxu0 0
      %2506 = vmatpush1.bf16.msra.mxu0 0
      %2507 = vmatprep.subr.bf16.mxu0 0
      %2508 = vmatpush1.bf16.msra.mxu0 0
      %2509 = vmatprep.subr.bf16.mxu0 0
      %2510 = vmatpush1.bf16.msra.mxu0 0
      %2511 = vmatprep.mubr.bf16.mxu0 0
      %2512 = vmatmul.mubr.bf16.gmra.mrb[0].mxu0 %v2413
      %v2513 = vpop.f32.mrb[0].mxu0
      %v2514 = vadd.f32 %v507, %v2513
      %v2515 = vpop.f32.mrb[0].mxu0
      %v2516 = vpop.f32.mrb[0].mxu0
      %v2517 = vadd.f32 %v507, %v2516
      %v2518 = vpop.f32.mrb[0].mxu0
      %2519 = vdwg.mxu0
      %v2520 = vadd.f32 %v2113, %v2514
      %v2521 = vadd.f32 %v2114, %v2517
      %v2522 = vpack.c.bf16 %v2521, %v2520
      %s2523 = scalar_lea.vmem %s9, 128
      %v2524 = vld [vmem:[%s2523] sm:$0xff]
      %v2525 = vld [vmem:[%s2523 + $0x8] sm:$0xff]
      %v2526 = vld [vmem:[%s2523 + $0x10] sm:$0xff]
      %v2527 = vld [vmem:[%s2523 + $0x18] sm:$0xff]
      %v2528 = vld [vmem:[%s2523 + $0x20] sm:$0xff]
      %v2529 = vld [vmem:[%s2523 + $0x28] sm:$0xff]
      %v2530 = vld [vmem:[%s2523 + $0x30] sm:$0xff]
      %v2531 = vld [vmem:[%s2523 + $0x38] sm:$0xff]
      %v2532 = vld [vmem:[%s2523 + $0x40] sm:$0xff]
      %v2533 = vld [vmem:[%s2523 + $0x48] sm:$0xff]
      %v2534 = vld [vmem:[%s2523 + $0x50] sm:$0xff]
      %v2535 = vld [vmem:[%s2523 + $0x58] sm:$0xff]
      %v2536 = vld [vmem:[%s2523 + $0x60] sm:$0xff]
      %v2537 = vld [vmem:[%s2523 + $0x68] sm:$0xff]
      %v2538 = vld [vmem:[%s2523 + $0x70] sm:$0xff]
      %v2539 = vld [vmem:[%s2523 + $0x78] sm:$0xff]
      %v2556 = vunpack.c.l.b16 %v2524
      %v2557 = vunpack.c.h.b16 %v2524
      %v2558 = vunpack.c.l.b16 %v2525
      %v2559 = vunpack.c.h.b16 %v2525
      %v2560 = vunpack.c.l.b16 %v2526
      %v2561 = vunpack.c.h.b16 %v2526
      %v2562 = vunpack.c.l.b16 %v2527
      %v2563 = vunpack.c.h.b16 %v2527
      %v2564 = vunpack.c.l.b16 %v2528
      %v2565 = vunpack.c.h.b16 %v2528
      %v2566 = vunpack.c.l.b16 %v2529
      %v2567 = vunpack.c.h.b16 %v2529
      %v2568 = vunpack.c.l.b16 %v2530
      %v2569 = vunpack.c.h.b16 %v2530
      %v2570 = vunpack.c.l.b16 %v2531
      %v2571 = vunpack.c.h.b16 %v2531
      %v2572 = vunpack.c.l.b16 %v2532
      %v2573 = vunpack.c.h.b16 %v2532
      %v2574 = vunpack.c.l.b16 %v2533
      %v2575 = vunpack.c.h.b16 %v2533
      %v2576 = vunpack.c.l.b16 %v2534
      %v2577 = vunpack.c.h.b16 %v2534
      %v2578 = vunpack.c.l.b16 %v2535
      %v2579 = vunpack.c.h.b16 %v2535
      %v2580 = vunpack.c.l.b16 %v2536
      %v2581 = vunpack.c.h.b16 %v2536
      %v2582 = vunpack.c.l.b16 %v2537
      %v2583 = vunpack.c.h.b16 %v2537
      %v2584 = vunpack.c.l.b16 %v2538
      %v2585 = vunpack.c.h.b16 %v2538
      %v2586 = vunpack.c.l.b16 %v2539
      %v2587 = vunpack.c.h.b16 %v2539
      %v2588 = vpack.c.b16 %v2558, %v2556
      %v2589 = vpack.c.b16 %v2559, %v2557
      %v2590 = vpack.c.b16 %v2562, %v2560
      %v2591 = vpack.c.b16 %v2563, %v2561
      %v2592 = vpack.c.b16 %v2566, %v2564
      %v2593 = vpack.c.b16 %v2567, %v2565
      %v2594 = vpack.c.b16 %v2570, %v2568
      %v2595 = vpack.c.b16 %v2571, %v2569
      %v2596 = vpack.c.b16 %v2574, %v2572
      %v2597 = vpack.c.b16 %v2575, %v2573
      %v2598 = vpack.c.b16 %v2578, %v2576
      %v2599 = vpack.c.b16 %v2579, %v2577
      %v2600 = vpack.c.b16 %v2582, %v2580
      %v2601 = vpack.c.b16 %v2583, %v2581
      %v2602 = vpack.c.b16 %v2586, %v2584
      %v2603 = vpack.c.b16 %v2587, %v2585
      %2620 = vmatprep.subr.bf16.mxu0 %v2589
      %2621 = vmatpush1.bf16.msra.mxu0 %v2588
      %2622 = vmatprep.subr.bf16.mxu0 %v2591
      %2623 = vmatpush1.bf16.msra.mxu0 %v2590
      %2624 = vmatprep.subr.bf16.mxu0 %v2593
      %2625 = vmatpush1.bf16.msra.mxu0 %v2592
      %2626 = vmatprep.subr.bf16.mxu0 %v2595
      %2627 = vmatpush1.bf16.msra.mxu0 %v2594
      %2628 = vmatprep.subr.bf16.mxu0 %v2597
      %2629 = vmatpush1.bf16.msra.mxu0 %v2596
      %2630 = vmatprep.subr.bf16.mxu0 %v2599
      %2631 = vmatpush1.bf16.msra.mxu0 %v2598
      %2632 = vmatprep.subr.bf16.mxu0 %v2601
      %2633 = vmatpush1.bf16.msra.mxu0 %v2600
      %2634 = vmatprep.subr.bf16.mxu0 %v2603
      %2635 = vmatpush1.bf16.msra.mxu0 %v2602
      %2636 = vmatprep.subr.bf16.mxu0 0
      %2637 = vmatpush1.bf16.msra.mxu0 0
      %2638 = vmatprep.subr.bf16.mxu0 0
      %2639 = vmatpush1.bf16.msra.mxu0 0
      %2640 = vmatprep.subr.bf16.mxu0 0
      %2641 = vmatpush1.bf16.msra.mxu0 0
      %2642 = vmatprep.subr.bf16.mxu0 0
      %2643 = vmatpush1.bf16.msra.mxu0 0
      %2644 = vmatprep.subr.bf16.mxu0 0
      %2645 = vmatpush1.bf16.msra.mxu0 0
      %2646 = vmatprep.subr.bf16.mxu0 0
      %2647 = vmatpush1.bf16.msra.mxu0 0
      %2648 = vmatprep.subr.bf16.mxu0 0
      %2649 = vmatpush1.bf16.msra.mxu0 0
      %2650 = vmatprep.subr.bf16.mxu0 0
      %2651 = vmatpush1.bf16.msra.mxu0 0
      %2652 = vmatprep.mubr.bf16.mxu0 0
      %2653 = vmatmul.mubr.bf16.gmra.mrb[0].mxu0 %v2522
      %v2654 = vpop.f32.mrb[0].mxu0
      %v2655 = vadd.f32 0.0, %v2654
      %v2656 = vpop.f32.mrb[0].mxu0
      %v2657 = vpop.f32.mrb[0].mxu0
      %v2658 = vadd.f32 0.0, %v2657
      %v2659 = vpop.f32.mrb[0].mxu0
      %2660 = vdwg.mxu0
      %v2661 = vadd.f32 %v2655, %v511
      %v2662 = vadd.f32 %v2658, %v511
      %2663 = vrot.lane.b32.xlu0 %v1987, 124
      %v2664 = vpop.permute.xlu0 %2663
      %2665 = vrot.lane.b32.xlu0 %v1988, 124
      %v2666 = vpop.permute.xlu0 %2665
      %v2669 = vsub.f32 %v2661, %v2664
      %v2670 = vsub.f32 %v2662, %v2666
      %2671 = vset.pattern.permute.xlu0 16
      %2672 = vperm.xlu0 %2671, %v1987
      %v2673 = vpop.permute.xlu0 %2672
      %2675 = vset.pattern.permute.xlu0 16
      %2676 = vperm.xlu0 %2675, %v1988
      %v2677 = vpop.permute.xlu0 %2676
      %v2679 = vmul.f32 %v2669, %v2673
      %v2680 = vmul.f32 %v2670, %v2677
      %v2681 = vmul.f32 %v2679, %v2679
      %v2682 = vmul.f32 %v2680, %v2680
      %v2683 = vsel %vm2048, %v2681, 0.0
      %2684 = vadd.xlane.f32.xlu0 %v2683
      %v2685 = vpop.xlane.xlu0 %2684
      %v2686 = vsel %vm2048, %v2682, 0.0
      %2687 = vadd.xlane.f32.xlu0 %v2686
      %v2688 = vpop.xlane.xlu0 %2687
      %v2689 = vadd.f32 %v2685, %v2688
      %v2690 = vrot.slane %v2689, 4
      %v2691 = vadd.f32 %v2689, %v2690
      %v2692 = vrot.slane %v2691, 2
      %v2693 = vadd.f32 %v2691, %v2692
      %v2694 = vrot.slane %v2693, 1
      %v2695 = vadd.f32 %v2693, %v2694
      %2696 = vst [vmem:[%s499] sm:$0x1] %v2695
      %v2697 = vpack.c.bf16 %v2178, %v2177
      %s2698 = scalar_lea.vmem %s9, 256
      %v2699 = vld [vmem:[%s2698] sm:$0xff]
      %v2700 = vld [vmem:[%s2698 + $0x8] sm:$0xff]
      %v2701 = vld [vmem:[%s2698 + $0x10] sm:$0xff]
      %v2702 = vld [vmem:[%s2698 + $0x18] sm:$0xff]
      %v2703 = vld [vmem:[%s2698 + $0x20] sm:$0xff]
      %v2704 = vld [vmem:[%s2698 + $0x28] sm:$0xff]
      %v2705 = vld [vmem:[%s2698 + $0x30] sm:$0xff]
      %v2706 = vld [vmem:[%s2698 + $0x38] sm:$0xff]
      %v2707 = vld [vmem:[%s2698 + $0x40] sm:$0xff]
      %v2708 = vld [vmem:[%s2698 + $0x48] sm:$0xff]
      %v2709 = vld [vmem:[%s2698 + $0x50] sm:$0xff]
      %v2710 = vld [vmem:[%s2698 + $0x58] sm:$0xff]
      %v2711 = vld [vmem:[%s2698 + $0x60] sm:$0xff]
      %v2712 = vld [vmem:[%s2698 + $0x68] sm:$0xff]
      %v2713 = vld [vmem:[%s2698 + $0x70] sm:$0xff]
      %v2714 = vld [vmem:[%s2698 + $0x78] sm:$0xff]
      %v2731 = vunpack.c.l.b16 %v2699
      %v2732 = vunpack.c.h.b16 %v2699
      %v2733 = vunpack.c.l.b16 %v2700
      %v2734 = vunpack.c.h.b16 %v2700
      %v2735 = vunpack.c.l.b16 %v2701
      %v2736 = vunpack.c.h.b16 %v2701
      %v2737 = vunpack.c.l.b16 %v2702
      %v2738 = vunpack.c.h.b16 %v2702
      %v2739 = vunpack.c.l.b16 %v2703
      %v2740 = vunpack.c.h.b16 %v2703
      %v2741 = vunpack.c.l.b16 %v2704
      %v2742 = vunpack.c.h.b16 %v2704
      %v2743 = vunpack.c.l.b16 %v2705
      %v2744 = vunpack.c.h.b16 %v2705
      %v2745 = vunpack.c.l.b16 %v2706
      %v2746 = vunpack.c.h.b16 %v2706
      %v2747 = vunpack.c.l.b16 %v2707
      %v2748 = vunpack.c.h.b16 %v2707
      %v2749 = vunpack.c.l.b16 %v2708
      %v2750 = vunpack.c.h.b16 %v2708
      %v2751 = vunpack.c.l.b16 %v2709
      %v2752 = vunpack.c.h.b16 %v2709
      %v2753 = vunpack.c.l.b16 %v2710
      %v2754 = vunpack.c.h.b16 %v2710
      %v2755 = vunpack.c.l.b16 %v2711
      %v2756 = vunpack.c.h.b16 %v2711
      %v2757 = vunpack.c.l.b16 %v2712
      %v2758 = vunpack.c.h.b16 %v2712
      %v2759 = vunpack.c.l.b16 %v2713
      %v2760 = vunpack.c.h.b16 %v2713
      %v2761 = vunpack.c.l.b16 %v2714
      %v2762 = vunpack.c.h.b16 %v2714
      %v2763 = vpack.c.b16 %v2733, %v2731
      %v2764 = vpack.c.b16 %v2734, %v2732
      %v2765 = vpack.c.b16 %v2737, %v2735
      %v2766 = vpack.c.b16 %v2738, %v2736
      %v2767 = vpack.c.b16 %v2741, %v2739
      %v2768 = vpack.c.b16 %v2742, %v2740
      %v2769 = vpack.c.b16 %v2745, %v2743
      %v2770 = vpack.c.b16 %v2746, %v2744
      %v2771 = vpack.c.b16 %v2749, %v2747
      %v2772 = vpack.c.b16 %v2750, %v2748
      %v2773 = vpack.c.b16 %v2753, %v2751
      %v2774 = vpack.c.b16 %v2754, %v2752
      %v2775 = vpack.c.b16 %v2757, %v2755
      %v2776 = vpack.c.b16 %v2758, %v2756
      %v2777 = vpack.c.b16 %v2761, %v2759
      %v2778 = vpack.c.b16 %v2762, %v2760
      %2795 = vmatprep.subr.bf16.mxu0 %v2764
      %2796 = vmatpush1.bf16.msra.mxu0 %v2763
      %2797 = vmatprep.subr.bf16.mxu0 %v2766
      %2798 = vmatpush1.bf16.msra.mxu0 %v2765
      %2799 = vmatprep.subr.bf16.mxu0 %v2768
      %2800 = vmatpush1.bf16.msra.mxu0 %v2767
      %2801 = vmatprep.subr.bf16.mxu0 %v2770
      %2802 = vmatpush1.bf16.msra.mxu0 %v2769
      %2803 = vmatprep.subr.bf16.mxu0 %v2772
      %2804 = vmatpush1.bf16.msra.mxu0 %v2771
      %2805 = vmatprep.subr.bf16.mxu0 %v2774
      %2806 = vmatpush1.bf16.msra.mxu0 %v2773
      %2807 = vmatprep.subr.bf16.mxu0 %v2776
      %2808 = vmatpush1.bf16.msra.mxu0 %v2775
      %2809 = vmatprep.subr.bf16.mxu0 %v2778
      %2810 = vmatpush1.bf16.msra.mxu0 %v2777
      %2811 = vmatprep.subr.bf16.mxu0 0
      %2812 = vmatpush1.bf16.msra.mxu0 0
      %2813 = vmatprep.subr.bf16.mxu0 0
      %2814 = vmatpush1.bf16.msra.mxu0 0
      %2815 = vmatprep.subr.bf16.mxu0 0
      %2816 = vmatpush1.bf16.msra.mxu0 0
      %2817 = vmatprep.subr.bf16.mxu0 0
      %2818 = vmatpush1.bf16.msra.mxu0 0
      %2819 = vmatprep.subr.bf16.mxu0 0
      %2820 = vmatpush1.bf16.msra.mxu0 0
      %2821 = vmatprep.subr.bf16.mxu0 0
      %2822 = vmatpush1.bf16.msra.mxu0 0
      %2823 = vmatprep.subr.bf16.mxu0 0
      %2824 = vmatpush1.bf16.msra.mxu0 0
      %2825 = vmatprep.subr.bf16.mxu0 0
      %2826 = vmatpush1.bf16.msra.mxu0 0
      %2827 = vmatprep.mubr.bf16.mxu0 0
      %2828 = vmatmul.mubr.bf16.gmra.mrb[0].mxu0 %v2697
      %v2829 = vpop.f32.mrb[0].mxu0
      %v2830 = vadd.f32 0.0, %v2829
      %v2831 = vpop.f32.mrb[0].mxu0
      %v2832 = vadd.f32 0.0, %v2831
      %v2833 = vpop.f32.mrb[0].mxu0
      %v2834 = vadd.f32 0.0, %v2833
      %v2835 = vpop.f32.mrb[0].mxu0
      %v2836 = vadd.f32 0.0, %v2835
      %2837 = vdwg.mxu0
      %v2839 = vlaneseq
      %v2840 = vshrl.u32 %v2839, 7
      %v2841 = vsub.s32 0, %v2840
      %v2842 = vrot.slane %v513, %v2841
      %v2843 = vlaneseq
      %v2844 = vshrl.u32 %v2843, 7
      %v2845 = vsub.s32 1, %v2844
      %v2846 = vrot.slane %v513, %v2845
      %v2849 = vadd.f32 %v2830, %v2842
      %v2850 = vadd.f32 %v2832, %v2846
      %v2851 = vadd.f32 %v2834, %v2842
      %v2852 = vadd.f32 %v2836, %v2846
      %v2853 = vpack.c.bf16 %v2851, %v2849
      %v2854 = vpack.c.bf16 %v2852, %v2850
      %v2857 = vunpack.c.l.b16 %v2853
      %v2858 = vunpack.c.l.b16 %v2854
      %v2859 = vunpack.c.h.b16 %v2853
      %v2860 = vunpack.c.h.b16 %v2854
      %v2861 = vpack.c.b16 %v2858, %v2857
      %v2862 = vpack.c.b16 %v2860, %v2859
      %vm2865 = vcmask 1043456
      %vm2866 = vcmask 523268
      %vm2867 = vmor %vm2866, %vm2865
      %2868 = vst.msk [vmem:[%s495] sm:$0xff] %vm2867, %v2861
      %2869 = vst.msk [vmem:[%s495 + $0x8] sm:$0xff] %vm2867, %v2862
      %s2870 = smul.u32 2, %s24
      %p2871 = scmp.lt.s32.totalorder %s2870, 3
      %s2872 = scalar_select %p2871, %s2870, 3
      %s2873 = smul.addr %s2872, 2
      %s2874 = smul.addr %s2873, 4
      %s2875 = scalar_lea.vmem %s11, %s2874
      %p2876 = scmp.lt.s32.totalorder %s24, 1
      %s2877 = scalar_select %p2876, %s24, 1
      %s2878 = scalar_lea.vmem %s12, %s2877
      // Predicated region
      $region65: #{stable_diffusion_forward.3} parent=63 // pred_check
        %p2879 = pneg %p293
      $region66: #{stable_diffusion_forward.3} parent=63 // pred_check_branch
        %2881 = sbr.rel (%p2879) target = $region68
      $region67: #{stable_diffusion_forward.3} parent=63 // pred_region
        %s2882 = smul.u32 2, %s24
      $region68: #{stable_diffusion_forward.3} parent=63 // pred_fallthru
        _
      // Predicated region
      $region69: #{stable_diffusion_forward.3} parent=63 // pred_check
        %p2883 = pneg %p319
      $region70: #{stable_diffusion_forward.3} parent=63 // pred_check_branch
        %2885 = sbr.rel (%p2883) target = $region72
      $region71: #{stable_diffusion_forward.3} parent=63 // pred_region
        _
      $region72: #{stable_diffusion_forward.3} parent=63 // pred_fallthru
        _
    $region64: #{stable_diffusion_forward.3} parent=5 // pred_fallthru
      _
    %p2886 = scmp.le.s32.totalorder 2, %s19
    // Predicated region
    $region73: #{stable_diffusion_forward.3} parent=5 // pred_check
      %p2887 = pneg %p2886
    $region74: #{stable_diffusion_forward.3} parent=5 // pred_check_branch
      %2889 = sbr.rel (%p2887) target = $region76
    $region75: #{stable_diffusion_forward.3} parent=5 // pred_region
      %s2890 = ssub.s32 %s19, 2
      // Predicated region
      $region77: #{stable_diffusion_forward.3} parent=75 // pred_check
        %p2891 = pneg %p299
      $region78: #{stable_diffusion_forward.3} parent=75 // pred_check_branch
        %2893 = sbr.rel (%p2891) target = $region80
      $region79: #{stable_diffusion_forward.3} parent=75 // pred_region
        %s2894 = smul.u32 2, %s25
        %p2895 = scmp.lt.s32.totalorder %s2894, 3
        %s2896 = scalar_select %p2895, %s2894, 3
        %s2897 = smul.addr %s2896, 2
        %s2898 = smul.addr %s2897, 4
        %s2899 = scalar_lea.vmem %s11, %s2898
      $region80: #{stable_diffusion_forward.3} parent=75 // pred_fallthru
        _
      // Predicated region
      $region81: #{stable_diffusion_forward.3} parent=75 // pred_check
        %p2900 = pneg %p325
      $region82: #{stable_diffusion_forward.3} parent=75 // pred_check_branch
        %2902 = sbr.rel (%p2900) target = $region84
      $region83: #{stable_diffusion_forward.3} parent=75 // pred_region
        %p2903 = scmp.lt.s32.totalorder %s25, 1
        %s2904 = scalar_select %p2903, %s25, 1
        %s2905 = scalar_lea.vmem %s12, %s2904
      $region84: #{stable_diffusion_forward.3} parent=75 // pred_fallthru
        _
    $region76: #{stable_diffusion_forward.3} parent=5 // pred_fallthru
      _
  $region6: #{stable_diffusion_forward.3} parent=0 // loop_footer
    %s23 = sadd.s32 1, %s19
  $region7: #{stable_diffusion_forward.3} parent=0 // loop_footer_branch
    %18 = sbr.rel target = $region3
  $region8: #{stable_diffusion_forward.3} parent=0 // loop_exit
    _

</llo_original>
